<compile_context>
chip_gen: v5e
topology: v5e:2x2
jax: 0.10.0
libtpu: 0.0.40
codegen_flags: <defaults>
</compile_context>

<pallas_src>
import jax
import jax.numpy as jnp
from jax.experimental import pallas as pl
from jax.experimental.pallas import tpu as pltpu

NUM_CLASSES = 25
_VMEM_LIMIT = 48 * 1024 * 1024   # below v7x's 64 MiB physical, above default scoped


# --------------------------------- small helpers ---------------------------------
def _round_up(x, m):
    return ((x + m - 1) // m) * m


def _pad_rows(w, rows_p):
    rows, cols = w.shape
    return jnp.zeros((rows_p, cols), w.dtype).at[:rows, :].set(w)


def _pad_cols(w, cols_p):
    rows, cols = w.shape
    return jnp.zeros((rows, cols_p), w.dtype).at[:, :cols].set(w)


def _scatter_gate_cols(w, H, Hp):
    """(rows, 4H) -> (rows, 4Hp): gate block g moved to columns [g*Hp, g*Hp+H)."""
    rows = w.shape[0]
    out = jnp.zeros((rows, 4 * Hp), w.dtype)
    for g in range(4):
        out = out.at[:, g * Hp:g * Hp + H].set(w[:, g * H:(g + 1) * H])
    return out


def _scatter_bidir_rows(w, H, Hp):
    """(2H, cols) -> (2Hp, cols): fwd rows at [0,H), rev rows at [Hp, Hp+H)."""
    cols = w.shape[1]
    out = jnp.zeros((2 * Hp, cols), w.dtype)
    out = out.at[0:H, :].set(w[0:H, :])
    out = out.at[Hp:Hp + H, :].set(w[H:2 * H, :])
    return out


# --------------------- fused Conv1d(k=2) + ReLU, time-major out -------------------
def _conv_relu_kernel(x_ref, xn_ref, w0_ref, w1_ref, b_ref, o_ref):
    t_tile, B, F = x_ref.shape
    Ep = o_ref.shape[-1]
    x0 = x_ref[...].reshape(t_tile * B, F)
    x1 = xn_ref[...].reshape(t_tile * B, F)
    y = (jnp.dot(x0, w0_ref[...], preferred_element_type=jnp.float32)
         + jnp.dot(x1, w1_ref[...], preferred_element_type=jnp.float32)
         + b_ref[...])
    o_ref[...] = jnp.maximum(y, 0.0).reshape(t_tile, B, Ep).astype(o_ref.dtype)


def conv_relu_timemajor(x_tm, x_next, w0, w1, b, t_tile):
    Tp, B, F = x_tm.shape
    Ep = w0.shape[1]
    n_t = Tp // t_tile
    return pl.pallas_call(
        _conv_relu_kernel,
        out_shape=jax.ShapeDtypeStruct((Tp, B, Ep), jnp.bfloat16),
        grid=(n_t,),
        in_specs=[
            pl.BlockSpec((t_tile, B, F), lambda t: (t, 0, 0)),
            pl.BlockSpec((t_tile, B, F), lambda t: (t, 0, 0)),
            pl.BlockSpec((F, Ep), lambda t: (0, 0)),
            pl.BlockSpec((F, Ep), lambda t: (0, 0)),
            pl.BlockSpec((1, Ep), lambda t: (0, 0)),
        ],
        out_specs=pl.BlockSpec((t_tile, B, Ep), lambda t: (t, 0, 0)),
        compiler_params=pltpu.CompilerParams(
            dimension_semantics=("parallel",),
            vmem_limit_bytes=_VMEM_LIMIT),
    )(x_tm, x_next, w0, w1, b)


# ------------------- bidirectional LSTM layer (one Pallas kernel) -----------------
def _bilstm_kernel(x_ref, wih_ref, whh_ref, b_ref, len_ref, o_ref,
                   gx_ref, h_ref, c_ref):
    d = pl.program_id(0)            # 0 = forward, 1 = reverse
    tb = pl.program_id(1)           # time-tile counter in recurrence order
    n_t = pl.num_programs(1)
    t_tile, B, Din = x_ref.shape
    Hp = h_ref.shape[1]

    # reset recurrent state at the start of each direction's pass
    @pl.when(tb == 0)
    def _():
        h_ref[...] = jnp.zeros_like(h_ref)
        c_ref[...] = jnp.zeros_like(c_ref)

    # hoisted input projection: one MXU GEMM for the whole time tile
    x2d = x_ref[...].reshape(t_tile * B, Din)
    gx_ref[...] = (jnp.dot(x2d, wih_ref[...], preferred_element_type=jnp.float32)
                   + b_ref[...])

    whh = whh_ref[...]
    # global time offset of this tile (tiles are visited back-to-front when d == 1)
    t_block = tb + d * (n_t - 1 - 2 * tb)
    t_base = t_block * t_tile
    # per-batch lengths broadcast once (hoisted out of the step loop)
    len_bh = jnp.broadcast_to(len_ref[...], (B, Hp))

    def step(s, carry):
        tl = s + d * (t_tile - 1 - 2 * s)     # forward: s, reverse: t_tile-1-s
        t_glob = t_base + tl
        row0 = pl.multiple_of(tl * B, B)
        g = (gx_ref[pl.ds(row0, B), :]
             + jnp.dot(h_ref[...].astype(jnp.bfloat16), whh,
                       preferred_element_type=jnp.float32))
        # PyTorch gate order: i, f, g, o  (each slice is 128-lane aligned)
        i_g = jax.nn.sigmoid(g[:, 0 * Hp:1 * Hp])
        f_g = jax.nn.sigmoid(g[:, 1 * Hp:2 * Hp])
        g_g = jnp.tanh(g[:, 2 * Hp:3 * Hp])
        o_g = jax.nn.sigmoid(g[:, 3 * Hp:4 * Hp])
        c_new = f_g * c_ref[...] + i_g * g_g
        h_new = o_g * jnp.tanh(c_new)
        valid = t_glob < len_bh               # packed-sequence validity mask
        o_ref[tl] = jnp.where(valid, h_new, 0.0).astype(o_ref.dtype)
        h_ref[...] = jnp.where(valid, h_new, h_ref[...])
        c_ref[...] = jnp.where(valid, c_new, c_ref[...])
        return carry

    jax.lax.fori_loop(0, t_tile, step, 0)


def bilstm_layer(x, w_ih, w_hh, b, len_col, hidden_p, t_tile):
    Tp, B, Din = x.shape
    n_t = Tp // t_tile
    H4 = 4 * hidden_p
    return pl.pallas_call(
        _bilstm_kernel,
        out_shape=jax.ShapeDtypeStruct((Tp, B, 2 * hidden_p), jnp.bfloat16),
        grid=(2, n_t),
        in_specs=[
            pl.BlockSpec((t_tile, B, Din),
                         lambda d, t: (t + d * (n_t - 1 - 2 * t), 0, 0)),
            pl.BlockSpec((None, Din, H4), lambda d, t: (d, 0, 0)),
            pl.BlockSpec((None, hidden_p, H4), lambda d, t: (d, 0, 0)),
            pl.BlockSpec((None, 1, H4), lambda d, t: (d, 0, 0)),
            pl.BlockSpec((B, 1), lambda d, t: (0, 0)),
        ],
        out_specs=pl.BlockSpec((t_tile, B, hidden_p),
                               lambda d, t: (t + d * (n_t - 1 - 2 * t), 0, d)),
        scratch_shapes=[
            pltpu.VMEM((t_tile * B, H4), jnp.float32),   # gates_x for this tile
            pltpu.VMEM((B, hidden_p), jnp.float32),      # h state
            pltpu.VMEM((B, hidden_p), jnp.float32),      # c state
        ],
        compiler_params=pltpu.CompilerParams(
            dimension_semantics=("parallel", "arbitrary"),
            vmem_limit_bytes=_VMEM_LIMIT),
    )(x, w_ih, w_hh, b, len_col)


# ------------------------- fused head: Linear -> Linear ---------------------------
def _head_kernel(x_ref, w1_ref, b1_ref, w2_ref, o_ref):
    h = (jnp.dot(x_ref[...], w1_ref[...], preferred_element_type=jnp.float32)
         + b1_ref[...])
    o_ref[...] = jnp.dot(h.astype(jnp.bfloat16), w2_ref[...],
                         preferred_element_type=jnp.float32).astype(o_ref.dtype)


def head_forward(x, w1, b1, w2):
    B, K = x.shape
    N1 = w1.shape[1]
    N2 = w2.shape[1]
    return pl.pallas_call(
        _head_kernel,
        out_shape=jax.ShapeDtypeStruct((B, N2), jnp.float32),
        grid=(1,),
        in_specs=[
            pl.BlockSpec((B, K), lambda i: (0, 0)),
            pl.BlockSpec((K, N1), lambda i: (0, 0)),
            pl.BlockSpec((1, N1), lambda i: (0, 0)),
            pl.BlockSpec((N1, N2), lambda i: (0, 0)),
        ],
        out_specs=pl.BlockSpec((B, N2), lambda i: (0, 0)),
        compiler_params=pltpu.CompilerParams(
            dimension_semantics=("arbitrary",),
            vmem_limit_bytes=_VMEM_LIMIT),
    )(x, w1, b1, w2)


# ---------------------------------- parameters ------------------------------------
def init_params(key, F, E, H):
    keys = list(jax.random.split(key, 32))
    ki = iter(keys)

    def u(shape, bound):
        return jax.random.uniform(next(ki), shape, jnp.float32, -bound, bound)

    p = {}
    cb = 1.0 / (F * 2) ** 0.5
    p["conv_w"] = u((E, F, 2), cb)            # PyTorch Conv1d weight (out, in, k)
    p["conv_b"] = u((E,), cb)
    lb = 1.0 / H ** 0.5
    p["lstm"] = []
    for layer in range(3):
        d_in = E if layer == 0 else 2 * H
        layer_p = []
        for _direction in range(2):           # forward, reverse
            layer_p.append({
                "w_ih": u((4 * H, d_in), lb),
                "w_hh": u((4 * H, H), lb),
                "b_ih": u((4 * H,), lb),
                "b_hh": u((4 * H,), lb),
            })
        p["lstm"].append(layer_p)
    ob = 1.0 / (2 * H) ** 0.5
    p["out1_w"] = u((1024, 2 * H), ob)
    p["out1_b"] = u((1024,), ob)
    p["zeroshot"] = u((1024, NUM_CLASSES), 0.05)   # zeroshot_weights (embed, classes)
    return p


# ------------------------------------ forward --------------------------------------
def lstm_model_forward(X, lengths, params):
    B0, T0, F = X.shape
    E = params["conv_w"].shape[0]
    H = params["lstm"][0][0]["w_hh"].shape[1]
    N1 = params["out1_w"].shape[0]
    bf16 = jnp.bfloat16

    # lane/sublane-aligned padded sizes
    Ep = _round_up(E, 128)
    Hp = _round_up(H, 128)
    Cp = _round_up(NUM_CLASSES, 128)
    B = _round_up(B0, 16)
    t_tile = min(64, _round_up(T0, 8))
    Tp = _round_up(T0, t_tile)

    # ---- input prep: pad batch/time, go time-major, build the k=2 conv window ----
    Xp = jnp.zeros((B, Tp, F), jnp.float32).at[:B0, :T0, :].set(X)
    x_tm = jnp.transpose(Xp, (1, 0, 2)).astype(bf16)                  # (Tp, B, F)
    x_next = jnp.concatenate([x_tm[1:], jnp.zeros((1, B, F), bf16)], axis=0)
    len_col = jnp.zeros((B, 1), jnp.int32).at[:B0, 0].set(lengths.astype(jnp.int32))

    # ---- Conv1d(kernel_size=2, right zero pad) + ReLU as one time-tiled kernel ----
    w_c0 = _pad_cols(params["conv_w"][:, :, 0].T, Ep).astype(bf16)    # (F, Ep)
    w_c1 = _pad_cols(params["conv_w"][:, :, 1].T, Ep).astype(bf16)
    b_c = _pad_cols(params["conv_b"].reshape(1, E), Ep)               # (1, Ep) f32
    seq = conv_relu_timemajor(x_tm, x_next, w_c0, w_c1, b_c, t_tile)  # (Tp,B,Ep) bf16

    # ---- 3 bidirectional LSTM layers ----
    for layer in range(3):
        wih_l, whh_l, bias_l = [], [], []
        for dr in range(2):                                           # fwd, rev
            pr = params["lstm"][layer][dr]
            w_ih_t = pr["w_ih"].T                                     # (d_in, 4H)
            if layer == 0:
                w_ih_t = _pad_rows(w_ih_t, Ep)                        # (Ep, 4H)
            else:
                w_ih_t = _scatter_bidir_rows(w_ih_t, H, Hp)           # (2Hp, 4H)
            wih_l.append(_scatter_gate_cols(w_ih_t, H, Hp))           # (Din_p, 4Hp)
            whh_l.append(_scatter_gate_cols(_pad_rows(pr["w_hh"].T, Hp), H, Hp))
            bias_l.append(_scatter_gate_cols(
                (pr["b_ih"] + pr["b_hh"]).reshape(1, 4 * H), H, Hp))
        w_ih = jnp.stack(wih_l).astype(bf16)                          # (2, Din_p, 4Hp)
        w_hh = jnp.stack(whh_l).astype(bf16)                          # (2, Hp, 4Hp)
        bias = jnp.stack(bias_l)                                      # (2, 1, 4Hp) f32
        seq = bilstm_layer(seq, w_ih, w_hh, bias, len_col, Hp, t_tile)  # (Tp,B,2Hp)

    # ---- head: out[0] -> Linear(2H,1024) -> Linear(1024,25, no bias), fused ----
    out0 = seq[0]                                                     # (B, 2Hp) bf16
    w1 = _scatter_bidir_rows(params["out1_w"].T, H, Hp).astype(bf16)  # (2Hp, N1)
    b1 = params["out1_b"].reshape(1, N1)
    wz = _pad_cols(params["zeroshot"], Cp).astype(bf16)               # (N1, Cp)
    logits = head_forward(out0, w1, b1, wz)                           # (B, Cp) f32
    return logits[:B0, :NUM_CLASSES]


if __name__ == "__main__":
    key = jax.random.PRNGKey(0)
    k_x, k_p = jax.random.split(key)
    B, T, F, E, H = 2, 8, 16, 32, 32
    X = jax.random.normal(k_x, (B, T, F), jnp.float32)
    lengths = jnp.array([8, 5], jnp.int32)
    params = init_params(k_p, F, E, H)

    fwd = jax.jit(lstm_model_forward)
    logits = fwd(X, lengths, params)
    jax.block_until_ready(logits)
    assert logits.shape == (B, NUM_CLASSES)
    assert bool(jnp.all(jnp.isfinite(logits)))
    print("KERNEL_OK")
</pallas_src>

<mosaic_0001>
module attributes {stable_mosaic.version = 11 : i64} {
  func.func @_conv_relu_kernel(%arg0: i32, %arg1: memref<8x16x16xbf16, #tpu.memory_space<vmem>>, %arg2: memref<8x16x16xbf16, #tpu.memory_space<vmem>>, %arg3: memref<16x128xbf16, #tpu.memory_space<vmem>>, %arg4: memref<16x128xbf16, #tpu.memory_space<vmem>>, %arg5: memref<1x128xf32, #tpu.memory_space<vmem>>, %arg6: memref<8x16x128xbf16, #tpu.memory_space<vmem>>) attributes {dimension_semantics = [#tpu.dimension_semantics<parallel>], iteration_bounds = array<i64: 1>, scalar_prefetch = 0 : i64, scratch_operands = 0 : i64, tpu.core_type = #tpu.core_type<tc>, window_params = [{transform_indices = @transform_0, window_bounds = array<i64: 8, 16, 16>}, {transform_indices = @transform_1, window_bounds = array<i64: 8, 16, 16>}, {pipeline_mode = #tpu.pipeline_mode<synchronous>, transform_indices = @transform_2, window_bounds = array<i64: 16, 128>}, {pipeline_mode = #tpu.pipeline_mode<synchronous>, transform_indices = @transform_3, window_bounds = array<i64: 16, 128>}, {pipeline_mode = #tpu.pipeline_mode<synchronous>, transform_indices = @transform_4, window_bounds = array<i64: 1, 128>}, {transform_indices = @transform_5, window_bounds = array<i64: 8, 16, 128>}]} {
    %c0 = arith.constant 0 : index
    %c0_0 = arith.constant 0 : index
    %c0_1 = arith.constant 0 : index
    %0 = vector.load %arg1[%c0, %c0_0, %c0_1] : memref<8x16x16xbf16, #tpu.memory_space<vmem>>, vector<8x16x16xbf16>
    %1 = vector.shape_cast %0 : vector<8x16x16xbf16> to vector<128x16xbf16>
    %c0_2 = arith.constant 0 : index
    %c0_3 = arith.constant 0 : index
    %c0_4 = arith.constant 0 : index
    %2 = vector.load %arg2[%c0_2, %c0_3, %c0_4] : memref<8x16x16xbf16, #tpu.memory_space<vmem>>, vector<8x16x16xbf16>
    %3 = vector.shape_cast %2 : vector<8x16x16xbf16> to vector<128x16xbf16>
    %c0_5 = arith.constant 0 : index
    %c0_6 = arith.constant 0 : index
    %4 = vector.load %arg3[%c0_5, %c0_6] : memref<16x128xbf16, #tpu.memory_space<vmem>>, vector<16x128xbf16>
    %cst = arith.constant dense<0.000000e+00> : vector<128x128xf32>
    %5 = tpu.matmul %1, %4, %cst {dimension_numbers = #tpu.dot_dimension_numbers<[1], [0], [0], [1], [0, 0, 1, 1], [], []>} : vector<128x16xbf16>, vector<16x128xbf16>, vector<128x128xf32> -> vector<128x128xf32>
    %c0_7 = arith.constant 0 : index
    %c0_8 = arith.constant 0 : index
    %6 = vector.load %arg4[%c0_7, %c0_8] : memref<16x128xbf16, #tpu.memory_space<vmem>>, vector<16x128xbf16>
    %cst_9 = arith.constant dense<0.000000e+00> : vector<128x128xf32>
    %7 = tpu.matmul %3, %6, %cst_9 {dimension_numbers = #tpu.dot_dimension_numbers<[1], [0], [0], [1], [0, 0, 1, 1], [], []>} : vector<128x16xbf16>, vector<16x128xbf16>, vector<128x128xf32> -> vector<128x128xf32>
    %8 = arith.addf %5, %7 : vector<128x128xf32>
    %c0_10 = arith.constant 0 : index
    %c0_11 = arith.constant 0 : index
    %9 = vector.load %arg5[%c0_10, %c0_11] : memref<1x128xf32, #tpu.memory_space<vmem>>, vector<1x128xf32>
    %10 = vector.broadcast %9 : vector<1x128xf32> to vector<128x128xf32>
    %11 = arith.addf %8, %10 : vector<128x128xf32>
    %cst_12 = arith.constant 0.000000e+00 : f32
    %12 = vector.broadcast %cst_12 : f32 to vector<128x128xf32>
    %13 = arith.maximumf %11, %12 : vector<128x128xf32>
    %14 = vector.shape_cast %13 : vector<128x128xf32> to vector<8x16x128xf32>
    %15 = arith.truncf %14 : vector<8x16x128xf32> to vector<8x16x128xbf16>
    %c0_13 = arith.constant 0 : index
    %c0_14 = arith.constant 0 : index
    %c0_15 = arith.constant 0 : index
    %16 = vector.load %arg6[%c0_13, %c0_14, %c0_15] : memref<8x16x128xbf16, #tpu.memory_space<vmem>>, vector<8x16x128xbf16>
    tpu.vector_store %arg6[%c0_13, %c0_14, %c0_15], %15 {strides = array<i32>} : memref<8x16x128xbf16, #tpu.memory_space<vmem>>, vector<8x16x128xbf16>,
    return
  }
  func.func @transform_0(%arg0: i32) -> (i32, i32, i32) {
    %c0_i32 = arith.constant 0 : i32
    %c0_i32_0 = arith.constant 0 : i32
    %c0_i32_1 = arith.constant 0 : i32
    return %arg0, %c0_i32, %c0_i32_0 : i32, i32, i32
  }
  func.func @transform_1(%arg0: i32) -> (i32, i32, i32) {
    %c0_i32 = arith.constant 0 : i32
    %c0_i32_0 = arith.constant 0 : i32
    %c0_i32_1 = arith.constant 0 : i32
    return %arg0, %c0_i32, %c0_i32_0 : i32, i32, i32
  }
  func.func @transform_2(%arg0: i32) -> (i32, i32) {
    %c0_i32 = arith.constant 0 : i32
    %c0_i32_0 = arith.constant 0 : i32
    %c0_i32_1 = arith.constant 0 : i32
    return %c0_i32, %c0_i32_0 : i32, i32
  }
  func.func @transform_3(%arg0: i32) -> (i32, i32) {
    %c0_i32 = arith.constant 0 : i32
    %c0_i32_0 = arith.constant 0 : i32
    %c0_i32_1 = arith.constant 0 : i32
    return %c0_i32, %c0_i32_0 : i32, i32
  }
  func.func @transform_4(%arg0: i32) -> (i32, i32) {
    %c0_i32 = arith.constant 0 : i32
    %c0_i32_0 = arith.constant 0 : i32
    %c0_i32_1 = arith.constant 0 : i32
    return %c0_i32, %c0_i32_0 : i32, i32
  }
  func.func @transform_5(%arg0: i32) -> (i32, i32, i32) {
    %c0_i32 = arith.constant 0 : i32
    %c0_i32_0 = arith.constant 0 : i32
    %c0_i32_1 = arith.constant 0 : i32
    return %arg0, %c0_i32, %c0_i32_0 : i32, i32, i32
  }
}

module attributes {stable_mosaic.version = 11 : i64} {
  func.func @_bilstm_kernel(%arg0: i32, %arg1: i32, %arg2: memref<8x16x128xbf16, #tpu.memory_space<vmem>>, %arg3: memref<1x128x512xbf16, #tpu.memory_space<vmem>>, %arg4: memref<1x128x512xbf16, #tpu.memory_space<vmem>>, %arg5: memref<1x1x512xf32, #tpu.memory_space<vmem>>, %arg6: memref<16x1xi32, #tpu.memory_space<vmem>>, %arg7: memref<8x16x128xbf16, #tpu.memory_space<vmem>>, %arg8: memref<128x512xf32, #tpu.memory_space<vmem>>, %arg9: memref<16x128xf32, #tpu.memory_space<vmem>>, %arg10: memref<16x128xf32, #tpu.memory_space<vmem>>) attributes {dimension_semantics = [#tpu.dimension_semantics<parallel>, #tpu.dimension_semantics<arbitrary>], iteration_bounds = array<i64: 2, 1>, scalar_prefetch = 0 : i64, scratch_operands = 3 : i64, tpu.core_type = #tpu.core_type<tc>, window_params = [{transform_indices = @transform_0, window_bounds = array<i64: 8, 16, 128>}, {transform_indices = @transform_1, window_bounds = array<i64: 1, 128, 512>}, {transform_indices = @transform_2, window_bounds = array<i64: 1, 128, 512>}, {transform_indices = @transform_3, window_bounds = array<i64: 1, 1, 512>}, {pipeline_mode = #tpu.pipeline_mode<synchronous>, transform_indices = @transform_4, window_bounds = array<i64: 16, 1>}, {transform_indices = @transform_5, window_bounds = array<i64: 8, 16, 128>}]} {
    %c0_i32 = arith.constant 0 : i32
    %0 = arith.cmpi eq, %arg1, %c0_i32 : i32
    %1 = arith.extui %0 : i1 to i32
    %c0_i32_0 = arith.constant 0 : i32
    %2 = arith.cmpi ne, %1, %c0_i32_0 : i32
    scf.if %2 {
      %cst_20 = arith.constant 0.000000e+00 : f32
      %24 = vector.broadcast %cst_20 : f32 to vector<16x128xf32>
      %c0_21 = arith.constant 0 : index
      %c0_22 = arith.constant 0 : index
      %25 = vector.load %arg9[%c0_21, %c0_22] : memref<16x128xf32, #tpu.memory_space<vmem>>, vector<16x128xf32>
      tpu.vector_store %arg9[%c0_21, %c0_22], %24 {strides = array<i32>} : memref<16x128xf32, #tpu.memory_space<vmem>>, vector<16x128xf32>,
      %cst_23 = arith.constant 0.000000e+00 : f32
      %26 = vector.broadcast %cst_23 : f32 to vector<16x128xf32>
      %c0_24 = arith.constant 0 : index
      %c0_25 = arith.constant 0 : index
      %27 = vector.load %arg10[%c0_24, %c0_25] : memref<16x128xf32, #tpu.memory_space<vmem>>, vector<16x128xf32>
      tpu.vector_store %arg10[%c0_24, %c0_25], %26 {strides = array<i32>} : memref<16x128xf32, #tpu.memory_space<vmem>>, vector<16x128xf32>,
    } else {
    }
    %c0 = arith.constant 0 : index
    %c0_1 = arith.constant 0 : index
    %c0_2 = arith.constant 0 : index
    %3 = vector.load %arg2[%c0, %c0_1, %c0_2] : memref<8x16x128xbf16, #tpu.memory_space<vmem>>, vector<8x16x128xbf16>
    %4 = vector.shape_cast %3 : vector<8x16x128xbf16> to vector<128x128xbf16>
    %c0_3 = arith.constant 0 : index
    %c0_4 = arith.constant 0 : index
    %c0_5 = arith.constant 0 : index
    %5 = vector.load %arg3[%c0_3, %c0_4, %c0_5] : memref<1x128x512xbf16, #tpu.memory_space<vmem>>, vector<1x128x512xbf16>
    %6 = vector.shape_cast %5 : vector<1x128x512xbf16> to vector<128x512xbf16>
    %cst = arith.constant dense<0.000000e+00> : vector<128x512xf32>
    %7 = tpu.matmul %4, %6, %cst {dimension_numbers = #tpu.dot_dimension_numbers<[1], [0], [0], [1], [0, 0, 1, 1], [], []>} : vector<128x128xbf16>, vector<128x512xbf16>, vector<128x512xf32> -> vector<128x512xf32>
    %c0_6 = arith.constant 0 : index
    %c0_7 = arith.constant 0 : index
    %c0_8 = arith.constant 0 : index
    %8 = vector.load %arg5[%c0_6, %c0_7, %c0_8] : memref<1x1x512xf32, #tpu.memory_space<vmem>>, vector<1x1x512xf32>
    %9 = vector.shape_cast %8 : vector<1x1x512xf32> to vector<1x512xf32>
    %10 = vector.broadcast %9 : vector<1x512xf32> to vector<128x512xf32>
    %11 = arith.addf %7, %10 : vector<128x512xf32>
    %c0_9 = arith.constant 0 : index
    %c0_10 = arith.constant 0 : index
    %12 = vector.load %arg8[%c0_9, %c0_10] : memref<128x512xf32, #tpu.memory_space<vmem>>, vector<128x512xf32>
    tpu.vector_store %arg8[%c0_9, %c0_10], %11 {strides = array<i32>} : memref<128x512xf32, #tpu.memory_space<vmem>>, vector<128x512xf32>,
    %c0_11 = arith.constant 0 : index
    %c0_12 = arith.constant 0 : index
    %c0_13 = arith.constant 0 : index
    %13 = vector.load %arg4[%c0_11, %c0_12, %c0_13] : memref<1x128x512xbf16, #tpu.memory_space<vmem>>, vector<1x128x512xbf16>
    %14 = vector.shape_cast %13 : vector<1x128x512xbf16> to vector<128x512xbf16>
    %c2_i32 = arith.constant 2 : i32
    %15 = arith.muli %c2_i32, %arg1 : i32
    %c0_i32_14 = arith.constant 0 : i32
    %16 = arith.subi %c0_i32_14, %15 : i32
    %17 = arith.muli %arg0, %16 : i32
    %18 = arith.addi %arg1, %17 : i32
    %c8_i32 = arith.constant 8 : i32
    %19 = arith.muli %18, %c8_i32 : i32
    %c0_15 = arith.constant 0 : index
    %c0_16 = arith.constant 0 : index
    %20 = vector.load %arg6[%c0_15, %c0_16] : memref<16x1xi32, #tpu.memory_space<vmem>>, vector<16x1xi32>
    %21 = vector.shape_cast %20 : vector<16x1xi32> to vector<16x1xi32>
    %22 = vector.broadcast %21 : vector<16x1xi32> to vector<16x128xi32>
    %c0_i32_17 = arith.constant 0 : i32
    %c8_i32_18 = arith.constant 8 : i32
    %23 = arith.addi %c0_i32_17, %c8_i32_18 : i32
    %c1_i32 = arith.constant 1 : i32
    scf.for %arg11 = %c0_i32_17 to %23 step %c1_i32  : i32 {
      %c2_i32_20 = arith.constant 2 : i32
      %24 = arith.muli %c2_i32_20, %arg11 : i32
      %c7_i32 = arith.constant 7 : i32
      %25 = arith.subi %c7_i32, %24 : i32
      %26 = arith.muli %arg0, %25 : i32
      %27 = arith.addi %arg11, %26 : i32
      %28 = arith.addi %19, %27 : i32
      %c16_i32 = arith.constant 16 : i32
      %29 = arith.muli %27, %c16_i32 : i32
      %30 = tpu.assume_multiple %29, 16 : i32
      %31 = arith.index_cast %30 : i32 to index
      %c0_21 = arith.constant 0 : index
      %32 = vector.load %arg8[%31, %c0_21] : memref<128x512xf32, #tpu.memory_space<vmem>>, vector<16x512xf32>
      %c0_22 = arith.constant 0 : index
      %c0_23 = arith.constant 0 : index
      %33 = vector.load %arg9[%c0_22, %c0_23] : memref<16x128xf32, #tpu.memory_space<vmem>>, vector<16x128xf32>
      %34 = arith.truncf %33 : vector<16x128xf32> to vector<16x128xbf16>
      %cst_24 = arith.constant dense<0.000000e+00> : vector<16x512xf32>
      %35 = tpu.matmul %34, %14, %cst_24 {dimension_numbers = #tpu.dot_dimension_numbers<[1], [0], [0], [1], [0, 0, 1, 1], [], []>} : vector<16x128xbf16>, vector<128x512xbf16>, vector<16x512xf32> -> vector<16x512xf32>
      %36 = arith.addf %32, %35 : vector<16x512xf32>
      %37 = vector.extract_strided_slice %36 {offsets = [0, 0], sizes = [16, 128], strides = [1, 1]} : vector<16x512xf32> to vector<16x128xf32>
      %38 = arith.negf %37 : vector<16x128xf32>
      %39 = math.exp %38 : vector<16x128xf32>
      %cst_25 = arith.constant 1.000000e+00 : f32
      %40 = vector.broadcast %cst_25 : f32 to vector<16x128xf32>
      %41 = arith.addf %40, %39 : vector<16x128xf32>
      %42 = arith.divf %40, %41 : vector<16x128xf32>
      %43 = vector.extract_strided_slice %36 {offsets = [0, 128], sizes = [16, 128], strides = [1, 1]} : vector<16x512xf32> to vector<16x128xf32>
      %44 = arith.negf %43 : vector<16x128xf32>
      %45 = math.exp %44 : vector<16x128xf32>
      %cst_26 = arith.constant 1.000000e+00 : f32
      %46 = vector.broadcast %cst_26 : f32 to vector<16x128xf32>
      %47 = arith.addf %46, %45 : vector<16x128xf32>
      %48 = arith.divf %46, %47 : vector<16x128xf32>
      %49 = vector.extract_strided_slice %36 {offsets = [0, 256], sizes = [16, 128], strides = [1, 1]} : vector<16x512xf32> to vector<16x128xf32>
      %50 = math.tanh %49 : vector<16x128xf32>
      %51 = vector.extract_strided_slice %36 {offsets = [0, 384], sizes = [16, 128], strides = [1, 1]} : vector<16x512xf32> to vector<16x128xf32>
      %52 = arith.negf %51 : vector<16x128xf32>
      %53 = math.exp %52 : vector<16x128xf32>
      %cst_27 = arith.constant 1.000000e+00 : f32
      %54 = vector.broadcast %cst_27 : f32 to vector<16x128xf32>
      %55 = arith.addf %54, %53 : vector<16x128xf32>
      %56 = arith.divf %54, %55 : vector<16x128xf32>
      %c0_28 = arith.constant 0 : index
      %c0_29 = arith.constant 0 : index
      %57 = vector.load %arg10[%c0_28, %c0_29] : memref<16x128xf32, #tpu.memory_space<vmem>>, vector<16x128xf32>
      %58 = arith.mulf %48, %57 : vector<16x128xf32>
      %59 = arith.mulf %42, %50 : vector<16x128xf32>
      %60 = arith.addf %58, %59 : vector<16x128xf32>
      %61 = math.tanh %60 : vector<16x128xf32>
      %62 = arith.mulf %56, %61 : vector<16x128xf32>
      %63 = vector.broadcast %28 : i32 to vector<16x128xi32>
      %64 = arith.cmpi slt, %63, %22 : vector<16x128xi32>
      %cst_30 = arith.constant 0.000000e+00 : f32
      %65 = vector.broadcast %cst_30 : f32 to vector<16x128xf32>
      %66 = arith.select %64, %62, %65 : vector<16x128xi1>, vector<16x128xf32>
      %67 = arith.truncf %66 : vector<16x128xf32> to vector<16x128xbf16>
      %68 = arith.index_cast %27 : i32 to index
      %c0_31 = arith.constant 0 : index
      %c0_32 = arith.constant 0 : index
      %69 = vector.load %arg7[%68, %c0_31, %c0_32] : memref<8x16x128xbf16, #tpu.memory_space<vmem>>, vector<1x16x128xbf16>
      %70 = vector.shape_cast %69 : vector<1x16x128xbf16> to vector<16x128xbf16>
      %71 = vector.shape_cast %67 : vector<16x128xbf16> to vector<1x16x128xbf16>
      tpu.vector_store %arg7[%68, %c0_31, %c0_32], %71 {strides = array<i32>} : memref<8x16x128xbf16, #tpu.memory_space<vmem>>, vector<1x16x128xbf16>,
      %c0_33 = arith.constant 0 : index
      %c0_34 = arith.constant 0 : index
      %72 = vector.load %arg9[%c0_33, %c0_34] : memref<16x128xf32, #tpu.memory_space<vmem>>, vector<16x128xf32>
      %73 = arith.select %64, %62, %72 : vector<16x128xi1>, vector<16x128xf32>
      %c0_35 = arith.constant 0 : index
      %c0_36 = arith.constant 0 : index
      %74 = vector.load %arg9[%c0_35, %c0_36] : memref<16x128xf32, #tpu.memory_space<vmem>>, vector<16x128xf32>
      tpu.vector_store %arg9[%c0_35, %c0_36], %73 {strides = array<i32>} : memref<16x128xf32, #tpu.memory_space<vmem>>, vector<16x128xf32>,
      %c0_37 = arith.constant 0 : index
      %c0_38 = arith.constant 0 : index
      %75 = vector.load %arg10[%c0_37, %c0_38] : memref<16x128xf32, #tpu.memory_space<vmem>>, vector<16x128xf32>
      %76 = arith.select %64, %60, %75 : vector<16x128xi1>, vector<16x128xf32>
      %c0_39 = arith.constant 0 : index
      %c0_40 = arith.constant 0 : index
      %77 = vector.load %arg10[%c0_39, %c0_40] : memref<16x128xf32, #tpu.memory_space<vmem>>, vector<16x128xf32>
      tpu.vector_store %arg10[%c0_39, %c0_40], %76 {strides = array<i32>} : memref<16x128xf32, #tpu.memory_space<vmem>>, vector<16x128xf32>,
    }
    %c8_i32_19 = arith.constant 8 : i32
    return
  }
  func.func @transform_0(%arg0: i32, %arg1: i32) -> (i32, i32, i32) {
    %c2_i32 = arith.constant 2 : i32
    %0 = arith.muli %c2_i32, %arg1 : i32
    %c0_i32 = arith.constant 0 : i32
    %1 = arith.subi %c0_i32, %0 : i32
    %2 = arith.muli %arg0, %1 : i32
    %3 = arith.addi %arg1, %2 : i32
    %c0_i32_0 = arith.constant 0 : i32
    %c0_i32_1 = arith.constant 0 : i32
    %c0_i32_2 = arith.constant 0 : i32
    return %3, %c0_i32_0, %c0_i32_1 : i32, i32, i32
  }
  func.func @transform_1(%arg0: i32, %arg1: i32) -> (i32, i32, i32) {
    %c0_i32 = arith.constant 0 : i32
    %c0_i32_0 = arith.constant 0 : i32
    %c0_i32_1 = arith.constant 0 : i32
    return %arg0, %c0_i32, %c0_i32_0 : i32, i32, i32
  }
  func.func @transform_2(%arg0: i32, %arg1: i32) -> (i32, i32, i32) {
    %c0_i32 = arith.constant 0 : i32
    %c0_i32_0 = arith.constant 0 : i32
    %c0_i32_1 = arith.constant 0 : i32
    return %arg0, %c0_i32, %c0_i32_0 : i32, i32, i32
  }
  func.func @transform_3(%arg0: i32, %arg1: i32) -> (i32, i32, i32) {
    %c0_i32 = arith.constant 0 : i32
    %c0_i32_0 = arith.constant 0 : i32
    %c0_i32_1 = arith.constant 0 : i32
    return %arg0, %c0_i32, %c0_i32_0 : i32, i32, i32
  }
  func.func @transform_4(%arg0: i32, %arg1: i32) -> (i32, i32) {
    %c0_i32 = arith.constant 0 : i32
    %c0_i32_0 = arith.constant 0 : i32
    %c0_i32_1 = arith.constant 0 : i32
    return %c0_i32, %c0_i32_0 : i32, i32
  }
  func.func @transform_5(%arg0: i32, %arg1: i32) -> (i32, i32, i32) {
    %c2_i32 = arith.constant 2 : i32
    %0 = arith.muli %c2_i32, %arg1 : i32
    %c0_i32 = arith.constant 0 : i32
    %1 = arith.subi %c0_i32, %0 : i32
    %2 = arith.muli %arg0, %1 : i32
    %3 = arith.addi %arg1, %2 : i32
    %c0_i32_0 = arith.constant 0 : i32
    %c0_i32_1 = arith.constant 0 : i32
    return %3, %c0_i32_0, %arg0 : i32, i32, i32
  }
}

module attributes {stable_mosaic.version = 11 : i64} {
  func.func @_bilstm_kernel(%arg0: i32, %arg1: i32, %arg2: memref<8x16x256xbf16, #tpu.memory_space<vmem>>, %arg3: memref<1x256x512xbf16, #tpu.memory_space<vmem>>, %arg4: memref<1x128x512xbf16, #tpu.memory_space<vmem>>, %arg5: memref<1x1x512xf32, #tpu.memory_space<vmem>>, %arg6: memref<16x1xi32, #tpu.memory_space<vmem>>, %arg7: memref<8x16x128xbf16, #tpu.memory_space<vmem>>, %arg8: memref<128x512xf32, #tpu.memory_space<vmem>>, %arg9: memref<16x128xf32, #tpu.memory_space<vmem>>, %arg10: memref<16x128xf32, #tpu.memory_space<vmem>>) attributes {dimension_semantics = [#tpu.dimension_semantics<parallel>, #tpu.dimension_semantics<arbitrary>], iteration_bounds = array<i64: 2, 1>, scalar_prefetch = 0 : i64, scratch_operands = 3 : i64, tpu.core_type = #tpu.core_type<tc>, window_params = [{transform_indices = @transform_0, window_bounds = array<i64: 8, 16, 256>}, {transform_indices = @transform_1, window_bounds = array<i64: 1, 256, 512>}, {transform_indices = @transform_2, window_bounds = array<i64: 1, 128, 512>}, {transform_indices = @transform_3, window_bounds = array<i64: 1, 1, 512>}, {pipeline_mode = #tpu.pipeline_mode<synchronous>, transform_indices = @transform_4, window_bounds = array<i64: 16, 1>}, {transform_indices = @transform_5, window_bounds = array<i64: 8, 16, 128>}]} {
    %c0_i32 = arith.constant 0 : i32
    %0 = arith.cmpi eq, %arg1, %c0_i32 : i32
    %1 = arith.extui %0 : i1 to i32
    %c0_i32_0 = arith.constant 0 : i32
    %2 = arith.cmpi ne, %1, %c0_i32_0 : i32
    scf.if %2 {
      %cst_20 = arith.constant 0.000000e+00 : f32
      %24 = vector.broadcast %cst_20 : f32 to vector<16x128xf32>
      %c0_21 = arith.constant 0 : index
      %c0_22 = arith.constant 0 : index
      %25 = vector.load %arg9[%c0_21, %c0_22] : memref<16x128xf32, #tpu.memory_space<vmem>>, vector<16x128xf32>
      tpu.vector_store %arg9[%c0_21, %c0_22], %24 {strides = array<i32>} : memref<16x128xf32, #tpu.memory_space<vmem>>, vector<16x128xf32>,
      %cst_23 = arith.constant 0.000000e+00 : f32
      %26 = vector.broadcast %cst_23 : f32 to vector<16x128xf32>
      %c0_24 = arith.constant 0 : index
      %c0_25 = arith.constant 0 : index
      %27 = vector.load %arg10[%c0_24, %c0_25] : memref<16x128xf32, #tpu.memory_space<vmem>>, vector<16x128xf32>
      tpu.vector_store %arg10[%c0_24, %c0_25], %26 {strides = array<i32>} : memref<16x128xf32, #tpu.memory_space<vmem>>, vector<16x128xf32>,
    } else {
    }
    %c0 = arith.constant 0 : index
    %c0_1 = arith.constant 0 : index
    %c0_2 = arith.constant 0 : index
    %3 = vector.load %arg2[%c0, %c0_1, %c0_2] : memref<8x16x256xbf16, #tpu.memory_space<vmem>>, vector<8x16x256xbf16>
    %4 = vector.shape_cast %3 : vector<8x16x256xbf16> to vector<128x256xbf16>
    %c0_3 = arith.constant 0 : index
    %c0_4 = arith.constant 0 : index
    %c0_5 = arith.constant 0 : index
    %5 = vector.load %arg3[%c0_3, %c0_4, %c0_5] : memref<1x256x512xbf16, #tpu.memory_space<vmem>>, vector<1x256x512xbf16>
    %6 = vector.shape_cast %5 : vector<1x256x512xbf16> to vector<256x512xbf16>
    %cst = arith.constant dense<0.000000e+00> : vector<128x512xf32>
    %7 = tpu.matmul %4, %6, %cst {dimension_numbers = #tpu.dot_dimension_numbers<[1], [0], [0], [1], [0, 0, 1, 1], [], []>} : vector<128x256xbf16>, vector<256x512xbf16>, vector<128x512xf32> -> vector<128x512xf32>
    %c0_6 = arith.constant 0 : index
    %c0_7 = arith.constant 0 : index
    %c0_8 = arith.constant 0 : index
    %8 = vector.load %arg5[%c0_6, %c0_7, %c0_8] : memref<1x1x512xf32, #tpu.memory_space<vmem>>, vector<1x1x512xf32>
    %9 = vector.shape_cast %8 : vector<1x1x512xf32> to vector<1x512xf32>
    %10 = vector.broadcast %9 : vector<1x512xf32> to vector<128x512xf32>
    %11 = arith.addf %7, %10 : vector<128x512xf32>
    %c0_9 = arith.constant 0 : index
    %c0_10 = arith.constant 0 : index
    %12 = vector.load %arg8[%c0_9, %c0_10] : memref<128x512xf32, #tpu.memory_space<vmem>>, vector<128x512xf32>
    tpu.vector_store %arg8[%c0_9, %c0_10], %11 {strides = array<i32>} : memref<128x512xf32, #tpu.memory_space<vmem>>, vector<128x512xf32>,
    %c0_11 = arith.constant 0 : index
    %c0_12 = arith.constant 0 : index
    %c0_13 = arith.constant 0 : index
    %13 = vector.load %arg4[%c0_11, %c0_12, %c0_13] : memref<1x128x512xbf16, #tpu.memory_space<vmem>>, vector<1x128x512xbf16>
    %14 = vector.shape_cast %13 : vector<1x128x512xbf16> to vector<128x512xbf16>
    %c2_i32 = arith.constant 2 : i32
    %15 = arith.muli %c2_i32, %arg1 : i32
    %c0_i32_14 = arith.constant 0 : i32
    %16 = arith.subi %c0_i32_14, %15 : i32
    %17 = arith.muli %arg0, %16 : i32
    %18 = arith.addi %arg1, %17 : i32
    %c8_i32 = arith.constant 8 : i32
    %19 = arith.muli %18, %c8_i32 : i32
    %c0_15 = arith.constant 0 : index
    %c0_16 = arith.constant 0 : index
    %20 = vector.load %arg6[%c0_15, %c0_16] : memref<16x1xi32, #tpu.memory_space<vmem>>, vector<16x1xi32>
    %21 = vector.shape_cast %20 : vector<16x1xi32> to vector<16x1xi32>
    %22 = vector.broadcast %21 : vector<16x1xi32> to vector<16x128xi32>
    %c0_i32_17 = arith.constant 0 : i32
    %c8_i32_18 = arith.constant 8 : i32
    %23 = arith.addi %c0_i32_17, %c8_i32_18 : i32
    %c1_i32 = arith.constant 1 : i32
    scf.for %arg11 = %c0_i32_17 to %23 step %c1_i32  : i32 {
      %c2_i32_20 = arith.constant 2 : i32
      %24 = arith.muli %c2_i32_20, %arg11 : i32
      %c7_i32 = arith.constant 7 : i32
      %25 = arith.subi %c7_i32, %24 : i32
      %26 = arith.muli %arg0, %25 : i32
      %27 = arith.addi %arg11, %26 : i32
      %28 = arith.addi %19, %27 : i32
      %c16_i32 = arith.constant 16 : i32
      %29 = arith.muli %27, %c16_i32 : i32
      %30 = tpu.assume_multiple %29, 16 : i32
      %31 = arith.index_cast %30 : i32 to index
      %c0_21 = arith.constant 0 : index
      %32 = vector.load %arg8[%31, %c0_21] : memref<128x512xf32, #tpu.memory_space<vmem>>, vector<16x512xf32>
      %c0_22 = arith.constant 0 : index
      %c0_23 = arith.constant 0 : index
      %33 = vector.load %arg9[%c0_22, %c0_23] : memref<16x128xf32, #tpu.memory_space<vmem>>, vector<16x128xf32>
      %34 = arith.truncf %33 : vector<16x128xf32> to vector<16x128xbf16>
      %cst_24 = arith.constant dense<0.000000e+00> : vector<16x512xf32>
      %35 = tpu.matmul %34, %14, %cst_24 {dimension_numbers = #tpu.dot_dimension_numbers<[1], [0], [0], [1], [0, 0, 1, 1], [], []>} : vector<16x128xbf16>, vector<128x512xbf16>, vector<16x512xf32> -> vector<16x512xf32>
      %36 = arith.addf %32, %35 : vector<16x512xf32>
      %37 = vector.extract_strided_slice %36 {offsets = [0, 0], sizes = [16, 128], strides = [1, 1]} : vector<16x512xf32> to vector<16x128xf32>
      %38 = arith.negf %37 : vector<16x128xf32>
      %39 = math.exp %38 : vector<16x128xf32>
      %cst_25 = arith.constant 1.000000e+00 : f32
      %40 = vector.broadcast %cst_25 : f32 to vector<16x128xf32>
      %41 = arith.addf %40, %39 : vector<16x128xf32>
      %42 = arith.divf %40, %41 : vector<16x128xf32>
      %43 = vector.extract_strided_slice %36 {offsets = [0, 128], sizes = [16, 128], strides = [1, 1]} : vector<16x512xf32> to vector<16x128xf32>
      %44 = arith.negf %43 : vector<16x128xf32>
      %45 = math.exp %44 : vector<16x128xf32>
      %cst_26 = arith.constant 1.000000e+00 : f32
      %46 = vector.broadcast %cst_26 : f32 to vector<16x128xf32>
      %47 = arith.addf %46, %45 : vector<16x128xf32>
      %48 = arith.divf %46, %47 : vector<16x128xf32>
      %49 = vector.extract_strided_slice %36 {offsets = [0, 256], sizes = [16, 128], strides = [1, 1]} : vector<16x512xf32> to vector<16x128xf32>
      %50 = math.tanh %49 : vector<16x128xf32>
      %51 = vector.extract_strided_slice %36 {offsets = [0, 384], sizes = [16, 128], strides = [1, 1]} : vector<16x512xf32> to vector<16x128xf32>
      %52 = arith.negf %51 : vector<16x128xf32>
      %53 = math.exp %52 : vector<16x128xf32>
      %cst_27 = arith.constant 1.000000e+00 : f32
      %54 = vector.broadcast %cst_27 : f32 to vector<16x128xf32>
      %55 = arith.addf %54, %53 : vector<16x128xf32>
      %56 = arith.divf %54, %55 : vector<16x128xf32>
      %c0_28 = arith.constant 0 : index
      %c0_29 = arith.constant 0 : index
      %57 = vector.load %arg10[%c0_28, %c0_29] : memref<16x128xf32, #tpu.memory_space<vmem>>, vector<16x128xf32>
      %58 = arith.mulf %48, %57 : vector<16x128xf32>
      %59 = arith.mulf %42, %50 : vector<16x128xf32>
      %60 = arith.addf %58, %59 : vector<16x128xf32>
      %61 = math.tanh %60 : vector<16x128xf32>
      %62 = arith.mulf %56, %61 : vector<16x128xf32>
      %63 = vector.broadcast %28 : i32 to vector<16x128xi32>
      %64 = arith.cmpi slt, %63, %22 : vector<16x128xi32>
      %cst_30 = arith.constant 0.000000e+00 : f32
      %65 = vector.broadcast %cst_30 : f32 to vector<16x128xf32>
      %66 = arith.select %64, %62, %65 : vector<16x128xi1>, vector<16x128xf32>
      %67 = arith.truncf %66 : vector<16x128xf32> to vector<16x128xbf16>
      %68 = arith.index_cast %27 : i32 to index
      %c0_31 = arith.constant 0 : index
      %c0_32 = arith.constant 0 : index
      %69 = vector.load %arg7[%68, %c0_31, %c0_32] : memref<8x16x128xbf16, #tpu.memory_space<vmem>>, vector<1x16x128xbf16>
      %70 = vector.shape_cast %69 : vector<1x16x128xbf16> to vector<16x128xbf16>
      %71 = vector.shape_cast %67 : vector<16x128xbf16> to vector<1x16x128xbf16>
      tpu.vector_store %arg7[%68, %c0_31, %c0_32], %71 {strides = array<i32>} : memref<8x16x128xbf16, #tpu.memory_space<vmem>>, vector<1x16x128xbf16>,
      %c0_33 = arith.constant 0 : index
      %c0_34 = arith.constant 0 : index
      %72 = vector.load %arg9[%c0_33, %c0_34] : memref<16x128xf32, #tpu.memory_space<vmem>>, vector<16x128xf32>
      %73 = arith.select %64, %62, %72 : vector<16x128xi1>, vector<16x128xf32>
      %c0_35 = arith.constant 0 : index
      %c0_36 = arith.constant 0 : index
      %74 = vector.load %arg9[%c0_35, %c0_36] : memref<16x128xf32, #tpu.memory_space<vmem>>, vector<16x128xf32>
      tpu.vector_store %arg9[%c0_35, %c0_36], %73 {strides = array<i32>} : memref<16x128xf32, #tpu.memory_space<vmem>>, vector<16x128xf32>,
      %c0_37 = arith.constant 0 : index
      %c0_38 = arith.constant 0 : index
      %75 = vector.load %arg10[%c0_37, %c0_38] : memref<16x128xf32, #tpu.memory_space<vmem>>, vector<16x128xf32>
      %76 = arith.select %64, %60, %75 : vector<16x128xi1>, vector<16x128xf32>
      %c0_39 = arith.constant 0 : index
      %c0_40 = arith.constant 0 : index
      %77 = vector.load %arg10[%c0_39, %c0_40] : memref<16x128xf32, #tpu.memory_space<vmem>>, vector<16x128xf32>
      tpu.vector_store %arg10[%c0_39, %c0_40], %76 {strides = array<i32>} : memref<16x128xf32, #tpu.memory_space<vmem>>, vector<16x128xf32>,
    }
    %c8_i32_19 = arith.constant 8 : i32
    return
  }
  func.func @transform_0(%arg0: i32, %arg1: i32) -> (i32, i32, i32) {
    %c2_i32 = arith.constant 2 : i32
    %0 = arith.muli %c2_i32, %arg1 : i32
    %c0_i32 = arith.constant 0 : i32
    %1 = arith.subi %c0_i32, %0 : i32
    %2 = arith.muli %arg0, %1 : i32
    %3 = arith.addi %arg1, %2 : i32
    %c0_i32_0 = arith.constant 0 : i32
    %c0_i32_1 = arith.constant 0 : i32
    %c0_i32_2 = arith.constant 0 : i32
    return %3, %c0_i32_0, %c0_i32_1 : i32, i32, i32
  }
  func.func @transform_1(%arg0: i32, %arg1: i32) -> (i32, i32, i32) {
    %c0_i32 = arith.constant 0 : i32
    %c0_i32_0 = arith.constant 0 : i32
    %c0_i32_1 = arith.constant 0 : i32
    return %arg0, %c0_i32, %c0_i32_0 : i32, i32, i32
  }
  func.func @transform_2(%arg0: i32, %arg1: i32) -> (i32, i32, i32) {
    %c0_i32 = arith.constant 0 : i32
    %c0_i32_0 = arith.constant 0 : i32
    %c0_i32_1 = arith.constant 0 : i32
    return %arg0, %c0_i32, %c0_i32_0 : i32, i32, i32
  }
  func.func @transform_3(%arg0: i32, %arg1: i32) -> (i32, i32, i32) {
    %c0_i32 = arith.constant 0 : i32
    %c0_i32_0 = arith.constant 0 : i32
    %c0_i32_1 = arith.constant 0 : i32
    return %arg0, %c0_i32, %c0_i32_0 : i32, i32, i32
  }
  func.func @transform_4(%arg0: i32, %arg1: i32) -> (i32, i32) {
    %c0_i32 = arith.constant 0 : i32
    %c0_i32_0 = arith.constant 0 : i32
    %c0_i32_1 = arith.constant 0 : i32
    return %c0_i32, %c0_i32_0 : i32, i32
  }
  func.func @transform_5(%arg0: i32, %arg1: i32) -> (i32, i32, i32) {
    %c2_i32 = arith.constant 2 : i32
    %0 = arith.muli %c2_i32, %arg1 : i32
    %c0_i32 = arith.constant 0 : i32
    %1 = arith.subi %c0_i32, %0 : i32
    %2 = arith.muli %arg0, %1 : i32
    %3 = arith.addi %arg1, %2 : i32
    %c0_i32_0 = arith.constant 0 : i32
    %c0_i32_1 = arith.constant 0 : i32
    return %3, %c0_i32_0, %arg0 : i32, i32, i32
  }
}

module attributes {stable_mosaic.version = 11 : i64} {
  func.func @_head_kernel(%arg0: i32, %arg1: memref<16x256xbf16, #tpu.memory_space<vmem>>, %arg2: memref<256x1024xbf16, #tpu.memory_space<vmem>>, %arg3: memref<1x1024xf32, #tpu.memory_space<vmem>>, %arg4: memref<1024x128xbf16, #tpu.memory_space<vmem>>, %arg5: memref<16x128xf32, #tpu.memory_space<vmem>>) attributes {dimension_semantics = [#tpu.dimension_semantics<arbitrary>], iteration_bounds = array<i64: 1>, scalar_prefetch = 0 : i64, scratch_operands = 0 : i64, tpu.core_type = #tpu.core_type<tc>, window_params = [{pipeline_mode = #tpu.pipeline_mode<synchronous>, transform_indices = @transform_0, window_bounds = array<i64: 16, 256>}, {pipeline_mode = #tpu.pipeline_mode<synchronous>, transform_indices = @transform_1, window_bounds = array<i64: 256, 1024>}, {pipeline_mode = #tpu.pipeline_mode<synchronous>, transform_indices = @transform_2, window_bounds = array<i64: 1, 1024>}, {pipeline_mode = #tpu.pipeline_mode<synchronous>, transform_indices = @transform_3, window_bounds = array<i64: 1024, 128>}, {pipeline_mode = #tpu.pipeline_mode<synchronous>, transform_indices = @transform_4, window_bounds = array<i64: 16, 128>}]} {
    %c0 = arith.constant 0 : index
    %c0_0 = arith.constant 0 : index
    %0 = vector.load %arg1[%c0, %c0_0] : memref<16x256xbf16, #tpu.memory_space<vmem>>, vector<16x256xbf16>
    %c0_1 = arith.constant 0 : index
    %c0_2 = arith.constant 0 : index
    %1 = vector.load %arg2[%c0_1, %c0_2] : memref<256x1024xbf16, #tpu.memory_space<vmem>>, vector<256x1024xbf16>
    %cst = arith.constant dense<0.000000e+00> : vector<16x1024xf32>
    %2 = tpu.matmul %0, %1, %cst {dimension_numbers = #tpu.dot_dimension_numbers<[1], [0], [0], [1], [0, 0, 1, 1], [], []>} : vector<16x256xbf16>, vector<256x1024xbf16>, vector<16x1024xf32> -> vector<16x1024xf32>
    %c0_3 = arith.constant 0 : index
    %c0_4 = arith.constant 0 : index
    %3 = vector.load %arg3[%c0_3, %c0_4] : memref<1x1024xf32, #tpu.memory_space<vmem>>, vector<1x1024xf32>
    %4 = vector.broadcast %3 : vector<1x1024xf32> to vector<16x1024xf32>
    %5 = arith.addf %2, %4 : vector<16x1024xf32>
    %6 = arith.truncf %5 : vector<16x1024xf32> to vector<16x1024xbf16>
    %c0_5 = arith.constant 0 : index
    %c0_6 = arith.constant 0 : index
    %7 = vector.load %arg4[%c0_5, %c0_6] : memref<1024x128xbf16, #tpu.memory_space<vmem>>, vector<1024x128xbf16>
    %cst_7 = arith.constant dense<0.000000e+00> : vector<16x128xf32>
    %8 = tpu.matmul %6, %7, %cst_7 {dimension_numbers = #tpu.dot_dimension_numbers<[1], [0], [0], [1], [0, 0, 1, 1], [], []>} : vector<16x1024xbf16>, vector<1024x128xbf16>, vector<16x128xf32> -> vector<16x128xf32>
    %c0_8 = arith.constant 0 : index
    %c0_9 = arith.constant 0 : index
    %9 = vector.load %arg5[%c0_8, %c0_9] : memref<16x128xf32, #tpu.memory_space<vmem>>, vector<16x128xf32>
    tpu.vector_store %arg5[%c0_8, %c0_9], %8 {strides = array<i32>} : memref<16x128xf32, #tpu.memory_space<vmem>>, vector<16x128xf32>,
    return
  }
  func.func @transform_0(%arg0: i32) -> (i32, i32) {
    %c0_i32 = arith.constant 0 : i32
    %c0_i32_0 = arith.constant 0 : i32
    %c0_i32_1 = arith.constant 0 : i32
    return %c0_i32, %c0_i32_0 : i32, i32
  }
  func.func @transform_1(%arg0: i32) -> (i32, i32) {
    %c0_i32 = arith.constant 0 : i32
    %c0_i32_0 = arith.constant 0 : i32
    %c0_i32_1 = arith.constant 0 : i32
    return %c0_i32, %c0_i32_0 : i32, i32
  }
  func.func @transform_2(%arg0: i32) -> (i32, i32) {
    %c0_i32 = arith.constant 0 : i32
    %c0_i32_0 = arith.constant 0 : i32
    %c0_i32_1 = arith.constant 0 : i32
    return %c0_i32, %c0_i32_0 : i32, i32
  }
  func.func @transform_3(%arg0: i32) -> (i32, i32) {
    %c0_i32 = arith.constant 0 : i32
    %c0_i32_0 = arith.constant 0 : i32
    %c0_i32_1 = arith.constant 0 : i32
    return %c0_i32, %c0_i32_0 : i32, i32
  }
  func.func @transform_4(%arg0: i32) -> (i32, i32) {
    %c0_i32 = arith.constant 0 : i32
    %c0_i32_0 = arith.constant 0 : i32
    %c0_i32_1 = arith.constant 0 : i32
    return %c0_i32, %c0_i32_0 : i32, i32
  }
}

</mosaic_0001>

<llo_original>
// kernel: lstm_model_forward.5
$region0: #{lstm_model_forward.5}
  #allocation0 [shape = 'u32[]', space=smem, size = 0x4, offset = 0x4, fixed_abs, tag = 'smem constant byte address 0x4 - core index']
  #allocation1 [shape = 'u32[72,128]{1,0:T(1,128)}', space=vmem, size = 0x9000, scoped, tag = 'internal scratch']
  %s0 = inlined_call_operand.vmem [shape: bf16[8,16,16], index: 0, kind: input, shape index: {}]
  %s1 = inlined_call_operand.vmem [shape: bf16[8,16,16], index: 1, kind: input, shape index: {}]
  %s2 = inlined_call_operand.vmem [shape: bf16[16,128], index: 2, kind: input, shape index: {}]
  %s3 = inlined_call_operand.vmem [shape: bf16[16,128], index: 3, kind: input, shape index: {}]
  %s4 = inlined_call_operand.vmem [shape: f32[1,128], index: 4, kind: input, shape index: {}]
  %s5 = inlined_call_operand.vmem [shape: bf16[8,16,128], index: 5, kind: output, shape index: {}]
  %s6 = sld [smem:[#allocation0]]
  $region30: #{lstm_model_forward.5} parent=0
    _
  %s8 = ssub.s32 1, %s6
  %s9 = scalar_select 0, %s8, %s6
  // Predicated region
  $region2: #{lstm_model_forward.5} parent=0 // pred_check
    _
  $region3: #{lstm_model_forward.5} parent=0 // pred_check_branch
    %11 = sbr.rel (0) target = $region5
  $region4: #{lstm_model_forward.5} parent=0 // pred_region
    _
  $region5: #{lstm_model_forward.5} parent=0 // pred_fallthru
    _
  // Predicated region
  $region6: #{lstm_model_forward.5} parent=0 // pred_check
    _
  $region7: #{lstm_model_forward.5} parent=0 // pred_check_branch
    %13 = sbr.rel (0) target = $region9
  $region8: #{lstm_model_forward.5} parent=0 // pred_region
    _
  $region9: #{lstm_model_forward.5} parent=0 // pred_fallthru
    _
  // Predicated region
  $region10: #{lstm_model_forward.5} parent=0 // pred_check
    _
  $region11: #{lstm_model_forward.5} parent=0 // pred_check_branch
    %15 = sbr.rel (0) target = $region13
  $region12: #{lstm_model_forward.5} parent=0 // pred_region
    _
  $region13: #{lstm_model_forward.5} parent=0 // pred_fallthru
    _
  // Predicated region
  $region14: #{lstm_model_forward.5} parent=0 // pred_check
    _
  $region15: #{lstm_model_forward.5} parent=0 // pred_check_branch
    %17 = sbr.rel (0) target = $region17
  $region16: #{lstm_model_forward.5} parent=0 // pred_region
    _
  $region17: #{lstm_model_forward.5} parent=0 // pred_fallthru
    _
  // Predicated region
  $region18: #{lstm_model_forward.5} parent=0 // pred_check
    _
  $region19: #{lstm_model_forward.5} parent=0 // pred_check_branch
    %19 = sbr.rel (0) target = $region21
  $region20: #{lstm_model_forward.5} parent=0 // pred_region
    _
  $region21: #{lstm_model_forward.5} parent=0 // pred_fallthru
    _
  %v21 = vld [vmem:[%s0] sm:$0xf]
  %v22 = vld [vmem:[%s0 + $0x4] sm:$0xf]
  %v23 = vld [vmem:[%s0 + $0x8] sm:$0xf]
  %v24 = vld [vmem:[%s0 + $0xc] sm:$0xf]
  %v25 = vld [vmem:[%s0 + $0x10] sm:$0xf]
  %v26 = vld [vmem:[%s0 + $0x14] sm:$0xf]
  %v27 = vld [vmem:[%s0 + $0x18] sm:$0xf]
  %v28 = vld [vmem:[%s0 + $0x1c] sm:$0xf]
  %v29 = vld [vmem:[%s0 + $0x20] sm:$0xf]
  %v30 = vld [vmem:[%s0 + $0x24] sm:$0xf]
  %v31 = vld [vmem:[%s0 + $0x28] sm:$0xf]
  %v32 = vld [vmem:[%s0 + $0x2c] sm:$0xf]
  %v33 = vld [vmem:[%s0 + $0x30] sm:$0xf]
  %v34 = vld [vmem:[%s0 + $0x34] sm:$0xf]
  %v35 = vld [vmem:[%s0 + $0x38] sm:$0xf]
  %v36 = vld [vmem:[%s0 + $0x3c] sm:$0xf]
  %v37 = vld [vmem:[%s1] sm:$0xf]
  %v38 = vld [vmem:[%s1 + $0x4] sm:$0xf]
  %v39 = vld [vmem:[%s1 + $0x8] sm:$0xf]
  %v40 = vld [vmem:[%s1 + $0xc] sm:$0xf]
  %v41 = vld [vmem:[%s1 + $0x10] sm:$0xf]
  %v42 = vld [vmem:[%s1 + $0x14] sm:$0xf]
  %v43 = vld [vmem:[%s1 + $0x18] sm:$0xf]
  %v44 = vld [vmem:[%s1 + $0x1c] sm:$0xf]
  %v45 = vld [vmem:[%s1 + $0x20] sm:$0xf]
  %v46 = vld [vmem:[%s1 + $0x24] sm:$0xf]
  %v47 = vld [vmem:[%s1 + $0x28] sm:$0xf]
  %v48 = vld [vmem:[%s1 + $0x2c] sm:$0xf]
  %v49 = vld [vmem:[%s1 + $0x30] sm:$0xf]
  %v50 = vld [vmem:[%s1 + $0x34] sm:$0xf]
  %v51 = vld [vmem:[%s1 + $0x38] sm:$0xf]
  %v52 = vld [vmem:[%s1 + $0x3c] sm:$0xf]
  %v53 = vld [vmem:[%s2] sm:$0xf]
  %v54 = vld [vmem:[%s2 + $0x4] sm:$0xf]
  %v55 = vld [vmem:[%s3] sm:$0xf]
  %v56 = vld [vmem:[%s3 + $0x4] sm:$0xf]
  %v73 = vunpack.c.l.b16 %v37
  %v74 = vunpack.c.l.b16 %v38
  %v75 = vunpack.c.l.b16 %v39
  %v76 = vunpack.c.l.b16 %v40
  %v77 = vunpack.c.l.b16 %v41
  %v78 = vunpack.c.l.b16 %v42
  %v79 = vunpack.c.l.b16 %v43
  %v80 = vunpack.c.l.b16 %v44
  %v81 = vunpack.c.l.b16 %v45
  %v82 = vunpack.c.l.b16 %v46
  %v83 = vunpack.c.l.b16 %v47
  %v84 = vunpack.c.l.b16 %v48
  %v85 = vunpack.c.l.b16 %v49
  %v86 = vunpack.c.l.b16 %v50
  %v87 = vunpack.c.l.b16 %v51
  %v88 = vunpack.c.l.b16 %v52
  %v89 = vpack.c.b16 %v74, %v73
  %v90 = vpack.c.b16 %v76, %v75
  %v91 = vpack.c.b16 %v78, %v77
  %v92 = vpack.c.b16 %v80, %v79
  %v93 = vpack.c.b16 %v82, %v81
  %v94 = vpack.c.b16 %v84, %v83
  %v95 = vpack.c.b16 %v86, %v85
  %v96 = vpack.c.b16 %v88, %v87
  %v99 = vunpack.c.l.b16 %v55
  %v100 = vunpack.c.l.b16 %v56
  %v101 = vpack.c.b16 %v100, %v99
  %vm103 = vcmask 130048
  %v105 = vsel %vm103, %v89, 0
  %v108 = vsel %vm103, %v90, 0
  %v111 = vsel %vm103, %v91, 0
  %v114 = vsel %vm103, %v92, 0
  %v117 = vsel %vm103, %v93, 0
  %v120 = vsel %vm103, %v94, 0
  %v123 = vsel %vm103, %v95, 0
  %v126 = vsel %vm103, %v96, 0
  %128 = vmatpush.bf16.msra.mxu0 0
  %129 = vmatpush.bf16.msra.mxu0 0
  %130 = vmatpush.bf16.msra.mxu0 0
  %131 = vmatpush.bf16.msra.mxu0 0
  %132 = vmatpush.bf16.msra.mxu0 0
  %133 = vmatpush.bf16.msra.mxu0 0
  %134 = vmatpush.bf16.msra.mxu0 0
  %135 = vmatpush.bf16.msra.mxu0 %v101
  %136 = vmatmul.bf16.gmra.mxu0 %v105
  %v137 = vpop.f32.mrf.mxu0
  %v138 = vadd.f32 0.0, %v137
  %v139 = vpop.f32.mrf.mxu0
  %v140 = vadd.f32 0.0, %v139
  %141 = vmatmul.bf16.gmra.mxu0 %v108
  %v142 = vpop.f32.mrf.mxu0
  %v143 = vadd.f32 0.0, %v142
  %v144 = vpop.f32.mrf.mxu0
  %v145 = vadd.f32 0.0, %v144
  %146 = vmatmul.bf16.gmra.mxu0 %v111
  %v147 = vpop.f32.mrf.mxu0
  %v148 = vadd.f32 0.0, %v147
  %v149 = vpop.f32.mrf.mxu0
  %v150 = vadd.f32 0.0, %v149
  %151 = vmatmul.bf16.gmra.mxu0 %v114
  %v152 = vpop.f32.mrf.mxu0
  %v153 = vadd.f32 0.0, %v152
  %v154 = vpop.f32.mrf.mxu0
  %v155 = vadd.f32 0.0, %v154
  %156 = vmatmul.bf16.gmra.mxu0 %v117
  %v157 = vpop.f32.mrf.mxu0
  %v158 = vadd.f32 0.0, %v157
  %v159 = vpop.f32.mrf.mxu0
  %v160 = vadd.f32 0.0, %v159
  %161 = vmatmul.bf16.gmra.mxu0 %v120
  %v162 = vpop.f32.mrf.mxu0
  %v163 = vadd.f32 0.0, %v162
  %v164 = vpop.f32.mrf.mxu0
  %v165 = vadd.f32 0.0, %v164
  %166 = vmatmul.bf16.gmra.mxu0 %v123
  %v167 = vpop.f32.mrf.mxu0
  %v168 = vadd.f32 0.0, %v167
  %v169 = vpop.f32.mrf.mxu0
  %v170 = vadd.f32 0.0, %v169
  %171 = vmatmul.bf16.gmra.mxu0 %v126
  %v172 = vpop.f32.mrf.mxu0
  %v173 = vadd.f32 0.0, %v172
  %v174 = vpop.f32.mrf.mxu0
  %v175 = vadd.f32 0.0, %v174
  %176 = vdwg.mxu0
  %v193 = vunpack.c.l.b16 %v21
  %v194 = vunpack.c.l.b16 %v22
  %v195 = vunpack.c.l.b16 %v23
  %v196 = vunpack.c.l.b16 %v24
  %v197 = vunpack.c.l.b16 %v25
  %v198 = vunpack.c.l.b16 %v26
  %v199 = vunpack.c.l.b16 %v27
  %v200 = vunpack.c.l.b16 %v28
  %v201 = vunpack.c.l.b16 %v29
  %v202 = vunpack.c.l.b16 %v30
  %v203 = vunpack.c.l.b16 %v31
  %v204 = vunpack.c.l.b16 %v32
  %v205 = vunpack.c.l.b16 %v33
  %v206 = vunpack.c.l.b16 %v34
  %v207 = vunpack.c.l.b16 %v35
  %v208 = vunpack.c.l.b16 %v36
  %v209 = vpack.c.b16 %v194, %v193
  %v210 = vpack.c.b16 %v196, %v195
  %v211 = vpack.c.b16 %v198, %v197
  %v212 = vpack.c.b16 %v200, %v199
  %v213 = vpack.c.b16 %v202, %v201
  %v214 = vpack.c.b16 %v204, %v203
  %v215 = vpack.c.b16 %v206, %v205
  %v216 = vpack.c.b16 %v208, %v207
  %v219 = vunpack.c.l.b16 %v53
  %v220 = vunpack.c.l.b16 %v54
  %v221 = vpack.c.b16 %v220, %v219
  %v224 = vsel %vm103, %v209, 0
  %v227 = vsel %vm103, %v210, 0
  %v230 = vsel %vm103, %v211, 0
  %v233 = vsel %vm103, %v212, 0
  %v236 = vsel %vm103, %v213, 0
  %v239 = vsel %vm103, %v214, 0
  %v242 = vsel %vm103, %v215, 0
  %v245 = vsel %vm103, %v216, 0
  %247 = vmatpush.bf16.msra.mxu0 0
  %248 = vmatpush.bf16.msra.mxu0 0
  %249 = vmatpush.bf16.msra.mxu0 0
  %250 = vmatpush.bf16.msra.mxu0 0
  %251 = vmatpush.bf16.msra.mxu0 0
  %252 = vmatpush.bf16.msra.mxu0 0
  %253 = vmatpush.bf16.msra.mxu0 0
  %254 = vmatpush.bf16.msra.mxu0 %v221
  %255 = vmatmul.bf16.gmra.mxu0 %v224
  %v256 = vpop.f32.mrf.mxu0
  %v257 = vadd.f32 %v138, %v256
  %v258 = vpop.f32.mrf.mxu0
  %v259 = vadd.f32 %v140, %v258
  %260 = vmatmul.bf16.gmra.mxu0 %v227
  %v261 = vpop.f32.mrf.mxu0
  %v262 = vadd.f32 %v143, %v261
  %v263 = vpop.f32.mrf.mxu0
  %v264 = vadd.f32 %v145, %v263
  %265 = vmatmul.bf16.gmra.mxu0 %v230
  %v266 = vpop.f32.mrf.mxu0
  %v267 = vadd.f32 %v148, %v266
  %v268 = vpop.f32.mrf.mxu0
  %v269 = vadd.f32 %v150, %v268
  %270 = vmatmul.bf16.gmra.mxu0 %v233
  %v271 = vpop.f32.mrf.mxu0
  %v272 = vadd.f32 %v153, %v271
  %v273 = vpop.f32.mrf.mxu0
  %v274 = vadd.f32 %v155, %v273
  %275 = vmatmul.bf16.gmra.mxu0 %v236
  %v276 = vpop.f32.mrf.mxu0
  %v277 = vadd.f32 %v158, %v276
  %v278 = vpop.f32.mrf.mxu0
  %v279 = vadd.f32 %v160, %v278
  %280 = vmatmul.bf16.gmra.mxu0 %v239
  %v281 = vpop.f32.mrf.mxu0
  %v282 = vadd.f32 %v163, %v281
  %v283 = vpop.f32.mrf.mxu0
  %v284 = vadd.f32 %v165, %v283
  %285 = vmatmul.bf16.gmra.mxu0 %v242
  %v286 = vpop.f32.mrf.mxu0
  %v287 = vadd.f32 %v168, %v286
  %v288 = vpop.f32.mrf.mxu0
  %v289 = vadd.f32 %v170, %v288
  %290 = vmatmul.bf16.gmra.mxu0 %v245
  %v291 = vpop.f32.mrf.mxu0
  %v292 = vadd.f32 %v173, %v291
  %v293 = vpop.f32.mrf.mxu0
  %v294 = vadd.f32 %v175, %v293
  %295 = vdwg.mxu0
  %v296 = vld [vmem:[%s4] sm:$0x1]
  %v298 = vperm.slane %v296, 0
  %v300 = vadd.f32 %v257, %v298
  %v301 = vadd.f32 %v259, %v298
  %v302 = vadd.f32 %v262, %v298
  %v303 = vadd.f32 %v264, %v298
  %v304 = vadd.f32 %v267, %v298
  %v305 = vadd.f32 %v269, %v298
  %v306 = vadd.f32 %v272, %v298
  %v307 = vadd.f32 %v274, %v298
  %v308 = vadd.f32 %v277, %v298
  %v309 = vadd.f32 %v279, %v298
  %v310 = vadd.f32 %v282, %v298
  %v311 = vadd.f32 %v284, %v298
  %v312 = vadd.f32 %v287, %v298
  %v313 = vadd.f32 %v289, %v298
  %v314 = vadd.f32 %v292, %v298
  %v315 = vadd.f32 %v294, %v298
  %v316 = vmax.f32 %v300, 0.0
  %v317 = vmax.f32 %v301, 0.0
  %v318 = vmax.f32 %v302, 0.0
  %v319 = vmax.f32 %v303, 0.0
  %v320 = vmax.f32 %v304, 0.0
  %v321 = vmax.f32 %v305, 0.0
  %v322 = vmax.f32 %v306, 0.0
  %v323 = vmax.f32 %v307, 0.0
  %v324 = vmax.f32 %v308, 0.0
  %v325 = vmax.f32 %v309, 0.0
  %v326 = vmax.f32 %v310, 0.0
  %v327 = vmax.f32 %v311, 0.0
  %v328 = vmax.f32 %v312, 0.0
  %v329 = vmax.f32 %v313, 0.0
  %v330 = vmax.f32 %v314, 0.0
  %v331 = vmax.f32 %v315, 0.0
  %v332 = vpack.c.bf16 %v316, %v316
  %v333 = vpack.c.bf16 %v317, %v317
  %v334 = vpack.c.bf16 %v318, %v318
  %v335 = vpack.c.bf16 %v319, %v319
  %v336 = vpack.c.bf16 %v320, %v320
  %v337 = vpack.c.bf16 %v321, %v321
  %v338 = vpack.c.bf16 %v322, %v322
  %v339 = vpack.c.bf16 %v323, %v323
  %v340 = vpack.c.bf16 %v324, %v324
  %v341 = vpack.c.bf16 %v325, %v325
  %v342 = vpack.c.bf16 %v326, %v326
  %v343 = vpack.c.bf16 %v327, %v327
  %v344 = vpack.c.bf16 %v328, %v328
  %v345 = vpack.c.bf16 %v329, %v329
  %v346 = vpack.c.bf16 %v330, %v330
  %v347 = vpack.c.bf16 %v331, %v331
  %348 = vst [vmem:[%s5] sm:$0xf] %v332
  %349 = vst [vmem:[%s5 + $0x4] sm:$0xf] %v333
  %350 = vst [vmem:[%s5 + $0x8] sm:$0xf] %v334
  %351 = vst [vmem:[%s5 + $0xc] sm:$0xf] %v335
  %352 = vst [vmem:[%s5 + $0x10] sm:$0xf] %v336
  %353 = vst [vmem:[%s5 + $0x14] sm:$0xf] %v337
  %354 = vst [vmem:[%s5 + $0x18] sm:$0xf] %v338
  %355 = vst [vmem:[%s5 + $0x1c] sm:$0xf] %v339
  %356 = vst [vmem:[%s5 + $0x20] sm:$0xf] %v340
  %357 = vst [vmem:[%s5 + $0x24] sm:$0xf] %v341
  %358 = vst [vmem:[%s5 + $0x28] sm:$0xf] %v342
  %359 = vst [vmem:[%s5 + $0x2c] sm:$0xf] %v343
  %360 = vst [vmem:[%s5 + $0x30] sm:$0xf] %v344
  %361 = vst [vmem:[%s5 + $0x34] sm:$0xf] %v345
  %362 = vst [vmem:[%s5 + $0x38] sm:$0xf] %v346
  %363 = vst [vmem:[%s5 + $0x3c] sm:$0xf] %v347
  // Predicated region
  $region22: #{lstm_model_forward.5} parent=0 // pred_check
    _
  $region23: #{lstm_model_forward.5} parent=0 // pred_check_branch
    %365 = sbr.rel (0) target = $region25
  $region24: #{lstm_model_forward.5} parent=0 // pred_region
    _
  $region25: #{lstm_model_forward.5} parent=0 // pred_fallthru
    _
  // Predicated region
  $region26: #{lstm_model_forward.5} parent=0 // pred_check
    _
  $region27: #{lstm_model_forward.5} parent=0 // pred_check_branch
    %367 = sbr.rel (0) target = $region29
  $region28: #{lstm_model_forward.5} parent=0 // pred_region
    _
  $region29: #{lstm_model_forward.5} parent=0 // pred_fallthru
    _

// kernel: lstm_model_forward.6
$region0: #{lstm_model_forward.6}
  #allocation0 [shape = 'u32[]', space=smem, size = 0x4, offset = 0x4, fixed_abs, tag = 'smem constant byte address 0x4 - core index']
  #allocation1 [shape = 'u32[72,128]{1,0:T(1,128)}', space=vmem, size = 0x9000, scoped, tag = 'internal scratch']
  #allocation2 [shape = 'f32[128,512]{1,0:T(8,128)}', space=vmem, size = 0x40000, scoped, tag = 'scratch operand']
  #allocation3 [shape = 'f32[16,128]{1,0:T(8,128)}', space=vmem, size = 0x2000, scoped, tag = 'scratch operand']
  #allocation4 [shape = 'f32[16,128]{1,0:T(8,128)}', space=vmem, size = 0x2000, scoped, tag = 'scratch operand']
  %s0 = inlined_call_operand.vmem [shape: bf16[8,16,128], index: 0, kind: input, shape index: {}]
  %s1 = inlined_call_operand.vmem [shape: bf16[2,128,512], index: 1, kind: input, shape index: {}]
  %s2 = inlined_call_operand.vmem [shape: bf16[2,128,512], index: 2, kind: input, shape index: {}]
  %s3 = inlined_call_operand.vmem [shape: f32[2,1,512], index: 3, kind: input, shape index: {}]
  %s4 = inlined_call_operand.vmem [shape: s32[16,1], index: 4, kind: input, shape index: {}]
  %s5 = inlined_call_operand.vmem [shape: bf16[8,16,256], index: 5, kind: output, shape index: {}]
  %s6 = sld [smem:[#allocation0]]
  $region101: #{lstm_model_forward.6} parent=0
    _
  %s8 = ssub.s32 1, %s6
  %s9 = scalar_select 0, %s8, %s6
  $region1: #{lstm_model_forward.6} parent=0
    #allocation5 [shape = 'u8[65536]{0}', space=vmem, size = 0x10000, scoped, tag = 'output window, operand 0']
    loop: start=0, step=1, limit=4
    $region2: #{lstm_model_forward.6} parent=1 // loop_pre_header
      _
    $region3: #{lstm_model_forward.6} parent=1 // loop_header
      %s11 = sphi 0, %s15
      %p12 = scmp.ge.s32.totalorder %s11, 4
      %s18 = sphi 0, %s30
      %s19 = sphi 0, %s26
      %s20 = sphi 0, %s18
      %s21 = sphi 0, %s19
      %s22 = sphi 0, %s20
      %s23 = sphi 0, %s21
      %s41 = sphi 0, %s43
      %s44 = sphi 0, %s41
      %s45 = sphi 0, %s44
      %s61 = sphi 0, %s45
      %s67 = sphi 0, %s69
      %s70 = sphi 0, %s67
      %s71 = sphi 0, %s70
      %s87 = sphi 0, %s71
      %s93 = sphi 0, %s95
      %s96 = sphi 0, %s93
      %s97 = sphi 0, %s96
      %s113 = sphi 0, %s97
      %s119 = sphi 0, %s121
      %s122 = sphi 0, %s119
      %s123 = sphi 0, %s122
      %s139 = sphi 0, %s123
      %s143 = sphi 0, %s143
      %s145 = sphi 0, %s143
      %s146 = sphi 0, %s145
      %s160 = sphi 0, %s146
      %s176 = sphi 0, %s178
      %s179 = sphi 0, %s176
      %s180 = sphi 0, %s179
      %s196 = sphi 0, %s180
    $region4: #{lstm_model_forward.6} parent=1 // loop_header_branch
      %14 = sbr.rel (%p12) target = $region8
    $region5: #{lstm_model_forward.6} parent=1 // loop_body
      %s16 = ssub.s32 %s11, 1
      %s17 = ssub.s32 %s11, 2
      %s24 = sadd.s32 1, %s19
      %p25 = scmp.ge.s32.totalorder %s24, 1
      %s26 = scalar_select %p25, 0, %s24
      %s27 = sadd.s32 1, %s18
      %s28 = scalar_select %p25, %s27, %s18
      %p29 = scmp.ge.s32.totalorder %s28, 2
      %s30 = scalar_select %p29, 0, %s28
      %s31 = smul.u32 %s19, 2
      %s32 = ssub.s32 0, %s31
      %s33 = smul.u32 %s18, %s32
      %s34 = sadd.s32 %s19, %s33
      %s35 = smul.u32 %s26, 2
      %s36 = ssub.s32 0, %s35
      %s37 = smul.u32 %s30, %s36
      %s38 = sadd.s32 %s26, %s37
      %s39 = ssub.s32 %s34, %s38
      %p40 = scmp.eq.s32.totalorder %s39, 0
      %s42 = sadd.s32 %s41, 1
      %s43 = scalar_select %p40, %s41, %s42
      %p46 = pneg %p40
      %p47 = scmp.eq.s32.totalorder %s11, 1
      %p48 = por %p46, %p47
      %p49 = scmp.ne.s32.totalorder %s41, %s44
      %p50 = scmp.eq.s32.totalorder %s11, 0
      %p51 = por %p49, %p50
      %p52 = scmp.ne.s32.totalorder %s41, %s44
      %p53 = scmp.eq.s32.totalorder %s16, 1
      %p54 = por %p52, %p53
      %p55 = scmp.ne.s32.totalorder %s44, %s45
      %p56 = scmp.eq.s32.totalorder %s16, 0
      %p57 = por %p55, %p56
      %p58 = scmp.ne.s32.totalorder %s44, %s45
      %p59 = scmp.eq.s32.totalorder %s17, 1
      %p60 = por %p58, %p59
      %p62 = scmp.ne.s32.totalorder %s45, %s61
      %p63 = scmp.eq.s32.totalorder %s17, 0
      %p64 = por %p62, %p63
      %s65 = ssub.s32 %s18, %s30
      %p66 = scmp.eq.s32.totalorder %s65, 0
      %s68 = sadd.s32 %s67, 1
      %s69 = scalar_select %p66, %s67, %s68
      %p72 = pneg %p66
      %p73 = scmp.eq.s32.totalorder %s11, 1
      %p74 = por %p72, %p73
      %p75 = scmp.ne.s32.totalorder %s67, %s70
      %p76 = scmp.eq.s32.totalorder %s11, 0
      %p77 = por %p75, %p76
      %p78 = scmp.ne.s32.totalorder %s67, %s70
      %p79 = scmp.eq.s32.totalorder %s16, 1
      %p80 = por %p78, %p79
      %p81 = scmp.ne.s32.totalorder %s70, %s71
      %p82 = scmp.eq.s32.totalorder %s16, 0
      %p83 = por %p81, %p82
      %p84 = scmp.ne.s32.totalorder %s70, %s71
      %p85 = scmp.eq.s32.totalorder %s17, 1
      %p86 = por %p84, %p85
      %p88 = scmp.ne.s32.totalorder %s71, %s87
      %p89 = scmp.eq.s32.totalorder %s17, 0
      %p90 = por %p88, %p89
      %s91 = ssub.s32 %s18, %s30
      %p92 = scmp.eq.s32.totalorder %s91, 0
      %s94 = sadd.s32 %s93, 1
      %s95 = scalar_select %p92, %s93, %s94
      %p98 = pneg %p92
      %p99 = scmp.eq.s32.totalorder %s11, 1
      %p100 = por %p98, %p99
      %p101 = scmp.ne.s32.totalorder %s93, %s96
      %p102 = scmp.eq.s32.totalorder %s11, 0
      %p103 = por %p101, %p102
      %p104 = scmp.ne.s32.totalorder %s93, %s96
      %p105 = scmp.eq.s32.totalorder %s16, 1
      %p106 = por %p104, %p105
      %p107 = scmp.ne.s32.totalorder %s96, %s97
      %p108 = scmp.eq.s32.totalorder %s16, 0
      %p109 = por %p107, %p108
      %p110 = scmp.ne.s32.totalorder %s96, %s97
      %p111 = scmp.eq.s32.totalorder %s17, 1
      %p112 = por %p110, %p111
      %p114 = scmp.ne.s32.totalorder %s97, %s113
      %p115 = scmp.eq.s32.totalorder %s17, 0
      %p116 = por %p114, %p115
      %s117 = ssub.s32 %s18, %s30
      %p118 = scmp.eq.s32.totalorder %s117, 0
      %s120 = sadd.s32 %s119, 1
      %s121 = scalar_select %p118, %s119, %s120
      %p124 = pneg %p118
      %p125 = scmp.eq.s32.totalorder %s11, 1
      %p126 = por %p124, %p125
      %p127 = scmp.ne.s32.totalorder %s119, %s122
      %p128 = scmp.eq.s32.totalorder %s11, 0
      %p129 = por %p127, %p128
      %p130 = scmp.ne.s32.totalorder %s119, %s122
      %p131 = scmp.eq.s32.totalorder %s16, 1
      %p132 = por %p130, %p131
      %p133 = scmp.ne.s32.totalorder %s122, %s123
      %p134 = scmp.eq.s32.totalorder %s16, 0
      %p135 = por %p133, %p134
      %p136 = scmp.ne.s32.totalorder %s122, %s123
      %p137 = scmp.eq.s32.totalorder %s17, 1
      %p138 = por %p136, %p137
      %p140 = scmp.ne.s32.totalorder %s123, %s139
      %p141 = scmp.eq.s32.totalorder %s17, 0
      %p142 = por %p140, %p141
      %s144 = sadd.s32 %s143, 1
      %p147 = scmp.eq.s32.totalorder %s11, 1
      %p148 = scmp.ne.s32.totalorder %s143, %s145
      %p149 = scmp.eq.s32.totalorder %s11, 0
      %p150 = por %p148, %p149
      %p151 = scmp.ne.s32.totalorder %s143, %s145
      %p152 = scmp.eq.s32.totalorder %s16, 1
      %p153 = por %p151, %p152
      %p154 = scmp.ne.s32.totalorder %s145, %s146
      %p155 = scmp.eq.s32.totalorder %s16, 0
      %p156 = por %p154, %p155
      %p157 = scmp.ne.s32.totalorder %s145, %s146
      %p158 = scmp.eq.s32.totalorder %s17, 1
      %p159 = por %p157, %p158
      %p161 = scmp.ne.s32.totalorder %s146, %s160
      %p162 = scmp.eq.s32.totalorder %s17, 0
      %p163 = por %p161, %p162
      %s164 = smul.u32 %s19, 2
      %s165 = ssub.s32 0, %s164
      %s166 = smul.u32 %s18, %s165
      %s167 = sadd.s32 %s19, %s166
      %s168 = smul.u32 %s26, 2
      %s169 = ssub.s32 0, %s168
      %s170 = smul.u32 %s30, %s169
      %s171 = sadd.s32 %s26, %s170
      %s172 = ssub.s32 %s167, %s171
      %s173 = ssub.s32 %s18, %s30
      %s174 = sor.u32 %s172, %s173
      %p175 = scmp.eq.s32.totalorder %s174, 0
      %s177 = sadd.s32 %s176, 1
      %s178 = scalar_select %p175, %s176, %s177
      %p181 = pneg %p175
      %p182 = scmp.eq.s32.totalorder %s11, 1
      %p183 = por %p181, %p182
      %p184 = scmp.ne.s32.totalorder %s176, %s179
      %p185 = scmp.eq.s32.totalorder %s11, 0
      %p186 = por %p184, %p185
      %p187 = scmp.ne.s32.totalorder %s176, %s179
      %p188 = scmp.eq.s32.totalorder %s16, 1
      %p189 = por %p187, %p188
      %p190 = scmp.ne.s32.totalorder %s179, %s180
      %p191 = scmp.eq.s32.totalorder %s16, 0
      %p192 = por %p190, %p191
      %p193 = scmp.ne.s32.totalorder %s179, %s180
      %p194 = scmp.eq.s32.totalorder %s17, 1
      %p195 = por %p193, %p194
      %p197 = scmp.ne.s32.totalorder %s180, %s196
      %p198 = scmp.eq.s32.totalorder %s17, 0
      %p199 = por %p197, %p198
      %p200 = scmp.le.s32.totalorder 1, %s11
      %p201 = scmp.lt.s32.totalorder %s11, 3
      %p202 = pnand %p200, %p201
      %p203 = pneg %p202
      // Predicated region
      $region9: #{lstm_model_forward.6} parent=5 // pred_check
        _
      $region10: #{lstm_model_forward.6} parent=5 // pred_check_branch
        %205 = sbr.rel (%p202) target = $region12
      $region11: #{lstm_model_forward.6} parent=5 // pred_region
        %s206 = ssub.s32 %s11, 1
        // Predicated region
        $region13: #{lstm_model_forward.6} parent=11 // pred_check
          %p207 = pneg %p156
        $region14: #{lstm_model_forward.6} parent=11 // pred_check_branch
          %209 = sbr.rel (%p207) target = $region16
        $region15: #{lstm_model_forward.6} parent=11 // pred_region
          _
        $region16: #{lstm_model_forward.6} parent=11 // pred_fallthru
          _
      $region12: #{lstm_model_forward.6} parent=5 // pred_fallthru
        _
      %p210 = scmp.lt.s32.totalorder %s11, 2
      // Predicated region
      $region17: #{lstm_model_forward.6} parent=5 // pred_check
        %p211 = pneg %p210
      $region18: #{lstm_model_forward.6} parent=5 // pred_check_branch
        %213 = sbr.rel (%p211) target = $region20
      $region19: #{lstm_model_forward.6} parent=5 // pred_region
        // Predicated region
        $region21: #{lstm_model_forward.6} parent=19 // pred_check
          %p214 = pneg %p51
        $region22: #{lstm_model_forward.6} parent=19 // pred_check_branch
          %216 = sbr.rel (%p214) target = $region24
        $region23: #{lstm_model_forward.6} parent=19 // pred_region
          %s217 = smul.u32 %s19, 2
          %s218 = ssub.s32 0, %s217
          %s219 = smul.u32 %s18, %s218
          %s220 = sadd.s32 %s19, %s219
          %s221 = smul.u32 8, %s220
          %p222 = scmp.lt.s32.totalorder %s221, 7
          %s223 = scalar_select %p222, %s221, 7
          %s224 = smul.addr %s223, 2
          %s225 = smul.addr %s224, 4
          %s226 = scalar_lea.vmem %s0, %s225
          %s227 = smul.u32 %s19, 2
          %s228 = ssub.s32 0, %s227
          %s229 = smul.u32 %s18, %s228
          %s230 = sadd.s32 %s19, %s229
          %s231 = smul.u32 8, %s230
        $region24: #{lstm_model_forward.6} parent=19 // pred_fallthru
          _
        // Predicated region
        $region25: #{lstm_model_forward.6} parent=19 // pred_check
          %p232 = pneg %p77
        $region26: #{lstm_model_forward.6} parent=19 // pred_check_branch
          %234 = sbr.rel (%p232) target = $region28
        $region27: #{lstm_model_forward.6} parent=19 // pred_region
          %p235 = scmp.lt.s32.totalorder %s18, 1
          %s236 = scalar_select %p235, %s18, 1
          %s237 = smul.addr %s236, 64
          %s238 = smul.addr %s237, 4
          %s239 = scalar_lea.vmem %s1, %s238
        $region28: #{lstm_model_forward.6} parent=19 // pred_fallthru
          _
        // Predicated region
        $region29: #{lstm_model_forward.6} parent=19 // pred_check
          %p240 = pneg %p103
        $region30: #{lstm_model_forward.6} parent=19 // pred_check_branch
          %242 = sbr.rel (%p240) target = $region32
        $region31: #{lstm_model_forward.6} parent=19 // pred_region
          %p243 = scmp.lt.s32.totalorder %s18, 1
          %s244 = scalar_select %p243, %s18, 1
          %s245 = smul.addr %s244, 64
          %s246 = smul.addr %s245, 4
          %s247 = scalar_lea.vmem %s2, %s246
        $region32: #{lstm_model_forward.6} parent=19 // pred_fallthru
          _
        // Predicated region
        $region33: #{lstm_model_forward.6} parent=19 // pred_check
          %p248 = pneg %p129
        $region34: #{lstm_model_forward.6} parent=19 // pred_check_branch
          %250 = sbr.rel (%p248) target = $region36
        $region35: #{lstm_model_forward.6} parent=19 // pred_region
          %p251 = scmp.lt.s32.totalorder %s18, 1
          %s252 = scalar_select %p251, %s18, 1
          %s253 = smul.addr %s252, 4
          %s254 = scalar_lea.vmem %s3, %s253
        $region36: #{lstm_model_forward.6} parent=19 // pred_fallthru
          _
      $region20: #{lstm_model_forward.6} parent=5 // pred_fallthru
        _
      %p255 = scmp.le.s32.totalorder 1, %s11
      %p256 = scmp.lt.s32.totalorder %s11, 3
      %p257 = pnand %p255, %p256
      %p258 = pneg %p257
      // Predicated region
      $region37: #{lstm_model_forward.6} parent=5 // pred_check
        _
      $region38: #{lstm_model_forward.6} parent=5 // pred_check_branch
        %260 = sbr.rel (%p257) target = $region40
      $region39: #{lstm_model_forward.6} parent=5 // pred_region
        %s261 = ssub.s32 %s11, 1
        %s262 = smul.u32 %s21, 2
        %s263 = ssub.s32 0, %s262
        %s264 = smul.u32 %s20, %s263
        %s265 = sadd.s32 %s21, %s264
        %s266 = smul.u32 8, %s265
        %p267 = scmp.lt.s32.totalorder %s266, 7
        %s268 = scalar_select %p267, %s266, 7
        %s269 = smul.addr %s268, 2
        %s270 = smul.addr %s269, 4
        %s271 = scalar_lea.vmem %s0, %s270
        %p272 = pneg %p57
        %p273 = pneg %p54
        %p274 = scmp.lt.s32.totalorder %s20, 1
        %s275 = scalar_select %p274, %s20, 1
        %s276 = smul.addr %s275, 64
        %s277 = smul.addr %s276, 4
        %s278 = scalar_lea.vmem %s1, %s277
        %p279 = pneg %p83
        %p280 = pneg %p80
        %p281 = scmp.lt.s32.totalorder %s20, 1
        %s282 = scalar_select %p281, %s20, 1
        %s283 = smul.addr %s282, 64
        %s284 = smul.addr %s283, 4
        %s285 = scalar_lea.vmem %s2, %s284
        %p286 = pneg %p109
        %p287 = pneg %p106
        %p288 = scmp.lt.s32.totalorder %s20, 1
        %s289 = scalar_select %p288, %s20, 1
        %s290 = smul.addr %s289, 4
        %s291 = scalar_lea.vmem %s3, %s290
        %p292 = pneg %p135
        %p293 = pneg %p132
        %p294 = pneg %p156
        %p295 = pneg %p153
        %p296 = pneg %p192
        %p297 = pneg %p189
        %s298 = sand.u32 %s179, 1
        %s299 = sand.u32 %s179, 1
        %s300 = smul.addr %s299, 64
        %s301 = scalar_lea.vmem [#allocation5], %s300
        %s302 = smul.u32 %s21, 2
        %s303 = ssub.s32 0, %s302
        %s304 = smul.u32 %s20, %s303
        %s305 = sadd.s32 %s21, %s304
        %s306 = smul.u32 8, %s305
        %p307 = scmp.lt.s32.totalorder %s306, 7
        %s308 = scalar_select %p307, %s306, 7
        %s309 = smul.addr %s308, 2
        %s310 = smul.addr %s309, 4
        %s311 = scalar_lea.vmem %s0, %s310
        %s312 = smul.u32 %s21, 2
        %s313 = ssub.s32 0, %s312
        %s314 = smul.u32 %s20, %s313
        %s315 = sadd.s32 %s21, %s314
        %s316 = smul.u32 8, %s315
        %p317 = scmp.lt.s32.totalorder %s20, 1
        %s318 = scalar_select %p317, %s20, 1
        %s319 = smul.addr %s318, 64
        %s320 = smul.addr %s319, 4
        %s321 = scalar_lea.vmem %s1, %s320
        %p322 = scmp.lt.s32.totalorder %s20, 1
        %s323 = scalar_select %p322, %s20, 1
        %s324 = smul.addr %s323, 64
        %s325 = smul.addr %s324, 4
        %s326 = scalar_lea.vmem %s2, %s325
        %p327 = scmp.lt.s32.totalorder %s20, 1
        %s328 = scalar_select %p327, %s20, 1
        %s329 = smul.addr %s328, 4
        %s330 = scalar_lea.vmem %s3, %s329
        %s331 = smul.u32 %s21, 2
        %s332 = ssub.s32 0, %s331
        %s333 = smul.u32 %s20, %s332
        %s334 = sadd.s32 %s21, %s333
        %s335 = smul.u32 8, %s334
        %p336 = scmp.eq.s32.totalorder %s21, 0
        // Predicated region
        $region41: #{lstm_model_forward.6} parent=39 // pred_check
          %p337 = pneg %p336
        $region42: #{lstm_model_forward.6} parent=39 // pred_check_branch
          %339 = sbr.rel (%p337) target = $region44
        $region43: #{lstm_model_forward.6} parent=39 // pred_region
          %340 = vst [vmem:[#allocation3] sm:$0xff] 0.0
          %341 = vst [vmem:[#allocation3 + $0x8] sm:$0xff] 0.0
          %342 = vst [vmem:[#allocation4] sm:$0xff] 0.0
          %343 = vst [vmem:[#allocation4 + $0x8] sm:$0xff] 0.0
        $region44: #{lstm_model_forward.6} parent=39 // pred_fallthru
          _
        %v344 = vld [vmem:[%s311] sm:$0xf]
        %v345 = vld [vmem:[%s311 + $0x4] sm:$0xf]
        %v346 = vld [vmem:[%s311 + $0x8] sm:$0xf]
        %v347 = vld [vmem:[%s311 + $0xc] sm:$0xf]
        %v348 = vld [vmem:[%s311 + $0x10] sm:$0xf]
        %v349 = vld [vmem:[%s311 + $0x14] sm:$0xf]
        %v350 = vld [vmem:[%s311 + $0x18] sm:$0xf]
        %v351 = vld [vmem:[%s311 + $0x1c] sm:$0xf]
        %v352 = vld [vmem:[%s311 + $0x20] sm:$0xf]
        %v353 = vld [vmem:[%s311 + $0x24] sm:$0xf]
        %v354 = vld [vmem:[%s311 + $0x28] sm:$0xf]
        %v355 = vld [vmem:[%s311 + $0x2c] sm:$0xf]
        %v356 = vld [vmem:[%s311 + $0x30] sm:$0xf]
        %v357 = vld [vmem:[%s311 + $0x34] sm:$0xf]
        %v358 = vld [vmem:[%s311 + $0x38] sm:$0xf]
        %v359 = vld [vmem:[%s311 + $0x3c] sm:$0xf]
        %v360 = vld [vmem:[%s321] sm:$0xff]
        %v361 = vld [vmem:[%s321 + $0x8] sm:$0xff]
        %v362 = vld [vmem:[%s321 + $0x10] sm:$0xff]
        %v363 = vld [vmem:[%s321 + $0x18] sm:$0xff]
        %v364 = vld [vmem:[%s321 + $0x20] sm:$0xff]
        %v365 = vld [vmem:[%s321 + $0x28] sm:$0xff]
        %v366 = vld [vmem:[%s321 + $0x30] sm:$0xff]
        %v367 = vld [vmem:[%s321 + $0x38] sm:$0xff]
        %v368 = vld [vmem:[%s321 + $0x40] sm:$0xff]
        %v369 = vld [vmem:[%s321 + $0x48] sm:$0xff]
        %v370 = vld [vmem:[%s321 + $0x50] sm:$0xff]
        %v371 = vld [vmem:[%s321 + $0x58] sm:$0xff]
        %v372 = vld [vmem:[%s321 + $0x60] sm:$0xff]
        %v373 = vld [vmem:[%s321 + $0x68] sm:$0xff]
        %v374 = vld [vmem:[%s321 + $0x70] sm:$0xff]
        %v375 = vld [vmem:[%s321 + $0x78] sm:$0xff]
        %v376 = vld [vmem:[%s321 + $0x80] sm:$0xff]
        %v377 = vld [vmem:[%s321 + $0x88] sm:$0xff]
        %v378 = vld [vmem:[%s321 + $0x90] sm:$0xff]
        %v379 = vld [vmem:[%s321 + $0x98] sm:$0xff]
        %v380 = vld [vmem:[%s321 + $0xa0] sm:$0xff]
        %v381 = vld [vmem:[%s321 + $0xa8] sm:$0xff]
        %v382 = vld [vmem:[%s321 + $0xb0] sm:$0xff]
        %v383 = vld [vmem:[%s321 + $0xb8] sm:$0xff]
        %v384 = vld [vmem:[%s321 + $0xc0] sm:$0xff]
        %v385 = vld [vmem:[%s321 + $0xc8] sm:$0xff]
        %v386 = vld [vmem:[%s321 + $0xd0] sm:$0xff]
        %v387 = vld [vmem:[%s321 + $0xd8] sm:$0xff]
        %v388 = vld [vmem:[%s321 + $0xe0] sm:$0xff]
        %v389 = vld [vmem:[%s321 + $0xe8] sm:$0xff]
        %v390 = vld [vmem:[%s321 + $0xf0] sm:$0xff]
        %v391 = vld [vmem:[%s321 + $0xf8] sm:$0xff]
        %v392 = vld [vmem:[%s330] sm:$0xf]
        %v394 = vperm.slane %v392, 0
        %v395 = vperm.slane %v392, 1
        %v396 = vperm.slane %v392, 2
        %v397 = vperm.slane %v392, 3
        %v418 = vunpack.c.l.b16 %v344
        %v419 = vunpack.c.l.b16 %v345
        %v420 = vunpack.c.l.b16 %v346
        %v421 = vunpack.c.l.b16 %v347
        %v422 = vunpack.c.l.b16 %v348
        %v423 = vunpack.c.l.b16 %v349
        %v424 = vunpack.c.l.b16 %v350
        %v425 = vunpack.c.l.b16 %v351
        %v426 = vunpack.c.l.b16 %v352
        %v427 = vunpack.c.l.b16 %v353
        %v428 = vunpack.c.l.b16 %v354
        %v429 = vunpack.c.l.b16 %v355
        %v430 = vunpack.c.l.b16 %v356
        %v431 = vunpack.c.l.b16 %v357
        %v432 = vunpack.c.l.b16 %v358
        %v433 = vunpack.c.l.b16 %v359
        %v434 = vpack.c.b16 %v419, %v418
        %v435 = vpack.c.b16 %v421, %v420
        %v436 = vpack.c.b16 %v423, %v422
        %v437 = vpack.c.b16 %v425, %v424
        %v438 = vpack.c.b16 %v427, %v426
        %v439 = vpack.c.b16 %v429, %v428
        %v440 = vpack.c.b16 %v431, %v430
        %v441 = vpack.c.b16 %v433, %v432
        %v482 = vunpack.c.l.b16 %v360
        %v483 = vunpack.c.h.b16 %v360
        %v484 = vunpack.c.l.b16 %v361
        %v485 = vunpack.c.h.b16 %v361
        %v486 = vunpack.c.l.b16 %v362
        %v487 = vunpack.c.h.b16 %v362
        %v488 = vunpack.c.l.b16 %v363
        %v489 = vunpack.c.h.b16 %v363
        %v490 = vunpack.c.l.b16 %v364
        %v491 = vunpack.c.h.b16 %v364
        %v492 = vunpack.c.l.b16 %v365
        %v493 = vunpack.c.h.b16 %v365
        %v494 = vunpack.c.l.b16 %v366
        %v495 = vunpack.c.h.b16 %v366
        %v496 = vunpack.c.l.b16 %v367
        %v497 = vunpack.c.h.b16 %v367
        %v498 = vunpack.c.l.b16 %v368
        %v499 = vunpack.c.h.b16 %v368
        %v500 = vunpack.c.l.b16 %v369
        %v501 = vunpack.c.h.b16 %v369
        %v502 = vunpack.c.l.b16 %v370
        %v503 = vunpack.c.h.b16 %v370
        %v504 = vunpack.c.l.b16 %v371
        %v505 = vunpack.c.h.b16 %v371
        %v506 = vunpack.c.l.b16 %v372
        %v507 = vunpack.c.h.b16 %v372
        %v508 = vunpack.c.l.b16 %v373
        %v509 = vunpack.c.h.b16 %v373
        %v510 = vunpack.c.l.b16 %v374
        %v511 = vunpack.c.h.b16 %v374
        %v512 = vunpack.c.l.b16 %v375
        %v513 = vunpack.c.h.b16 %v375
        %v514 = vunpack.c.l.b16 %v376
        %v515 = vunpack.c.h.b16 %v376
        %v516 = vunpack.c.l.b16 %v377
        %v517 = vunpack.c.h.b16 %v377
        %v518 = vunpack.c.l.b16 %v378
        %v519 = vunpack.c.h.b16 %v378
        %v520 = vunpack.c.l.b16 %v379
        %v521 = vunpack.c.h.b16 %v379
        %v522 = vunpack.c.l.b16 %v380
        %v523 = vunpack.c.h.b16 %v380
        %v524 = vunpack.c.l.b16 %v381
        %v525 = vunpack.c.h.b16 %v381
        %v526 = vunpack.c.l.b16 %v382
        %v527 = vunpack.c.h.b16 %v382
        %v528 = vunpack.c.l.b16 %v383
        %v529 = vunpack.c.h.b16 %v383
        %v530 = vunpack.c.l.b16 %v384
        %v531 = vunpack.c.h.b16 %v384
        %v532 = vunpack.c.l.b16 %v385
        %v533 = vunpack.c.h.b16 %v385
        %v534 = vunpack.c.l.b16 %v386
        %v535 = vunpack.c.h.b16 %v386
        %v536 = vunpack.c.l.b16 %v387
        %v537 = vunpack.c.h.b16 %v387
        %v538 = vunpack.c.l.b16 %v388
        %v539 = vunpack.c.h.b16 %v388
        %v540 = vunpack.c.l.b16 %v389
        %v541 = vunpack.c.h.b16 %v389
        %v542 = vunpack.c.l.b16 %v390
        %v543 = vunpack.c.h.b16 %v390
        %v544 = vunpack.c.l.b16 %v391
        %v545 = vunpack.c.h.b16 %v391
        %v546 = vpack.c.b16 %v486, %v482
        %v547 = vpack.c.b16 %v487, %v483
        %v548 = vpack.c.b16 %v488, %v484
        %v549 = vpack.c.b16 %v489, %v485
        %v550 = vpack.c.b16 %v494, %v490
        %v551 = vpack.c.b16 %v495, %v491
        %v552 = vpack.c.b16 %v496, %v492
        %v553 = vpack.c.b16 %v497, %v493
        %v554 = vpack.c.b16 %v502, %v498
        %v555 = vpack.c.b16 %v503, %v499
        %v556 = vpack.c.b16 %v504, %v500
        %v557 = vpack.c.b16 %v505, %v501
        %v558 = vpack.c.b16 %v510, %v506
        %v559 = vpack.c.b16 %v511, %v507
        %v560 = vpack.c.b16 %v512, %v508
        %v561 = vpack.c.b16 %v513, %v509
        %v562 = vpack.c.b16 %v518, %v514
        %v563 = vpack.c.b16 %v519, %v515
        %v564 = vpack.c.b16 %v520, %v516
        %v565 = vpack.c.b16 %v521, %v517
        %v566 = vpack.c.b16 %v526, %v522
        %v567 = vpack.c.b16 %v527, %v523
        %v568 = vpack.c.b16 %v528, %v524
        %v569 = vpack.c.b16 %v529, %v525
        %v570 = vpack.c.b16 %v534, %v530
        %v571 = vpack.c.b16 %v535, %v531
        %v572 = vpack.c.b16 %v536, %v532
        %v573 = vpack.c.b16 %v537, %v533
        %v574 = vpack.c.b16 %v542, %v538
        %v575 = vpack.c.b16 %v543, %v539
        %v576 = vpack.c.b16 %v544, %v540
        %v577 = vpack.c.b16 %v545, %v541
        %610 = vmatpush.bf16.msra.mxu0 %v574
        %611 = vmatpush.bf16.msra.mxu0 %v570
        %612 = vmatpush.bf16.msra.mxu0 %v566
        %613 = vmatpush.bf16.msra.mxu0 %v562
        %614 = vmatpush.bf16.msra.mxu0 %v558
        %615 = vmatpush.bf16.msra.mxu0 %v554
        %616 = vmatpush.bf16.msra.mxu0 %v550
        %617 = vmatpush.bf16.msra.mxu0 %v546
        %618 = vmatmul.bf16.gmra.mxu0 %v434
        %v619 = vpop.f32.mrf.mxu0
        %v620 = vadd.f32 %v394, %v619
        %v621 = vpop.f32.mrf.mxu0
        %v622 = vadd.f32 %v394, %v621
        %623 = vmatmul.bf16.gmra.mxu0 %v435
        %v624 = vpop.f32.mrf.mxu0
        %v625 = vadd.f32 %v394, %v624
        %v626 = vpop.f32.mrf.mxu0
        %v627 = vadd.f32 %v394, %v626
        %628 = vmatmul.bf16.gmra.mxu0 %v436
        %v629 = vpop.f32.mrf.mxu0
        %v630 = vadd.f32 %v394, %v629
        %v631 = vpop.f32.mrf.mxu0
        %v632 = vadd.f32 %v394, %v631
        %633 = vmatmul.bf16.gmra.mxu0 %v437
        %v634 = vpop.f32.mrf.mxu0
        %v635 = vadd.f32 %v394, %v634
        %v636 = vpop.f32.mrf.mxu0
        %v637 = vadd.f32 %v394, %v636
        %638 = vmatmul.bf16.gmra.mxu0 %v438
        %v639 = vpop.f32.mrf.mxu0
        %v640 = vadd.f32 %v394, %v639
        %v641 = vpop.f32.mrf.mxu0
        %v642 = vadd.f32 %v394, %v641
        %643 = vmatmul.bf16.gmra.mxu0 %v439
        %v644 = vpop.f32.mrf.mxu0
        %v645 = vadd.f32 %v394, %v644
        %v646 = vpop.f32.mrf.mxu0
        %v647 = vadd.f32 %v394, %v646
        %648 = vmatmul.bf16.gmra.mxu0 %v440
        %v649 = vpop.f32.mrf.mxu0
        %v650 = vadd.f32 %v394, %v649
        %v651 = vpop.f32.mrf.mxu0
        %v652 = vadd.f32 %v394, %v651
        %653 = vmatmul.bf16.gmra.mxu0 %v441
        %v654 = vpop.f32.mrf.mxu0
        %v655 = vadd.f32 %v394, %v654
        %v656 = vpop.f32.mrf.mxu0
        %v657 = vadd.f32 %v394, %v656
        %658 = vdwg.mxu0
        %659 = vmatpush.bf16.msra.mxu0 %v575
        %660 = vmatpush.bf16.msra.mxu0 %v571
        %661 = vmatpush.bf16.msra.mxu0 %v567
        %662 = vmatpush.bf16.msra.mxu0 %v563
        %663 = vmatpush.bf16.msra.mxu0 %v559
        %664 = vmatpush.bf16.msra.mxu0 %v555
        %665 = vmatpush.bf16.msra.mxu0 %v551
        %666 = vmatpush.bf16.msra.mxu0 %v547
        %667 = vmatmul.bf16.gmra.mxu0 %v434
        %v668 = vpop.f32.mrf.mxu0
        %v669 = vadd.f32 %v395, %v668
        %v670 = vpop.f32.mrf.mxu0
        %v671 = vadd.f32 %v395, %v670
        %672 = vmatmul.bf16.gmra.mxu0 %v435
        %v673 = vpop.f32.mrf.mxu0
        %v674 = vadd.f32 %v395, %v673
        %v675 = vpop.f32.mrf.mxu0
        %v676 = vadd.f32 %v395, %v675
        %677 = vmatmul.bf16.gmra.mxu0 %v436
        %v678 = vpop.f32.mrf.mxu0
        %v679 = vadd.f32 %v395, %v678
        %v680 = vpop.f32.mrf.mxu0
        %v681 = vadd.f32 %v395, %v680
        %682 = vmatmul.bf16.gmra.mxu0 %v437
        %v683 = vpop.f32.mrf.mxu0
        %v684 = vadd.f32 %v395, %v683
        %v685 = vpop.f32.mrf.mxu0
        %v686 = vadd.f32 %v395, %v685
        %687 = vmatmul.bf16.gmra.mxu0 %v438
        %v688 = vpop.f32.mrf.mxu0
        %v689 = vadd.f32 %v395, %v688
        %v690 = vpop.f32.mrf.mxu0
        %v691 = vadd.f32 %v395, %v690
        %692 = vmatmul.bf16.gmra.mxu0 %v439
        %v693 = vpop.f32.mrf.mxu0
        %v694 = vadd.f32 %v395, %v693
        %v695 = vpop.f32.mrf.mxu0
        %v696 = vadd.f32 %v395, %v695
        %697 = vmatmul.bf16.gmra.mxu0 %v440
        %v698 = vpop.f32.mrf.mxu0
        %v699 = vadd.f32 %v395, %v698
        %v700 = vpop.f32.mrf.mxu0
        %v701 = vadd.f32 %v395, %v700
        %702 = vmatmul.bf16.gmra.mxu0 %v441
        %v703 = vpop.f32.mrf.mxu0
        %v704 = vadd.f32 %v395, %v703
        %v705 = vpop.f32.mrf.mxu0
        %v706 = vadd.f32 %v395, %v705
        %707 = vdwg.mxu0
        %708 = vmatpush.bf16.msra.mxu0 %v576
        %709 = vmatpush.bf16.msra.mxu0 %v572
        %710 = vmatpush.bf16.msra.mxu0 %v568
        %711 = vmatpush.bf16.msra.mxu0 %v564
        %712 = vmatpush.bf16.msra.mxu0 %v560
        %713 = vmatpush.bf16.msra.mxu0 %v556
        %714 = vmatpush.bf16.msra.mxu0 %v552
        %715 = vmatpush.bf16.msra.mxu0 %v548
        %716 = vmatmul.bf16.gmra.mxu0 %v434
        %v717 = vpop.f32.mrf.mxu0
        %v718 = vadd.f32 %v396, %v717
        %v719 = vpop.f32.mrf.mxu0
        %v720 = vadd.f32 %v396, %v719
        %721 = vmatmul.bf16.gmra.mxu0 %v435
        %v722 = vpop.f32.mrf.mxu0
        %v723 = vadd.f32 %v396, %v722
        %v724 = vpop.f32.mrf.mxu0
        %v725 = vadd.f32 %v396, %v724
        %726 = vmatmul.bf16.gmra.mxu0 %v436
        %v727 = vpop.f32.mrf.mxu0
        %v728 = vadd.f32 %v396, %v727
        %v729 = vpop.f32.mrf.mxu0
        %v730 = vadd.f32 %v396, %v729
        %731 = vmatmul.bf16.gmra.mxu0 %v437
        %v732 = vpop.f32.mrf.mxu0
        %v733 = vadd.f32 %v396, %v732
        %v734 = vpop.f32.mrf.mxu0
        %v735 = vadd.f32 %v396, %v734
        %736 = vmatmul.bf16.gmra.mxu0 %v438
        %v737 = vpop.f32.mrf.mxu0
        %v738 = vadd.f32 %v396, %v737
        %v739 = vpop.f32.mrf.mxu0
        %v740 = vadd.f32 %v396, %v739
        %741 = vmatmul.bf16.gmra.mxu0 %v439
        %v742 = vpop.f32.mrf.mxu0
        %v743 = vadd.f32 %v396, %v742
        %v744 = vpop.f32.mrf.mxu0
        %v745 = vadd.f32 %v396, %v744
        %746 = vmatmul.bf16.gmra.mxu0 %v440
        %v747 = vpop.f32.mrf.mxu0
        %v748 = vadd.f32 %v396, %v747
        %v749 = vpop.f32.mrf.mxu0
        %v750 = vadd.f32 %v396, %v749
        %751 = vmatmul.bf16.gmra.mxu0 %v441
        %v752 = vpop.f32.mrf.mxu0
        %v753 = vadd.f32 %v396, %v752
        %v754 = vpop.f32.mrf.mxu0
        %v755 = vadd.f32 %v396, %v754
        %756 = vdwg.mxu0
        %757 = vmatpush.bf16.msra.mxu0 %v577
        %758 = vmatpush.bf16.msra.mxu0 %v573
        %759 = vmatpush.bf16.msra.mxu0 %v569
        %760 = vmatpush.bf16.msra.mxu0 %v565
        %761 = vmatpush.bf16.msra.mxu0 %v561
        %762 = vmatpush.bf16.msra.mxu0 %v557
        %763 = vmatpush.bf16.msra.mxu0 %v553
        %764 = vmatpush.bf16.msra.mxu0 %v549
        %765 = vmatmul.bf16.gmra.mxu0 %v434
        %v766 = vpop.f32.mrf.mxu0
        %v767 = vadd.f32 %v397, %v766
        %v768 = vpop.f32.mrf.mxu0
        %v769 = vadd.f32 %v397, %v768
        %770 = vmatmul.bf16.gmra.mxu0 %v435
        %v771 = vpop.f32.mrf.mxu0
        %v772 = vadd.f32 %v397, %v771
        %v773 = vpop.f32.mrf.mxu0
        %v774 = vadd.f32 %v397, %v773
        %775 = vmatmul.bf16.gmra.mxu0 %v436
        %v776 = vpop.f32.mrf.mxu0
        %v777 = vadd.f32 %v397, %v776
        %v778 = vpop.f32.mrf.mxu0
        %v779 = vadd.f32 %v397, %v778
        %780 = vmatmul.bf16.gmra.mxu0 %v437
        %v781 = vpop.f32.mrf.mxu0
        %v782 = vadd.f32 %v397, %v781
        %v783 = vpop.f32.mrf.mxu0
        %v784 = vadd.f32 %v397, %v783
        %785 = vmatmul.bf16.gmra.mxu0 %v438
        %v786 = vpop.f32.mrf.mxu0
        %v787 = vadd.f32 %v397, %v786
        %v788 = vpop.f32.mrf.mxu0
        %v789 = vadd.f32 %v397, %v788
        %790 = vmatmul.bf16.gmra.mxu0 %v439
        %v791 = vpop.f32.mrf.mxu0
        %v792 = vadd.f32 %v397, %v791
        %v793 = vpop.f32.mrf.mxu0
        %v794 = vadd.f32 %v397, %v793
        %795 = vmatmul.bf16.gmra.mxu0 %v440
        %v796 = vpop.f32.mrf.mxu0
        %v797 = vadd.f32 %v397, %v796
        %v798 = vpop.f32.mrf.mxu0
        %v799 = vadd.f32 %v397, %v798
        %800 = vmatmul.bf16.gmra.mxu0 %v441
        %v801 = vpop.f32.mrf.mxu0
        %v802 = vadd.f32 %v397, %v801
        %v803 = vpop.f32.mrf.mxu0
        %v804 = vadd.f32 %v397, %v803
        %805 = vdwg.mxu0
        %806 = vst [vmem:[#allocation2] sm:$0xff] %v620
        %807 = vst [vmem:[#allocation2 + $0x8] sm:$0xff] %v669
        %808 = vst [vmem:[#allocation2 + $0x10] sm:$0xff] %v718
        %809 = vst [vmem:[#allocation2 + $0x18] sm:$0xff] %v767
        %810 = vst [vmem:[#allocation2 + $0x20] sm:$0xff] %v622
        %811 = vst [vmem:[#allocation2 + $0x28] sm:$0xff] %v671
        %812 = vst [vmem:[#allocation2 + $0x30] sm:$0xff] %v720
        %813 = vst [vmem:[#allocation2 + $0x38] sm:$0xff] %v769
        %814 = vst [vmem:[#allocation2 + $0x40] sm:$0xff] %v625
        %815 = vst [vmem:[#allocation2 + $0x48] sm:$0xff] %v674
        %816 = vst [vmem:[#allocation2 + $0x50] sm:$0xff] %v723
        %817 = vst [vmem:[#allocation2 + $0x58] sm:$0xff] %v772
        %818 = vst [vmem:[#allocation2 + $0x60] sm:$0xff] %v627
        %819 = vst [vmem:[#allocation2 + $0x68] sm:$0xff] %v676
        %820 = vst [vmem:[#allocation2 + $0x70] sm:$0xff] %v725
        %821 = vst [vmem:[#allocation2 + $0x78] sm:$0xff] %v774
        %822 = vst [vmem:[#allocation2 + $0x80] sm:$0xff] %v630
        %823 = vst [vmem:[#allocation2 + $0x88] sm:$0xff] %v679
        %824 = vst [vmem:[#allocation2 + $0x90] sm:$0xff] %v728
        %825 = vst [vmem:[#allocation2 + $0x98] sm:$0xff] %v777
        %826 = vst [vmem:[#allocation2 + $0xa0] sm:$0xff] %v632
        %827 = vst [vmem:[#allocation2 + $0xa8] sm:$0xff] %v681
        %828 = vst [vmem:[#allocation2 + $0xb0] sm:$0xff] %v730
        %829 = vst [vmem:[#allocation2 + $0xb8] sm:$0xff] %v779
        %830 = vst [vmem:[#allocation2 + $0xc0] sm:$0xff] %v635
        %831 = vst [vmem:[#allocation2 + $0xc8] sm:$0xff] %v684
        %832 = vst [vmem:[#allocation2 + $0xd0] sm:$0xff] %v733
        %833 = vst [vmem:[#allocation2 + $0xd8] sm:$0xff] %v782
        %834 = vst [vmem:[#allocation2 + $0xe0] sm:$0xff] %v637
        %835 = vst [vmem:[#allocation2 + $0xe8] sm:$0xff] %v686
        %836 = vst [vmem:[#allocation2 + $0xf0] sm:$0xff] %v735
        %837 = vst [vmem:[#allocation2 + $0xf8] sm:$0xff] %v784
        %838 = vst [vmem:[#allocation2 + $0x100] sm:$0xff] %v640
        %839 = vst [vmem:[#allocation2 + $0x108] sm:$0xff] %v689
        %840 = vst [vmem:[#allocation2 + $0x110] sm:$0xff] %v738
        %841 = vst [vmem:[#allocation2 + $0x118] sm:$0xff] %v787
        %842 = vst [vmem:[#allocation2 + $0x120] sm:$0xff] %v642
        %843 = vst [vmem:[#allocation2 + $0x128] sm:$0xff] %v691
        %844 = vst [vmem:[#allocation2 + $0x130] sm:$0xff] %v740
        %845 = vst [vmem:[#allocation2 + $0x138] sm:$0xff] %v789
        %846 = vst [vmem:[#allocation2 + $0x140] sm:$0xff] %v645
        %847 = vst [vmem:[#allocation2 + $0x148] sm:$0xff] %v694
        %848 = vst [vmem:[#allocation2 + $0x150] sm:$0xff] %v743
        %849 = vst [vmem:[#allocation2 + $0x158] sm:$0xff] %v792
        %850 = vst [vmem:[#allocation2 + $0x160] sm:$0xff] %v647
        %851 = vst [vmem:[#allocation2 + $0x168] sm:$0xff] %v696
        %852 = vst [vmem:[#allocation2 + $0x170] sm:$0xff] %v745
        %853 = vst [vmem:[#allocation2 + $0x178] sm:$0xff] %v794
        %854 = vst [vmem:[#allocation2 + $0x180] sm:$0xff] %v650
        %855 = vst [vmem:[#allocation2 + $0x188] sm:$0xff] %v699
        %856 = vst [vmem:[#allocation2 + $0x190] sm:$0xff] %v748
        %857 = vst [vmem:[#allocation2 + $0x198] sm:$0xff] %v797
        %858 = vst [vmem:[#allocation2 + $0x1a0] sm:$0xff] %v652
        %859 = vst [vmem:[#allocation2 + $0x1a8] sm:$0xff] %v701
        %860 = vst [vmem:[#allocation2 + $0x1b0] sm:$0xff] %v750
        %861 = vst [vmem:[#allocation2 + $0x1b8] sm:$0xff] %v799
        %862 = vst [vmem:[#allocation2 + $0x1c0] sm:$0xff] %v655
        %863 = vst [vmem:[#allocation2 + $0x1c8] sm:$0xff] %v704
        %864 = vst [vmem:[#allocation2 + $0x1d0] sm:$0xff] %v753
        %865 = vst [vmem:[#allocation2 + $0x1d8] sm:$0xff] %v802
        %866 = vst [vmem:[#allocation2 + $0x1e0] sm:$0xff] %v657
        %867 = vst [vmem:[#allocation2 + $0x1e8] sm:$0xff] %v706
        %868 = vst [vmem:[#allocation2 + $0x1f0] sm:$0xff] %v755
        %869 = vst [vmem:[#allocation2 + $0x1f8] sm:$0xff] %v804
        %v870 = vld [vmem:[%s326] sm:$0xff]
        %v871 = vld [vmem:[%s326 + $0x8] sm:$0xff]
        %v872 = vld [vmem:[%s326 + $0x10] sm:$0xff]
        %v873 = vld [vmem:[%s326 + $0x18] sm:$0xff]
        %v874 = vld [vmem:[%s326 + $0x20] sm:$0xff]
        %v875 = vld [vmem:[%s326 + $0x28] sm:$0xff]
        %v876 = vld [vmem:[%s326 + $0x30] sm:$0xff]
        %v877 = vld [vmem:[%s326 + $0x38] sm:$0xff]
        %v878 = vld [vmem:[%s326 + $0x40] sm:$0xff]
        %v879 = vld [vmem:[%s326 + $0x48] sm:$0xff]
        %v880 = vld [vmem:[%s326 + $0x50] sm:$0xff]
        %v881 = vld [vmem:[%s326 + $0x58] sm:$0xff]
        %v882 = vld [vmem:[%s326 + $0x60] sm:$0xff]
        %v883 = vld [vmem:[%s326 + $0x68] sm:$0xff]
        %v884 = vld [vmem:[%s326 + $0x70] sm:$0xff]
        %v885 = vld [vmem:[%s326 + $0x78] sm:$0xff]
        %v886 = vld [vmem:[%s326 + $0x80] sm:$0xff]
        %v887 = vld [vmem:[%s326 + $0x88] sm:$0xff]
        %v888 = vld [vmem:[%s326 + $0x90] sm:$0xff]
        %v889 = vld [vmem:[%s326 + $0x98] sm:$0xff]
        %v890 = vld [vmem:[%s326 + $0xa0] sm:$0xff]
        %v891 = vld [vmem:[%s326 + $0xa8] sm:$0xff]
        %v892 = vld [vmem:[%s326 + $0xb0] sm:$0xff]
        %v893 = vld [vmem:[%s326 + $0xb8] sm:$0xff]
        %v894 = vld [vmem:[%s326 + $0xc0] sm:$0xff]
        %v895 = vld [vmem:[%s326 + $0xc8] sm:$0xff]
        %v896 = vld [vmem:[%s326 + $0xd0] sm:$0xff]
        %v897 = vld [vmem:[%s326 + $0xd8] sm:$0xff]
        %v898 = vld [vmem:[%s326 + $0xe0] sm:$0xff]
        %v899 = vld [vmem:[%s326 + $0xe8] sm:$0xff]
        %v900 = vld [vmem:[%s326 + $0xf0] sm:$0xff]
        %v901 = vld [vmem:[%s326 + $0xf8] sm:$0xff]
        %s902 = smul.u32 %s21, 2
        %s903 = ssub.s32 0, %s902
        %s904 = smul.u32 %s20, %s903
        %s905 = sadd.s32 %s21, %s904
        %s906 = smul.u32 %s905, 8
        %v907 = vld [vmem:[%s4] sm:$0xff]
        %v908 = vld [vmem:[%s4 + $0x8] sm:$0xff]
        %909 = vset.pattern.permute.xlu0 0
        %910 = vperm.xlu0 %909, %v907
        %v911 = vpop.permute.xlu0 %910
        %912 = vset.pattern.permute.xlu0 0
        %913 = vperm.xlu0 %912, %v908
        %v914 = vpop.permute.xlu0 %913
        loop: start=0, step=1, limit=8
        $region45: #{lstm_model_forward.6} parent=39 // loop_pre_header
          _
        $region46: #{lstm_model_forward.6} parent=39 // loop_header
          %s916 = sphi 0, %s920
          %p917 = scmp.ge.s32.totalorder %s916, 8
        $region47: #{lstm_model_forward.6} parent=39 // loop_header_branch
          %919 = sbr.rel (%p917) target = $region51
        $region48: #{lstm_model_forward.6} parent=39 // loop_body
          %s921 = smul.u32 %s916, 2
          %s922 = ssub.s32 7, %s921
          %s923 = smul.u32 %s20, %s922
          %s924 = sadd.s32 %s916, %s923
          %s925 = sadd.s32 %s906, %s924
          %s926 = smul.u32 %s924, 16
          %s927 = sshra.s32 %s926, 3
          %s928 = sand.u32 %s926, 7
          %s929 = smul.u32 %s927, 4
          %s930 = smul.addr %s929, 8
          %s931 = scalar_lea.vmem [#allocation2], %s930
          %v932 = vld [vmem:[%s931] sm:$0xff]
          %v933 = vld [vmem:[%s931 + $0x8] sm:$0xff]
          %v934 = vld [vmem:[%s931 + $0x10] sm:$0xff]
          %v935 = vld [vmem:[%s931 + $0x18] sm:$0xff]
          %v936 = vld [vmem:[%s931 + $0x20] sm:$0xff]
          %v937 = vld [vmem:[%s931 + $0x28] sm:$0xff]
          %v938 = vld [vmem:[%s931 + $0x30] sm:$0xff]
          %v939 = vld [vmem:[%s931 + $0x38] sm:$0xff]
          %v940 = vld [vmem:[#allocation3] sm:$0xff]
          %v941 = vld [vmem:[#allocation3 + $0x8] sm:$0xff]
          %v942 = vpack.c.bf16 %v941, %v940
          %v975 = vunpack.c.l.b16 %v870
          %v976 = vunpack.c.h.b16 %v870
          %v977 = vunpack.c.l.b16 %v871
          %v978 = vunpack.c.h.b16 %v871
          %v979 = vunpack.c.l.b16 %v872
          %v980 = vunpack.c.h.b16 %v872
          %v981 = vunpack.c.l.b16 %v873
          %v982 = vunpack.c.h.b16 %v873
          %v983 = vunpack.c.l.b16 %v874
          %v984 = vunpack.c.h.b16 %v874
          %v985 = vunpack.c.l.b16 %v875
          %v986 = vunpack.c.h.b16 %v875
          %v987 = vunpack.c.l.b16 %v876
          %v988 = vunpack.c.h.b16 %v876
          %v989 = vunpack.c.l.b16 %v877
          %v990 = vunpack.c.h.b16 %v877
          %v991 = vunpack.c.l.b16 %v878
          %v992 = vunpack.c.h.b16 %v878
          %v993 = vunpack.c.l.b16 %v879
          %v994 = vunpack.c.h.b16 %v879
          %v995 = vunpack.c.l.b16 %v880
          %v996 = vunpack.c.h.b16 %v880
          %v997 = vunpack.c.l.b16 %v881
          %v998 = vunpack.c.h.b16 %v881
          %v999 = vunpack.c.l.b16 %v882
          %v1000 = vunpack.c.h.b16 %v882
          %v1001 = vunpack.c.l.b16 %v883
          %v1002 = vunpack.c.h.b16 %v883
          %v1003 = vunpack.c.l.b16 %v884
          %v1004 = vunpack.c.h.b16 %v884
          %v1005 = vunpack.c.l.b16 %v885
          %v1006 = vunpack.c.h.b16 %v885
          %v1007 = vunpack.c.l.b16 %v886
          %v1008 = vunpack.c.h.b16 %v886
          %v1009 = vunpack.c.l.b16 %v887
          %v1010 = vunpack.c.h.b16 %v887
          %v1011 = vunpack.c.l.b16 %v888
          %v1012 = vunpack.c.h.b16 %v888
          %v1013 = vunpack.c.l.b16 %v889
          %v1014 = vunpack.c.h.b16 %v889
          %v1015 = vunpack.c.l.b16 %v890
          %v1016 = vunpack.c.h.b16 %v890
          %v1017 = vunpack.c.l.b16 %v891
          %v1018 = vunpack.c.h.b16 %v891
          %v1019 = vunpack.c.l.b16 %v892
          %v1020 = vunpack.c.h.b16 %v892
          %v1021 = vunpack.c.l.b16 %v893
          %v1022 = vunpack.c.h.b16 %v893
          %v1023 = vunpack.c.l.b16 %v894
          %v1024 = vunpack.c.h.b16 %v894
          %v1025 = vunpack.c.l.b16 %v895
          %v1026 = vunpack.c.h.b16 %v895
          %v1027 = vunpack.c.l.b16 %v896
          %v1028 = vunpack.c.h.b16 %v896
          %v1029 = vunpack.c.l.b16 %v897
          %v1030 = vunpack.c.h.b16 %v897
          %v1031 = vunpack.c.l.b16 %v898
          %v1032 = vunpack.c.h.b16 %v898
          %v1033 = vunpack.c.l.b16 %v899
          %v1034 = vunpack.c.h.b16 %v899
          %v1035 = vunpack.c.l.b16 %v900
          %v1036 = vunpack.c.h.b16 %v900
          %v1037 = vunpack.c.l.b16 %v901
          %v1038 = vunpack.c.h.b16 %v901
          %v1039 = vpack.c.b16 %v979, %v975
          %v1040 = vpack.c.b16 %v980, %v976
          %v1041 = vpack.c.b16 %v981, %v977
          %v1042 = vpack.c.b16 %v982, %v978
          %v1043 = vpack.c.b16 %v987, %v983
          %v1044 = vpack.c.b16 %v988, %v984
          %v1045 = vpack.c.b16 %v989, %v985
          %v1046 = vpack.c.b16 %v990, %v986
          %v1047 = vpack.c.b16 %v995, %v991
          %v1048 = vpack.c.b16 %v996, %v992
          %v1049 = vpack.c.b16 %v997, %v993
          %v1050 = vpack.c.b16 %v998, %v994
          %v1051 = vpack.c.b16 %v1003, %v999
          %v1052 = vpack.c.b16 %v1004, %v1000
          %v1053 = vpack.c.b16 %v1005, %v1001
          %v1054 = vpack.c.b16 %v1006, %v1002
          %v1055 = vpack.c.b16 %v1011, %v1007
          %v1056 = vpack.c.b16 %v1012, %v1008
          %v1057 = vpack.c.b16 %v1013, %v1009
          %v1058 = vpack.c.b16 %v1014, %v1010
          %v1059 = vpack.c.b16 %v1019, %v1015
          %v1060 = vpack.c.b16 %v1020, %v1016
          %v1061 = vpack.c.b16 %v1021, %v1017
          %v1062 = vpack.c.b16 %v1022, %v1018
          %v1063 = vpack.c.b16 %v1027, %v1023
          %v1064 = vpack.c.b16 %v1028, %v1024
          %v1065 = vpack.c.b16 %v1029, %v1025
          %v1066 = vpack.c.b16 %v1030, %v1026
          %v1067 = vpack.c.b16 %v1035, %v1031
          %v1068 = vpack.c.b16 %v1036, %v1032
          %v1069 = vpack.c.b16 %v1037, %v1033
          %v1070 = vpack.c.b16 %v1038, %v1034
          %1103 = vmatpush.bf16.msra.mxu0 %v1067
          %1104 = vmatpush.bf16.msra.mxu0 %v1063
          %1105 = vmatpush.bf16.msra.mxu0 %v1059
          %1106 = vmatpush.bf16.msra.mxu0 %v1055
          %1107 = vmatpush.bf16.msra.mxu0 %v1051
          %1108 = vmatpush.bf16.msra.mxu0 %v1047
          %1109 = vmatpush.bf16.msra.mxu0 %v1043
          %1110 = vmatpush.bf16.msra.mxu0 %v1039
          %1111 = vmatmul.bf16.gmra.mxu0 %v942
          %v1112 = vpop.f32.mrf.mxu0
          %v1113 = vadd.f32 0.0, %v1112
          %v1114 = vpop.f32.mrf.mxu0
          %v1115 = vadd.f32 0.0, %v1114
          %1116 = vdwg.mxu0
          %1117 = vmatpush.bf16.msra.mxu0 %v1068
          %1118 = vmatpush.bf16.msra.mxu0 %v1064
          %1119 = vmatpush.bf16.msra.mxu0 %v1060
          %1120 = vmatpush.bf16.msra.mxu0 %v1056
          %1121 = vmatpush.bf16.msra.mxu0 %v1052
          %1122 = vmatpush.bf16.msra.mxu0 %v1048
          %1123 = vmatpush.bf16.msra.mxu0 %v1044
          %1124 = vmatpush.bf16.msra.mxu0 %v1040
          %1125 = vmatmul.bf16.gmra.mxu0 %v942
          %v1126 = vpop.f32.mrf.mxu0
          %v1127 = vadd.f32 0.0, %v1126
          %v1128 = vpop.f32.mrf.mxu0
          %v1129 = vadd.f32 0.0, %v1128
          %1130 = vdwg.mxu0
          %1131 = vmatpush.bf16.msra.mxu0 %v1069
          %1132 = vmatpush.bf16.msra.mxu0 %v1065
          %1133 = vmatpush.bf16.msra.mxu0 %v1061
          %1134 = vmatpush.bf16.msra.mxu0 %v1057
          %1135 = vmatpush.bf16.msra.mxu0 %v1053
          %1136 = vmatpush.bf16.msra.mxu0 %v1049
          %1137 = vmatpush.bf16.msra.mxu0 %v1045
          %1138 = vmatpush.bf16.msra.mxu0 %v1041
          %1139 = vmatmul.bf16.gmra.mxu0 %v942
          %v1140 = vpop.f32.mrf.mxu0
          %v1141 = vadd.f32 0.0, %v1140
          %v1142 = vpop.f32.mrf.mxu0
          %v1143 = vadd.f32 0.0, %v1142
          %1144 = vdwg.mxu0
          %1145 = vmatpush.bf16.msra.mxu0 %v1070
          %1146 = vmatpush.bf16.msra.mxu0 %v1066
          %1147 = vmatpush.bf16.msra.mxu0 %v1062
          %1148 = vmatpush.bf16.msra.mxu0 %v1058
          %1149 = vmatpush.bf16.msra.mxu0 %v1054
          %1150 = vmatpush.bf16.msra.mxu0 %v1050
          %1151 = vmatpush.bf16.msra.mxu0 %v1046
          %1152 = vmatpush.bf16.msra.mxu0 %v1042
          %1153 = vmatmul.bf16.gmra.mxu0 %v942
          %v1154 = vpop.f32.mrf.mxu0
          %v1155 = vadd.f32 0.0, %v1154
          %v1156 = vpop.f32.mrf.mxu0
          %v1157 = vadd.f32 0.0, %v1156
          %1158 = vdwg.mxu0
          %v1159 = vadd.f32 %v932, %v1113
          %v1160 = vadd.f32 %v933, %v1127
          %v1161 = vadd.f32 %v934, %v1141
          %v1162 = vadd.f32 %v935, %v1155
          %v1163 = vadd.f32 %v936, %v1115
          %v1164 = vadd.f32 %v937, %v1129
          %v1165 = vadd.f32 %v938, %v1143
          %v1166 = vadd.f32 %v939, %v1157
          %v1167 = vxor.u32 %v1159, 2147483648
          %v1168 = vxor.u32 %v1163, 2147483648
          %v1169 = vmul.f32 %v1167, 1.442695
          %v1170 = vpow.pop %v1169
          %v1171 = vmul.f32 %v1168, 1.442695
          %v1172 = vpow.pop %v1171
          %v1173 = vadd.f32 %v1170, 1.0
          %v1174 = vadd.f32 %v1172, 1.0
          %v1175 = vrcp.pop %v1173
          %v1176 = vmul.f32 %v1173, %v1175
          %v1177 = vsub.f32 1.0, %v1176
          %v1178 = vmul.f32 %v1175, %v1177
          %v1179 = vadd.f32 %v1175, %v1178
          %vm1180 = vweird.f32 %v1173
          %vm1181 = vweird.f32 %v1175
          %vm1182 = vmor %vm1180, %vm1181
          %v1183 = vsel %vm1182, %v1175, %v1179
          %v1184 = vand.u32 2147483647, %v1173
          %vm1185 = vcmp.eq.f32.partialorder %v1184, 8.507059e+37
          %v1186 = vand.u32 %v1173, 2147483648
          %v1187 = vor.u32 1.1754944e-38, %v1186
          %v1188 = vsel %vm1185, %v1187, %v1183
          %v1189 = vmul.f32 1.0, %v1188
          %v1190 = vrcp.pop %v1174
          %v1191 = vmul.f32 %v1174, %v1190
          %v1192 = vsub.f32 1.0, %v1191
          %v1193 = vmul.f32 %v1190, %v1192
          %v1194 = vadd.f32 %v1190, %v1193
          %vm1195 = vweird.f32 %v1174
          %vm1196 = vweird.f32 %v1190
          %vm1197 = vmor %vm1195, %vm1196
          %v1198 = vsel %vm1197, %v1190, %v1194
          %v1199 = vand.u32 2147483647, %v1174
          %vm1200 = vcmp.eq.f32.partialorder %v1199, 8.507059e+37
          %v1201 = vand.u32 %v1174, 2147483648
          %v1202 = vor.u32 1.1754944e-38, %v1201
          %v1203 = vsel %vm1200, %v1202, %v1198
          %v1204 = vmul.f32 1.0, %v1203
          %v1205 = vxor.u32 %v1160, 2147483648
          %v1206 = vxor.u32 %v1164, 2147483648
          %v1207 = vmul.f32 %v1205, 1.442695
          %v1208 = vpow.pop %v1207
          %v1209 = vmul.f32 %v1206, 1.442695
          %v1210 = vpow.pop %v1209
          %v1211 = vadd.f32 %v1208, 1.0
          %v1212 = vadd.f32 %v1210, 1.0
          %v1213 = vrcp.pop %v1211
          %v1214 = vmul.f32 %v1211, %v1213
          %v1215 = vsub.f32 1.0, %v1214
          %v1216 = vmul.f32 %v1213, %v1215
          %v1217 = vadd.f32 %v1213, %v1216
          %vm1218 = vweird.f32 %v1211
          %vm1219 = vweird.f32 %v1213
          %vm1220 = vmor %vm1218, %vm1219
          %v1221 = vsel %vm1220, %v1213, %v1217
          %v1222 = vand.u32 2147483647, %v1211
          %vm1223 = vcmp.eq.f32.partialorder %v1222, 8.507059e+37
          %v1224 = vand.u32 %v1211, 2147483648
          %v1225 = vor.u32 1.1754944e-38, %v1224
          %v1226 = vsel %vm1223, %v1225, %v1221
          %v1227 = vmul.f32 1.0, %v1226
          %v1228 = vrcp.pop %v1212
          %v1229 = vmul.f32 %v1212, %v1228
          %v1230 = vsub.f32 1.0, %v1229
          %v1231 = vmul.f32 %v1228, %v1230
          %v1232 = vadd.f32 %v1228, %v1231
          %vm1233 = vweird.f32 %v1212
          %vm1234 = vweird.f32 %v1228
          %vm1235 = vmor %vm1233, %vm1234
          %v1236 = vsel %vm1235, %v1228, %v1232
          %v1237 = vand.u32 2147483647, %v1212
          %vm1238 = vcmp.eq.f32.partialorder %v1237, 8.507059e+37
          %v1239 = vand.u32 %v1212, 2147483648
          %v1240 = vor.u32 1.1754944e-38, %v1239
          %v1241 = vsel %vm1238, %v1240, %v1236
          %v1242 = vmul.f32 1.0, %v1241
          %v1243 = vtanh.pop %v1161
          %v1244 = vtanh.pop %v1165
          %v1245 = vxor.u32 %v1162, 2147483648
          %v1246 = vxor.u32 %v1166, 2147483648
          %v1247 = vmul.f32 %v1245, 1.442695
          %v1248 = vpow.pop %v1247
          %v1249 = vmul.f32 %v1246, 1.442695
          %v1250 = vpow.pop %v1249
          %v1251 = vadd.f32 %v1248, 1.0
          %v1252 = vadd.f32 %v1250, 1.0
          %v1253 = vrcp.pop %v1251
          %v1254 = vmul.f32 %v1251, %v1253
          %v1255 = vsub.f32 1.0, %v1254
          %v1256 = vmul.f32 %v1253, %v1255
          %v1257 = vadd.f32 %v1253, %v1256
          %vm1258 = vweird.f32 %v1251
          %vm1259 = vweird.f32 %v1253
          %vm1260 = vmor %vm1258, %vm1259
          %v1261 = vsel %vm1260, %v1253, %v1257
          %v1262 = vand.u32 2147483647, %v1251
          %vm1263 = vcmp.eq.f32.partialorder %v1262, 8.507059e+37
          %v1264 = vand.u32 %v1251, 2147483648
          %v1265 = vor.u32 1.1754944e-38, %v1264
          %v1266 = vsel %vm1263, %v1265, %v1261
          %v1267 = vmul.f32 1.0, %v1266
          %v1268 = vrcp.pop %v1252
          %v1269 = vmul.f32 %v1252, %v1268
          %v1270 = vsub.f32 1.0, %v1269
          %v1271 = vmul.f32 %v1268, %v1270
          %v1272 = vadd.f32 %v1268, %v1271
          %vm1273 = vweird.f32 %v1252
          %vm1274 = vweird.f32 %v1268
          %vm1275 = vmor %vm1273, %vm1274
          %v1276 = vsel %vm1275, %v1268, %v1272
          %v1277 = vand.u32 2147483647, %v1252
          %vm1278 = vcmp.eq.f32.partialorder %v1277, 8.507059e+37
          %v1279 = vand.u32 %v1252, 2147483648
          %v1280 = vor.u32 1.1754944e-38, %v1279
          %v1281 = vsel %vm1278, %v1280, %v1276
          %v1282 = vmul.f32 1.0, %v1281
          %v1283 = vld [vmem:[#allocation4] sm:$0xff]
          %v1284 = vld [vmem:[#allocation4 + $0x8] sm:$0xff]
          %v1285 = vmul.f32 %v1227, %v1283
          %v1286 = vmul.f32 %v1242, %v1284
          %v1287 = vmul.f32 %v1189, %v1243
          %v1288 = vmul.f32 %v1204, %v1244
          %v1289 = vadd.f32 %v1285, %v1287
          %v1290 = vadd.f32 %v1286, %v1288
          %v1291 = vtanh.pop %v1289
          %v1292 = vtanh.pop %v1290
          %v1293 = vmul.f32 %v1267, %v1291
          %v1294 = vmul.f32 %v1282, %v1292
          %v1295 = vstv %s925
          %vm1296 = vcmp.lt.s32.totalorder %v1295, %v911
          %vm1297 = vcmp.lt.s32.totalorder %v1295, %v914
          %v1298 = vsel %vm1296, %v1293, 0.0
          %v1299 = vsel %vm1297, %v1294, 0.0
          %v1300 = vpack.c.bf16 %v1298, %v1298
          %v1301 = vpack.c.bf16 %v1299, %v1299
          %s1302 = smul.u32 %s924, 2
          %s1303 = smul.addr %s1302, 4
          %s1304 = scalar_lea.vmem %s301, %s1303 [#allocation5]
          %1305 = vst [vmem:[%s1304] sm:$0xf] %v1300
          %1306 = vst [vmem:[%s1304 + $0x4] sm:$0xf] %v1301
          %v1307 = vld [vmem:[#allocation3] sm:$0xff]
          %v1308 = vld [vmem:[#allocation3 + $0x8] sm:$0xff]
          %v1309 = vsel %vm1296, %v1293, %v1307
          %v1310 = vsel %vm1297, %v1294, %v1308
          %1311 = vst [vmem:[#allocation3] sm:$0xff] %v1309
          %1312 = vst [vmem:[#allocation3 + $0x8] sm:$0xff] %v1310
          %v1313 = vld [vmem:[#allocation4] sm:$0xff]
          %v1314 = vld [vmem:[#allocation4 + $0x8] sm:$0xff]
          %v1315 = vsel %vm1296, %v1289, %v1313
          %v1316 = vsel %vm1297, %v1290, %v1314
          %1317 = vst [vmem:[#allocation4] sm:$0xff] %v1315
          %1318 = vst [vmem:[#allocation4 + $0x8] sm:$0xff] %v1316
        $region49: #{lstm_model_forward.6} parent=39 // loop_footer
          %s920 = sadd.s32 1, %s916
        $region50: #{lstm_model_forward.6} parent=39 // loop_footer_branch
          %915 = sbr.rel target = $region46
        $region51: #{lstm_model_forward.6} parent=39 // loop_exit
          _
        %s1319 = sand.u32 %s179, 1
        %s1320 = sand.u32 %s179, 1
        %s1321 = smul.addr %s1320, 64
        %s1322 = scalar_lea.vmem [#allocation5], %s1321
        // Predicated region
        $region52: #{lstm_model_forward.6} parent=39 // pred_check
          %p1323 = pneg %p189
        $region53: #{lstm_model_forward.6} parent=39 // pred_check_branch
          %1325 = sbr.rel (%p1323) target = $region55
        $region54: #{lstm_model_forward.6} parent=39 // pred_region
          %s1326 = smul.u32 %s21, 2
          %s1327 = ssub.s32 0, %s1326
          %s1328 = smul.u32 %s20, %s1327
          %s1329 = sadd.s32 %s21, %s1328
          %s1330 = smul.u32 8, %s1329
          %s1331 = smul.addr %s1330, 4
          %s1332 = sadd.s32 %s20, %s1331
          %s1333 = smul.addr %s1332, 4
          %s1334 = scalar_lea.vmem %s5, %s1333
          // Predicated region
          $region56: #{lstm_model_forward.6} parent=54 // pred_check
            _
          $region57: #{lstm_model_forward.6} parent=54 // pred_check_branch
            %1336 = sbr.rel (0) target = $region59
          $region58: #{lstm_model_forward.6} parent=54 // pred_region
            // Predicated region
            $region60: #{lstm_model_forward.6} parent=58 // pred_check
              _
            $region61: #{lstm_model_forward.6} parent=58 // pred_check_branch
              %1338 = sbr.rel target = $region63
            $region62: #{lstm_model_forward.6} parent=58 // pred_region
              // Predicated region
              $region75: #{lstm_model_forward.6} parent=62 // pred_check
                _
              $region76: #{lstm_model_forward.6} parent=62 // pred_check_branch
                %1384 = sbr.rel (0) target = $region78
              $region77: #{lstm_model_forward.6} parent=62 // pred_region
                loop: start=0, step=1, limit=1
                $region79: #{lstm_model_forward.6} parent=77 // loop_pre_header
                  _
                $region80: #{lstm_model_forward.6} parent=77 // loop_header
                  %s1386 = sphi 0, %s1390
                  %p1387 = scmp.ge.s32.totalorder %s1386, 1
                  %s1391 = sphi %s1322, %s1322
                  %s1392 = sphi %s1334, %s1334
                $region81: #{lstm_model_forward.6} parent=77 // loop_header_branch
                  %1389 = sbr.rel (%p1387) target = $region85
                $region82: #{lstm_model_forward.6} parent=77 // loop_body
                  _
                $region83: #{lstm_model_forward.6} parent=77 // loop_footer
                  %s1390 = sadd.s32 1, %s1386
                $region84: #{lstm_model_forward.6} parent=77 // loop_footer_branch
                  %1385 = sbr.rel target = $region80
                $region85: #{lstm_model_forward.6} parent=77 // loop_exit
                  _
                %s1394 = ssub.s32 16, 1
                loop: start=0, step=1, limit=1
                $region86: #{lstm_model_forward.6} parent=77 // loop_pre_header
                  _
                $region87: #{lstm_model_forward.6} parent=77 // loop_header
                  %s1396 = sphi 0, %s1400
                  %p1397 = scmp.ge.s32.totalorder %s1396, 1
                  %s1401 = sphi %s1322, %s1322
                  %s1402 = sphi %s1334, %s1334
                $region88: #{lstm_model_forward.6} parent=77 // loop_header_branch
                  %1399 = sbr.rel (%p1397) target = $region92
                $region89: #{lstm_model_forward.6} parent=77 // loop_body
                  %v1403 = vld [vmem:[%s1401] sm:%s1394]
                  %1404 = vst [vmem:[%s1402] sm:%s1394] %v1403
                  %v1405 = vld [vmem:[%s1401 + $0x4] sm:%s1394]
                  %1406 = vst [vmem:[%s1402 + $0x8] sm:%s1394] %v1405
                  %v1407 = vld [vmem:[%s1401 + $0x8] sm:%s1394]
                  %1408 = vst [vmem:[%s1402 + $0x10] sm:%s1394] %v1407
                  %v1409 = vld [vmem:[%s1401 + $0xc] sm:%s1394]
                  %1410 = vst [vmem:[%s1402 + $0x18] sm:%s1394] %v1409
                  %v1411 = vld [vmem:[%s1401 + $0x10] sm:%s1394]
                  %1412 = vst [vmem:[%s1402 + $0x20] sm:%s1394] %v1411
                  %v1413 = vld [vmem:[%s1401 + $0x14] sm:%s1394]
                  %1414 = vst [vmem:[%s1402 + $0x28] sm:%s1394] %v1413
                  %v1415 = vld [vmem:[%s1401 + $0x18] sm:%s1394]
                  %1416 = vst [vmem:[%s1402 + $0x30] sm:%s1394] %v1415
                  %v1417 = vld [vmem:[%s1401 + $0x1c] sm:%s1394]
                  %1418 = vst [vmem:[%s1402 + $0x38] sm:%s1394] %v1417
                  %v1419 = vld [vmem:[%s1401 + $0x20] sm:%s1394]
                  %1420 = vst [vmem:[%s1402 + $0x40] sm:%s1394] %v1419
                  %v1421 = vld [vmem:[%s1401 + $0x24] sm:%s1394]
                  %1422 = vst [vmem:[%s1402 + $0x48] sm:%s1394] %v1421
                  %v1423 = vld [vmem:[%s1401 + $0x28] sm:%s1394]
                  %1424 = vst [vmem:[%s1402 + $0x50] sm:%s1394] %v1423
                  %v1425 = vld [vmem:[%s1401 + $0x2c] sm:%s1394]
                  %1426 = vst [vmem:[%s1402 + $0x58] sm:%s1394] %v1425
                  %v1427 = vld [vmem:[%s1401 + $0x30] sm:%s1394]
                  %1428 = vst [vmem:[%s1402 + $0x60] sm:%s1394] %v1427
                  %v1429 = vld [vmem:[%s1401 + $0x34] sm:%s1394]
                  %1430 = vst [vmem:[%s1402 + $0x68] sm:%s1394] %v1429
                  %v1431 = vld [vmem:[%s1401 + $0x38] sm:%s1394]
                  %1432 = vst [vmem:[%s1402 + $0x70] sm:%s1394] %v1431
                  %v1433 = vld [vmem:[%s1401 + $0x3c] sm:%s1394]
                  %1434 = vst [vmem:[%s1402 + $0x78] sm:%s1394] %v1433
                $region90: #{lstm_model_forward.6} parent=77 // loop_footer
                  %s1400 = sadd.s32 1, %s1396
                $region91: #{lstm_model_forward.6} parent=77 // loop_footer_branch
                  %1395 = sbr.rel target = $region87
                $region92: #{lstm_model_forward.6} parent=77 // loop_exit
                  _
              $region78: #{lstm_model_forward.6} parent=62 // pred_fallthru
                _
            $region63: #{lstm_model_forward.6} parent=58 // pred_fallthru
              _
            // Predicated region
            $region64: #{lstm_model_forward.6} parent=58 // pred_check
              _
            $region65: #{lstm_model_forward.6} parent=58 // pred_check_branch
              %1340 = sbr.rel (0) target = $region67
            $region66: #{lstm_model_forward.6} parent=58 // pred_region
              %s1342 = ssub.s32 16, 1
              loop: start=0, step=1, limit=1
              $region68: #{lstm_model_forward.6} parent=66 // loop_pre_header
                _
              $region69: #{lstm_model_forward.6} parent=66 // loop_header
                %s1344 = sphi 0, %s1348
                %p1345 = scmp.ge.s32.totalorder %s1344, 1
                %s1349 = sphi %s1322, %s1322
                %s1350 = sphi %s1334, %s1334
              $region70: #{lstm_model_forward.6} parent=66 // loop_header_branch
                %1347 = sbr.rel (%p1345) target = $region74
              $region71: #{lstm_model_forward.6} parent=66 // loop_body
                %v1351 = vld [vmem:[%s1349] sm:%s1342]
                %1352 = vst [vmem:[%s1350] sm:%s1342] %v1351
                %v1353 = vld [vmem:[%s1349 + $0x4] sm:%s1342]
                %1354 = vst [vmem:[%s1350 + $0x8] sm:%s1342] %v1353
                %v1355 = vld [vmem:[%s1349 + $0x8] sm:%s1342]
                %1356 = vst [vmem:[%s1350 + $0x10] sm:%s1342] %v1355
                %v1357 = vld [vmem:[%s1349 + $0xc] sm:%s1342]
                %1358 = vst [vmem:[%s1350 + $0x18] sm:%s1342] %v1357
                %v1359 = vld [vmem:[%s1349 + $0x10] sm:%s1342]
                %1360 = vst [vmem:[%s1350 + $0x20] sm:%s1342] %v1359
                %v1361 = vld [vmem:[%s1349 + $0x14] sm:%s1342]
                %1362 = vst [vmem:[%s1350 + $0x28] sm:%s1342] %v1361
                %v1363 = vld [vmem:[%s1349 + $0x18] sm:%s1342]
                %1364 = vst [vmem:[%s1350 + $0x30] sm:%s1342] %v1363
                %v1365 = vld [vmem:[%s1349 + $0x1c] sm:%s1342]
                %1366 = vst [vmem:[%s1350 + $0x38] sm:%s1342] %v1365
                %v1367 = vld [vmem:[%s1349 + $0x20] sm:%s1342]
                %1368 = vst [vmem:[%s1350 + $0x40] sm:%s1342] %v1367
                %v1369 = vld [vmem:[%s1349 + $0x24] sm:%s1342]
                %1370 = vst [vmem:[%s1350 + $0x48] sm:%s1342] %v1369
                %v1371 = vld [vmem:[%s1349 + $0x28] sm:%s1342]
                %1372 = vst [vmem:[%s1350 + $0x50] sm:%s1342] %v1371
                %v1373 = vld [vmem:[%s1349 + $0x2c] sm:%s1342]
                %1374 = vst [vmem:[%s1350 + $0x58] sm:%s1342] %v1373
                %v1375 = vld [vmem:[%s1349 + $0x30] sm:%s1342]
                %1376 = vst [vmem:[%s1350 + $0x60] sm:%s1342] %v1375
                %v1377 = vld [vmem:[%s1349 + $0x34] sm:%s1342]
                %1378 = vst [vmem:[%s1350 + $0x68] sm:%s1342] %v1377
                %v1379 = vld [vmem:[%s1349 + $0x38] sm:%s1342]
                %1380 = vst [vmem:[%s1350 + $0x70] sm:%s1342] %v1379
                %v1381 = vld [vmem:[%s1349 + $0x3c] sm:%s1342]
                %1382 = vst [vmem:[%s1350 + $0x78] sm:%s1342] %v1381
              $region72: #{lstm_model_forward.6} parent=66 // loop_footer
                %s1348 = sadd.s32 1, %s1344
              $region73: #{lstm_model_forward.6} parent=66 // loop_footer_branch
                %1343 = sbr.rel target = $region69
              $region74: #{lstm_model_forward.6} parent=66 // loop_exit
                _
            $region67: #{lstm_model_forward.6} parent=58 // pred_fallthru
              _
          $region59: #{lstm_model_forward.6} parent=54 // pred_fallthru
            _
          %1435 = vnop
        $region55: #{lstm_model_forward.6} parent=39 // pred_fallthru
          _
      $region40: #{lstm_model_forward.6} parent=5 // pred_fallthru
        _
      %p1436 = scmp.le.s32.totalorder 2, %s11
      // Predicated region
      $region93: #{lstm_model_forward.6} parent=5 // pred_check
        %p1437 = pneg %p1436
      $region94: #{lstm_model_forward.6} parent=5 // pred_check_branch
        %1439 = sbr.rel (%p1437) target = $region96
      $region95: #{lstm_model_forward.6} parent=5 // pred_region
        %s1440 = ssub.s32 %s11, 2
        // Predicated region
        $region97: #{lstm_model_forward.6} parent=95 // pred_check
          %p1441 = pneg %p195
        $region98: #{lstm_model_forward.6} parent=95 // pred_check_branch
          %1443 = sbr.rel (%p1441) target = $region100
        $region99: #{lstm_model_forward.6} parent=95 // pred_region
          %s1444 = sand.u32 %s180, 1
          %s1445 = sand.u32 %s180, 1
          %s1446 = smul.addr %s1445, 64
          %s1447 = scalar_lea.vmem [#allocation5], %s1446
        $region100: #{lstm_model_forward.6} parent=95 // pred_fallthru
          _
      $region96: #{lstm_model_forward.6} parent=5 // pred_fallthru
        _
    $region6: #{lstm_model_forward.6} parent=1 // loop_footer
      %s15 = sadd.s32 1, %s11
    $region7: #{lstm_model_forward.6} parent=1 // loop_footer_branch
      %10 = sbr.rel target = $region3
    $region8: #{lstm_model_forward.6} parent=1 // loop_exit
      _

// kernel: lstm_model_forward.7
$region0: #{lstm_model_forward.7}
  #allocation0 [shape = 'u32[]', space=smem, size = 0x4, offset = 0x4, fixed_abs, tag = 'smem constant byte address 0x4 - core index']
  #allocation1 [shape = 'u32[72,128]{1,0:T(1,128)}', space=vmem, size = 0x9000, scoped, tag = 'internal scratch']
  #allocation2 [shape = 'f32[128,512]{1,0:T(8,128)}', space=vmem, size = 0x40000, scoped, tag = 'scratch operand']
  #allocation3 [shape = 'f32[16,128]{1,0:T(8,128)}', space=vmem, size = 0x2000, scoped, tag = 'scratch operand']
  #allocation4 [shape = 'f32[16,128]{1,0:T(8,128)}', space=vmem, size = 0x2000, scoped, tag = 'scratch operand']
  %s0 = inlined_call_operand.vmem [shape: bf16[8,16,256], index: 0, kind: input, shape index: {}]
  %s1 = inlined_call_operand.vmem [shape: bf16[2,256,512], index: 1, kind: input, shape index: {}]
  %s2 = inlined_call_operand.vmem [shape: bf16[2,128,512], index: 2, kind: input, shape index: {}]
  %s3 = inlined_call_operand.vmem [shape: f32[2,1,512], index: 3, kind: input, shape index: {}]
  %s4 = inlined_call_operand.vmem [shape: s32[16,1], index: 4, kind: input, shape index: {}]
  %s5 = inlined_call_operand.vmem [shape: bf16[8,16,256], index: 5, kind: output, shape index: {}]
  %s6 = sld [smem:[#allocation0]]
  $region101: #{lstm_model_forward.7} parent=0
    _
  %s8 = ssub.s32 1, %s6
  %s9 = scalar_select 0, %s8, %s6
  $region1: #{lstm_model_forward.7} parent=0
    #allocation5 [shape = 'u8[65536]{0}', space=vmem, size = 0x10000, scoped, tag = 'output window, operand 0']
    loop: start=0, step=1, limit=4
    $region2: #{lstm_model_forward.7} parent=1 // loop_pre_header
      _
    $region3: #{lstm_model_forward.7} parent=1 // loop_header
      %s11 = sphi 0, %s15
      %p12 = scmp.ge.s32.totalorder %s11, 4
      %s18 = sphi 0, %s30
      %s19 = sphi 0, %s26
      %s20 = sphi 0, %s18
      %s21 = sphi 0, %s19
      %s22 = sphi 0, %s20
      %s23 = sphi 0, %s21
      %s41 = sphi 0, %s43
      %s44 = sphi 0, %s41
      %s45 = sphi 0, %s44
      %s61 = sphi 0, %s45
      %s67 = sphi 0, %s69
      %s70 = sphi 0, %s67
      %s71 = sphi 0, %s70
      %s87 = sphi 0, %s71
      %s93 = sphi 0, %s95
      %s96 = sphi 0, %s93
      %s97 = sphi 0, %s96
      %s113 = sphi 0, %s97
      %s119 = sphi 0, %s121
      %s122 = sphi 0, %s119
      %s123 = sphi 0, %s122
      %s139 = sphi 0, %s123
      %s143 = sphi 0, %s143
      %s145 = sphi 0, %s143
      %s146 = sphi 0, %s145
      %s160 = sphi 0, %s146
      %s176 = sphi 0, %s178
      %s179 = sphi 0, %s176
      %s180 = sphi 0, %s179
      %s196 = sphi 0, %s180
    $region4: #{lstm_model_forward.7} parent=1 // loop_header_branch
      %14 = sbr.rel (%p12) target = $region8
    $region5: #{lstm_model_forward.7} parent=1 // loop_body
      %s16 = ssub.s32 %s11, 1
      %s17 = ssub.s32 %s11, 2
      %s24 = sadd.s32 1, %s19
      %p25 = scmp.ge.s32.totalorder %s24, 1
      %s26 = scalar_select %p25, 0, %s24
      %s27 = sadd.s32 1, %s18
      %s28 = scalar_select %p25, %s27, %s18
      %p29 = scmp.ge.s32.totalorder %s28, 2
      %s30 = scalar_select %p29, 0, %s28
      %s31 = smul.u32 %s19, 2
      %s32 = ssub.s32 0, %s31
      %s33 = smul.u32 %s18, %s32
      %s34 = sadd.s32 %s19, %s33
      %s35 = smul.u32 %s26, 2
      %s36 = ssub.s32 0, %s35
      %s37 = smul.u32 %s30, %s36
      %s38 = sadd.s32 %s26, %s37
      %s39 = ssub.s32 %s34, %s38
      %p40 = scmp.eq.s32.totalorder %s39, 0
      %s42 = sadd.s32 %s41, 1
      %s43 = scalar_select %p40, %s41, %s42
      %p46 = pneg %p40
      %p47 = scmp.eq.s32.totalorder %s11, 1
      %p48 = por %p46, %p47
      %p49 = scmp.ne.s32.totalorder %s41, %s44
      %p50 = scmp.eq.s32.totalorder %s11, 0
      %p51 = por %p49, %p50
      %p52 = scmp.ne.s32.totalorder %s41, %s44
      %p53 = scmp.eq.s32.totalorder %s16, 1
      %p54 = por %p52, %p53
      %p55 = scmp.ne.s32.totalorder %s44, %s45
      %p56 = scmp.eq.s32.totalorder %s16, 0
      %p57 = por %p55, %p56
      %p58 = scmp.ne.s32.totalorder %s44, %s45
      %p59 = scmp.eq.s32.totalorder %s17, 1
      %p60 = por %p58, %p59
      %p62 = scmp.ne.s32.totalorder %s45, %s61
      %p63 = scmp.eq.s32.totalorder %s17, 0
      %p64 = por %p62, %p63
      %s65 = ssub.s32 %s18, %s30
      %p66 = scmp.eq.s32.totalorder %s65, 0
      %s68 = sadd.s32 %s67, 1
      %s69 = scalar_select %p66, %s67, %s68
      %p72 = pneg %p66
      %p73 = scmp.eq.s32.totalorder %s11, 1
      %p74 = por %p72, %p73
      %p75 = scmp.ne.s32.totalorder %s67, %s70
      %p76 = scmp.eq.s32.totalorder %s11, 0
      %p77 = por %p75, %p76
      %p78 = scmp.ne.s32.totalorder %s67, %s70
      %p79 = scmp.eq.s32.totalorder %s16, 1
      %p80 = por %p78, %p79
      %p81 = scmp.ne.s32.totalorder %s70, %s71
      %p82 = scmp.eq.s32.totalorder %s16, 0
      %p83 = por %p81, %p82
      %p84 = scmp.ne.s32.totalorder %s70, %s71
      %p85 = scmp.eq.s32.totalorder %s17, 1
      %p86 = por %p84, %p85
      %p88 = scmp.ne.s32.totalorder %s71, %s87
      %p89 = scmp.eq.s32.totalorder %s17, 0
      %p90 = por %p88, %p89
      %s91 = ssub.s32 %s18, %s30
      %p92 = scmp.eq.s32.totalorder %s91, 0
      %s94 = sadd.s32 %s93, 1
      %s95 = scalar_select %p92, %s93, %s94
      %p98 = pneg %p92
      %p99 = scmp.eq.s32.totalorder %s11, 1
      %p100 = por %p98, %p99
      %p101 = scmp.ne.s32.totalorder %s93, %s96
      %p102 = scmp.eq.s32.totalorder %s11, 0
      %p103 = por %p101, %p102
      %p104 = scmp.ne.s32.totalorder %s93, %s96
      %p105 = scmp.eq.s32.totalorder %s16, 1
      %p106 = por %p104, %p105
      %p107 = scmp.ne.s32.totalorder %s96, %s97
      %p108 = scmp.eq.s32.totalorder %s16, 0
      %p109 = por %p107, %p108
      %p110 = scmp.ne.s32.totalorder %s96, %s97
      %p111 = scmp.eq.s32.totalorder %s17, 1
      %p112 = por %p110, %p111
      %p114 = scmp.ne.s32.totalorder %s97, %s113
      %p115 = scmp.eq.s32.totalorder %s17, 0
      %p116 = por %p114, %p115
      %s117 = ssub.s32 %s18, %s30
      %p118 = scmp.eq.s32.totalorder %s117, 0
      %s120 = sadd.s32 %s119, 1
      %s121 = scalar_select %p118, %s119, %s120
      %p124 = pneg %p118
      %p125 = scmp.eq.s32.totalorder %s11, 1
      %p126 = por %p124, %p125
      %p127 = scmp.ne.s32.totalorder %s119, %s122
      %p128 = scmp.eq.s32.totalorder %s11, 0
      %p129 = por %p127, %p128
      %p130 = scmp.ne.s32.totalorder %s119, %s122
      %p131 = scmp.eq.s32.totalorder %s16, 1
      %p132 = por %p130, %p131
      %p133 = scmp.ne.s32.totalorder %s122, %s123
      %p134 = scmp.eq.s32.totalorder %s16, 0
      %p135 = por %p133, %p134
      %p136 = scmp.ne.s32.totalorder %s122, %s123
      %p137 = scmp.eq.s32.totalorder %s17, 1
      %p138 = por %p136, %p137
      %p140 = scmp.ne.s32.totalorder %s123, %s139
      %p141 = scmp.eq.s32.totalorder %s17, 0
      %p142 = por %p140, %p141
      %s144 = sadd.s32 %s143, 1
      %p147 = scmp.eq.s32.totalorder %s11, 1
      %p148 = scmp.ne.s32.totalorder %s143, %s145
      %p149 = scmp.eq.s32.totalorder %s11, 0
      %p150 = por %p148, %p149
      %p151 = scmp.ne.s32.totalorder %s143, %s145
      %p152 = scmp.eq.s32.totalorder %s16, 1
      %p153 = por %p151, %p152
      %p154 = scmp.ne.s32.totalorder %s145, %s146
      %p155 = scmp.eq.s32.totalorder %s16, 0
      %p156 = por %p154, %p155
      %p157 = scmp.ne.s32.totalorder %s145, %s146
      %p158 = scmp.eq.s32.totalorder %s17, 1
      %p159 = por %p157, %p158
      %p161 = scmp.ne.s32.totalorder %s146, %s160
      %p162 = scmp.eq.s32.totalorder %s17, 0
      %p163 = por %p161, %p162
      %s164 = smul.u32 %s19, 2
      %s165 = ssub.s32 0, %s164
      %s166 = smul.u32 %s18, %s165
      %s167 = sadd.s32 %s19, %s166
      %s168 = smul.u32 %s26, 2
      %s169 = ssub.s32 0, %s168
      %s170 = smul.u32 %s30, %s169
      %s171 = sadd.s32 %s26, %s170
      %s172 = ssub.s32 %s167, %s171
      %s173 = ssub.s32 %s18, %s30
      %s174 = sor.u32 %s172, %s173
      %p175 = scmp.eq.s32.totalorder %s174, 0
      %s177 = sadd.s32 %s176, 1
      %s178 = scalar_select %p175, %s176, %s177
      %p181 = pneg %p175
      %p182 = scmp.eq.s32.totalorder %s11, 1
      %p183 = por %p181, %p182
      %p184 = scmp.ne.s32.totalorder %s176, %s179
      %p185 = scmp.eq.s32.totalorder %s11, 0
      %p186 = por %p184, %p185
      %p187 = scmp.ne.s32.totalorder %s176, %s179
      %p188 = scmp.eq.s32.totalorder %s16, 1
      %p189 = por %p187, %p188
      %p190 = scmp.ne.s32.totalorder %s179, %s180
      %p191 = scmp.eq.s32.totalorder %s16, 0
      %p192 = por %p190, %p191
      %p193 = scmp.ne.s32.totalorder %s179, %s180
      %p194 = scmp.eq.s32.totalorder %s17, 1
      %p195 = por %p193, %p194
      %p197 = scmp.ne.s32.totalorder %s180, %s196
      %p198 = scmp.eq.s32.totalorder %s17, 0
      %p199 = por %p197, %p198
      %p200 = scmp.le.s32.totalorder 1, %s11
      %p201 = scmp.lt.s32.totalorder %s11, 3
      %p202 = pnand %p200, %p201
      %p203 = pneg %p202
      // Predicated region
      $region9: #{lstm_model_forward.7} parent=5 // pred_check
        _
      $region10: #{lstm_model_forward.7} parent=5 // pred_check_branch
        %205 = sbr.rel (%p202) target = $region12
      $region11: #{lstm_model_forward.7} parent=5 // pred_region
        %s206 = ssub.s32 %s11, 1
        // Predicated region
        $region13: #{lstm_model_forward.7} parent=11 // pred_check
          %p207 = pneg %p156
        $region14: #{lstm_model_forward.7} parent=11 // pred_check_branch
          %209 = sbr.rel (%p207) target = $region16
        $region15: #{lstm_model_forward.7} parent=11 // pred_region
          _
        $region16: #{lstm_model_forward.7} parent=11 // pred_fallthru
          _
      $region12: #{lstm_model_forward.7} parent=5 // pred_fallthru
        _
      %p210 = scmp.lt.s32.totalorder %s11, 2
      // Predicated region
      $region17: #{lstm_model_forward.7} parent=5 // pred_check
        %p211 = pneg %p210
      $region18: #{lstm_model_forward.7} parent=5 // pred_check_branch
        %213 = sbr.rel (%p211) target = $region20
      $region19: #{lstm_model_forward.7} parent=5 // pred_region
        // Predicated region
        $region21: #{lstm_model_forward.7} parent=19 // pred_check
          %p214 = pneg %p51
        $region22: #{lstm_model_forward.7} parent=19 // pred_check_branch
          %216 = sbr.rel (%p214) target = $region24
        $region23: #{lstm_model_forward.7} parent=19 // pred_region
          %s217 = smul.u32 %s19, 2
          %s218 = ssub.s32 0, %s217
          %s219 = smul.u32 %s18, %s218
          %s220 = sadd.s32 %s19, %s219
          %s221 = smul.u32 8, %s220
          %p222 = scmp.lt.s32.totalorder %s221, 7
          %s223 = scalar_select %p222, %s221, 7
          %s224 = smul.addr %s223, 4
          %s225 = smul.addr %s224, 4
          %s226 = scalar_lea.vmem %s0, %s225
          %s227 = smul.u32 %s19, 2
          %s228 = ssub.s32 0, %s227
          %s229 = smul.u32 %s18, %s228
          %s230 = sadd.s32 %s19, %s229
          %s231 = smul.u32 8, %s230
        $region24: #{lstm_model_forward.7} parent=19 // pred_fallthru
          _
        // Predicated region
        $region25: #{lstm_model_forward.7} parent=19 // pred_check
          %p232 = pneg %p77
        $region26: #{lstm_model_forward.7} parent=19 // pred_check_branch
          %234 = sbr.rel (%p232) target = $region28
        $region27: #{lstm_model_forward.7} parent=19 // pred_region
          %p235 = scmp.lt.s32.totalorder %s18, 1
          %s236 = scalar_select %p235, %s18, 1
          %s237 = smul.addr %s236, 128
          %s238 = smul.addr %s237, 4
          %s239 = scalar_lea.vmem %s1, %s238
        $region28: #{lstm_model_forward.7} parent=19 // pred_fallthru
          _
        // Predicated region
        $region29: #{lstm_model_forward.7} parent=19 // pred_check
          %p240 = pneg %p103
        $region30: #{lstm_model_forward.7} parent=19 // pred_check_branch
          %242 = sbr.rel (%p240) target = $region32
        $region31: #{lstm_model_forward.7} parent=19 // pred_region
          %p243 = scmp.lt.s32.totalorder %s18, 1
          %s244 = scalar_select %p243, %s18, 1
          %s245 = smul.addr %s244, 64
          %s246 = smul.addr %s245, 4
          %s247 = scalar_lea.vmem %s2, %s246
        $region32: #{lstm_model_forward.7} parent=19 // pred_fallthru
          _
        // Predicated region
        $region33: #{lstm_model_forward.7} parent=19 // pred_check
          %p248 = pneg %p129
        $region34: #{lstm_model_forward.7} parent=19 // pred_check_branch
          %250 = sbr.rel (%p248) target = $region36
        $region35: #{lstm_model_forward.7} parent=19 // pred_region
          %p251 = scmp.lt.s32.totalorder %s18, 1
          %s252 = scalar_select %p251, %s18, 1
          %s253 = smul.addr %s252, 4
          %s254 = scalar_lea.vmem %s3, %s253
        $region36: #{lstm_model_forward.7} parent=19 // pred_fallthru
          _
      $region20: #{lstm_model_forward.7} parent=5 // pred_fallthru
        _
      %p255 = scmp.le.s32.totalorder 1, %s11
      %p256 = scmp.lt.s32.totalorder %s11, 3
      %p257 = pnand %p255, %p256
      %p258 = pneg %p257
      // Predicated region
      $region37: #{lstm_model_forward.7} parent=5 // pred_check
        _
      $region38: #{lstm_model_forward.7} parent=5 // pred_check_branch
        %260 = sbr.rel (%p257) target = $region40
      $region39: #{lstm_model_forward.7} parent=5 // pred_region
        %s261 = ssub.s32 %s11, 1
        %s262 = smul.u32 %s21, 2
        %s263 = ssub.s32 0, %s262
        %s264 = smul.u32 %s20, %s263
        %s265 = sadd.s32 %s21, %s264
        %s266 = smul.u32 8, %s265
        %p267 = scmp.lt.s32.totalorder %s266, 7
        %s268 = scalar_select %p267, %s266, 7
        %s269 = smul.addr %s268, 4
        %s270 = smul.addr %s269, 4
        %s271 = scalar_lea.vmem %s0, %s270
        %p272 = pneg %p57
        %p273 = pneg %p54
        %p274 = scmp.lt.s32.totalorder %s20, 1
        %s275 = scalar_select %p274, %s20, 1
        %s276 = smul.addr %s275, 128
        %s277 = smul.addr %s276, 4
        %s278 = scalar_lea.vmem %s1, %s277
        %p279 = pneg %p83
        %p280 = pneg %p80
        %p281 = scmp.lt.s32.totalorder %s20, 1
        %s282 = scalar_select %p281, %s20, 1
        %s283 = smul.addr %s282, 64
        %s284 = smul.addr %s283, 4
        %s285 = scalar_lea.vmem %s2, %s284
        %p286 = pneg %p109
        %p287 = pneg %p106
        %p288 = scmp.lt.s32.totalorder %s20, 1
        %s289 = scalar_select %p288, %s20, 1
        %s290 = smul.addr %s289, 4
        %s291 = scalar_lea.vmem %s3, %s290
        %p292 = pneg %p135
        %p293 = pneg %p132
        %p294 = pneg %p156
        %p295 = pneg %p153
        %p296 = pneg %p192
        %p297 = pneg %p189
        %s298 = sand.u32 %s179, 1
        %s299 = sand.u32 %s179, 1
        %s300 = smul.addr %s299, 64
        %s301 = scalar_lea.vmem [#allocation5], %s300
        %s302 = smul.u32 %s21, 2
        %s303 = ssub.s32 0, %s302
        %s304 = smul.u32 %s20, %s303
        %s305 = sadd.s32 %s21, %s304
        %s306 = smul.u32 8, %s305
        %p307 = scmp.lt.s32.totalorder %s306, 7
        %s308 = scalar_select %p307, %s306, 7
        %s309 = smul.addr %s308, 4
        %s310 = smul.addr %s309, 4
        %s311 = scalar_lea.vmem %s0, %s310
        %s312 = smul.u32 %s21, 2
        %s313 = ssub.s32 0, %s312
        %s314 = smul.u32 %s20, %s313
        %s315 = sadd.s32 %s21, %s314
        %s316 = smul.u32 8, %s315
        %p317 = scmp.lt.s32.totalorder %s20, 1
        %s318 = scalar_select %p317, %s20, 1
        %s319 = smul.addr %s318, 128
        %s320 = smul.addr %s319, 4
        %s321 = scalar_lea.vmem %s1, %s320
        %p322 = scmp.lt.s32.totalorder %s20, 1
        %s323 = scalar_select %p322, %s20, 1
        %s324 = smul.addr %s323, 64
        %s325 = smul.addr %s324, 4
        %s326 = scalar_lea.vmem %s2, %s325
        %p327 = scmp.lt.s32.totalorder %s20, 1
        %s328 = scalar_select %p327, %s20, 1
        %s329 = smul.addr %s328, 4
        %s330 = scalar_lea.vmem %s3, %s329
        %s331 = smul.u32 %s21, 2
        %s332 = ssub.s32 0, %s331
        %s333 = smul.u32 %s20, %s332
        %s334 = sadd.s32 %s21, %s333
        %s335 = smul.u32 8, %s334
        %p336 = scmp.eq.s32.totalorder %s21, 0
        // Predicated region
        $region41: #{lstm_model_forward.7} parent=39 // pred_check
          %p337 = pneg %p336
        $region42: #{lstm_model_forward.7} parent=39 // pred_check_branch
          %339 = sbr.rel (%p337) target = $region44
        $region43: #{lstm_model_forward.7} parent=39 // pred_region
          %340 = vst [vmem:[#allocation3] sm:$0xff] 0.0
          %341 = vst [vmem:[#allocation3 + $0x8] sm:$0xff] 0.0
          %342 = vst [vmem:[#allocation4] sm:$0xff] 0.0
          %343 = vst [vmem:[#allocation4 + $0x8] sm:$0xff] 0.0
        $region44: #{lstm_model_forward.7} parent=39 // pred_fallthru
          _
        %v344 = vld [vmem:[%s311] sm:$0xff]
        %v345 = vld [vmem:[%s311 + $0x8] sm:$0xff]
        %v346 = vld [vmem:[%s311 + $0x10] sm:$0xff]
        %v347 = vld [vmem:[%s311 + $0x18] sm:$0xff]
        %v348 = vld [vmem:[%s311 + $0x20] sm:$0xff]
        %v349 = vld [vmem:[%s311 + $0x28] sm:$0xff]
        %v350 = vld [vmem:[%s311 + $0x30] sm:$0xff]
        %v351 = vld [vmem:[%s311 + $0x38] sm:$0xff]
        %v352 = vld [vmem:[%s311 + $0x40] sm:$0xff]
        %v353 = vld [vmem:[%s311 + $0x48] sm:$0xff]
        %v354 = vld [vmem:[%s311 + $0x50] sm:$0xff]
        %v355 = vld [vmem:[%s311 + $0x58] sm:$0xff]
        %v356 = vld [vmem:[%s311 + $0x60] sm:$0xff]
        %v357 = vld [vmem:[%s311 + $0x68] sm:$0xff]
        %v358 = vld [vmem:[%s311 + $0x70] sm:$0xff]
        %v359 = vld [vmem:[%s311 + $0x78] sm:$0xff]
        %v360 = vld [vmem:[%s321] sm:$0xff]
        %v361 = vld [vmem:[%s321 + $0x8] sm:$0xff]
        %v362 = vld [vmem:[%s321 + $0x10] sm:$0xff]
        %v363 = vld [vmem:[%s321 + $0x18] sm:$0xff]
        %v364 = vld [vmem:[%s321 + $0x20] sm:$0xff]
        %v365 = vld [vmem:[%s321 + $0x28] sm:$0xff]
        %v366 = vld [vmem:[%s321 + $0x30] sm:$0xff]
        %v367 = vld [vmem:[%s321 + $0x38] sm:$0xff]
        %v368 = vld [vmem:[%s321 + $0x40] sm:$0xff]
        %v369 = vld [vmem:[%s321 + $0x48] sm:$0xff]
        %v370 = vld [vmem:[%s321 + $0x50] sm:$0xff]
        %v371 = vld [vmem:[%s321 + $0x58] sm:$0xff]
        %v372 = vld [vmem:[%s321 + $0x60] sm:$0xff]
        %v373 = vld [vmem:[%s321 + $0x68] sm:$0xff]
        %v374 = vld [vmem:[%s321 + $0x70] sm:$0xff]
        %v375 = vld [vmem:[%s321 + $0x78] sm:$0xff]
        %v376 = vld [vmem:[%s321 + $0x80] sm:$0xff]
        %v377 = vld [vmem:[%s321 + $0x88] sm:$0xff]
        %v378 = vld [vmem:[%s321 + $0x90] sm:$0xff]
        %v379 = vld [vmem:[%s321 + $0x98] sm:$0xff]
        %v380 = vld [vmem:[%s321 + $0xa0] sm:$0xff]
        %v381 = vld [vmem:[%s321 + $0xa8] sm:$0xff]
        %v382 = vld [vmem:[%s321 + $0xb0] sm:$0xff]
        %v383 = vld [vmem:[%s321 + $0xb8] sm:$0xff]
        %v384 = vld [vmem:[%s321 + $0xc0] sm:$0xff]
        %v385 = vld [vmem:[%s321 + $0xc8] sm:$0xff]
        %v386 = vld [vmem:[%s321 + $0xd0] sm:$0xff]
        %v387 = vld [vmem:[%s321 + $0xd8] sm:$0xff]
        %v388 = vld [vmem:[%s321 + $0xe0] sm:$0xff]
        %v389 = vld [vmem:[%s321 + $0xe8] sm:$0xff]
        %v390 = vld [vmem:[%s321 + $0xf0] sm:$0xff]
        %v391 = vld [vmem:[%s321 + $0xf8] sm:$0xff]
        %v392 = vld [vmem:[%s321 + $0x100] sm:$0xff]
        %v393 = vld [vmem:[%s321 + $0x108] sm:$0xff]
        %v394 = vld [vmem:[%s321 + $0x110] sm:$0xff]
        %v395 = vld [vmem:[%s321 + $0x118] sm:$0xff]
        %v396 = vld [vmem:[%s321 + $0x120] sm:$0xff]
        %v397 = vld [vmem:[%s321 + $0x128] sm:$0xff]
        %v398 = vld [vmem:[%s321 + $0x130] sm:$0xff]
        %v399 = vld [vmem:[%s321 + $0x138] sm:$0xff]
        %v400 = vld [vmem:[%s321 + $0x140] sm:$0xff]
        %v401 = vld [vmem:[%s321 + $0x148] sm:$0xff]
        %v402 = vld [vmem:[%s321 + $0x150] sm:$0xff]
        %v403 = vld [vmem:[%s321 + $0x158] sm:$0xff]
        %v404 = vld [vmem:[%s321 + $0x160] sm:$0xff]
        %v405 = vld [vmem:[%s321 + $0x168] sm:$0xff]
        %v406 = vld [vmem:[%s321 + $0x170] sm:$0xff]
        %v407 = vld [vmem:[%s321 + $0x178] sm:$0xff]
        %v408 = vld [vmem:[%s321 + $0x180] sm:$0xff]
        %v409 = vld [vmem:[%s321 + $0x188] sm:$0xff]
        %v410 = vld [vmem:[%s321 + $0x190] sm:$0xff]
        %v411 = vld [vmem:[%s321 + $0x198] sm:$0xff]
        %v412 = vld [vmem:[%s321 + $0x1a0] sm:$0xff]
        %v413 = vld [vmem:[%s321 + $0x1a8] sm:$0xff]
        %v414 = vld [vmem:[%s321 + $0x1b0] sm:$0xff]
        %v415 = vld [vmem:[%s321 + $0x1b8] sm:$0xff]
        %v416 = vld [vmem:[%s321 + $0x1c0] sm:$0xff]
        %v417 = vld [vmem:[%s321 + $0x1c8] sm:$0xff]
        %v418 = vld [vmem:[%s321 + $0x1d0] sm:$0xff]
        %v419 = vld [vmem:[%s321 + $0x1d8] sm:$0xff]
        %v420 = vld [vmem:[%s321 + $0x1e0] sm:$0xff]
        %v421 = vld [vmem:[%s321 + $0x1e8] sm:$0xff]
        %v422 = vld [vmem:[%s321 + $0x1f0] sm:$0xff]
        %v423 = vld [vmem:[%s321 + $0x1f8] sm:$0xff]
        %v424 = vld [vmem:[%s330] sm:$0xf]
        %v426 = vperm.slane %v424, 0
        %v427 = vperm.slane %v424, 1
        %v428 = vperm.slane %v424, 2
        %v429 = vperm.slane %v424, 3
        %v450 = vunpack.c.l.b16 %v344
        %v451 = vunpack.c.h.b16 %v344
        %v452 = vunpack.c.l.b16 %v345
        %v453 = vunpack.c.h.b16 %v345
        %v454 = vunpack.c.l.b16 %v346
        %v455 = vunpack.c.h.b16 %v346
        %v456 = vunpack.c.l.b16 %v347
        %v457 = vunpack.c.h.b16 %v347
        %v458 = vunpack.c.l.b16 %v348
        %v459 = vunpack.c.h.b16 %v348
        %v460 = vunpack.c.l.b16 %v349
        %v461 = vunpack.c.h.b16 %v349
        %v462 = vunpack.c.l.b16 %v350
        %v463 = vunpack.c.h.b16 %v350
        %v464 = vunpack.c.l.b16 %v351
        %v465 = vunpack.c.h.b16 %v351
        %v466 = vunpack.c.l.b16 %v352
        %v467 = vunpack.c.h.b16 %v352
        %v468 = vunpack.c.l.b16 %v353
        %v469 = vunpack.c.h.b16 %v353
        %v470 = vunpack.c.l.b16 %v354
        %v471 = vunpack.c.h.b16 %v354
        %v472 = vunpack.c.l.b16 %v355
        %v473 = vunpack.c.h.b16 %v355
        %v474 = vunpack.c.l.b16 %v356
        %v475 = vunpack.c.h.b16 %v356
        %v476 = vunpack.c.l.b16 %v357
        %v477 = vunpack.c.h.b16 %v357
        %v478 = vunpack.c.l.b16 %v358
        %v479 = vunpack.c.h.b16 %v358
        %v480 = vunpack.c.l.b16 %v359
        %v481 = vunpack.c.h.b16 %v359
        %v482 = vpack.c.b16 %v452, %v450
        %v483 = vpack.c.b16 %v453, %v451
        %v484 = vpack.c.b16 %v456, %v454
        %v485 = vpack.c.b16 %v457, %v455
        %v486 = vpack.c.b16 %v460, %v458
        %v487 = vpack.c.b16 %v461, %v459
        %v488 = vpack.c.b16 %v464, %v462
        %v489 = vpack.c.b16 %v465, %v463
        %v490 = vpack.c.b16 %v468, %v466
        %v491 = vpack.c.b16 %v469, %v467
        %v492 = vpack.c.b16 %v472, %v470
        %v493 = vpack.c.b16 %v473, %v471
        %v494 = vpack.c.b16 %v476, %v474
        %v495 = vpack.c.b16 %v477, %v475
        %v496 = vpack.c.b16 %v480, %v478
        %v497 = vpack.c.b16 %v481, %v479
        %v578 = vunpack.c.l.b16 %v360
        %v579 = vunpack.c.h.b16 %v360
        %v580 = vunpack.c.l.b16 %v361
        %v581 = vunpack.c.h.b16 %v361
        %v582 = vunpack.c.l.b16 %v362
        %v583 = vunpack.c.h.b16 %v362
        %v584 = vunpack.c.l.b16 %v363
        %v585 = vunpack.c.h.b16 %v363
        %v586 = vunpack.c.l.b16 %v364
        %v587 = vunpack.c.h.b16 %v364
        %v588 = vunpack.c.l.b16 %v365
        %v589 = vunpack.c.h.b16 %v365
        %v590 = vunpack.c.l.b16 %v366
        %v591 = vunpack.c.h.b16 %v366
        %v592 = vunpack.c.l.b16 %v367
        %v593 = vunpack.c.h.b16 %v367
        %v594 = vunpack.c.l.b16 %v368
        %v595 = vunpack.c.h.b16 %v368
        %v596 = vunpack.c.l.b16 %v369
        %v597 = vunpack.c.h.b16 %v369
        %v598 = vunpack.c.l.b16 %v370
        %v599 = vunpack.c.h.b16 %v370
        %v600 = vunpack.c.l.b16 %v371
        %v601 = vunpack.c.h.b16 %v371
        %v602 = vunpack.c.l.b16 %v372
        %v603 = vunpack.c.h.b16 %v372
        %v604 = vunpack.c.l.b16 %v373
        %v605 = vunpack.c.h.b16 %v373
        %v606 = vunpack.c.l.b16 %v374
        %v607 = vunpack.c.h.b16 %v374
        %v608 = vunpack.c.l.b16 %v375
        %v609 = vunpack.c.h.b16 %v375
        %v610 = vunpack.c.l.b16 %v376
        %v611 = vunpack.c.h.b16 %v376
        %v612 = vunpack.c.l.b16 %v377
        %v613 = vunpack.c.h.b16 %v377
        %v614 = vunpack.c.l.b16 %v378
        %v615 = vunpack.c.h.b16 %v378
        %v616 = vunpack.c.l.b16 %v379
        %v617 = vunpack.c.h.b16 %v379
        %v618 = vunpack.c.l.b16 %v380
        %v619 = vunpack.c.h.b16 %v380
        %v620 = vunpack.c.l.b16 %v381
        %v621 = vunpack.c.h.b16 %v381
        %v622 = vunpack.c.l.b16 %v382
        %v623 = vunpack.c.h.b16 %v382
        %v624 = vunpack.c.l.b16 %v383
        %v625 = vunpack.c.h.b16 %v383
        %v626 = vunpack.c.l.b16 %v384
        %v627 = vunpack.c.h.b16 %v384
        %v628 = vunpack.c.l.b16 %v385
        %v629 = vunpack.c.h.b16 %v385
        %v630 = vunpack.c.l.b16 %v386
        %v631 = vunpack.c.h.b16 %v386
        %v632 = vunpack.c.l.b16 %v387
        %v633 = vunpack.c.h.b16 %v387
        %v634 = vunpack.c.l.b16 %v388
        %v635 = vunpack.c.h.b16 %v388
        %v636 = vunpack.c.l.b16 %v389
        %v637 = vunpack.c.h.b16 %v389
        %v638 = vunpack.c.l.b16 %v390
        %v639 = vunpack.c.h.b16 %v390
        %v640 = vunpack.c.l.b16 %v391
        %v641 = vunpack.c.h.b16 %v391
        %v642 = vunpack.c.l.b16 %v392
        %v643 = vunpack.c.h.b16 %v392
        %v644 = vunpack.c.l.b16 %v393
        %v645 = vunpack.c.h.b16 %v393
        %v646 = vunpack.c.l.b16 %v394
        %v647 = vunpack.c.h.b16 %v394
        %v648 = vunpack.c.l.b16 %v395
        %v649 = vunpack.c.h.b16 %v395
        %v650 = vunpack.c.l.b16 %v396
        %v651 = vunpack.c.h.b16 %v396
        %v652 = vunpack.c.l.b16 %v397
        %v653 = vunpack.c.h.b16 %v397
        %v654 = vunpack.c.l.b16 %v398
        %v655 = vunpack.c.h.b16 %v398
        %v656 = vunpack.c.l.b16 %v399
        %v657 = vunpack.c.h.b16 %v399
        %v658 = vunpack.c.l.b16 %v400
        %v659 = vunpack.c.h.b16 %v400
        %v660 = vunpack.c.l.b16 %v401
        %v661 = vunpack.c.h.b16 %v401
        %v662 = vunpack.c.l.b16 %v402
        %v663 = vunpack.c.h.b16 %v402
        %v664 = vunpack.c.l.b16 %v403
        %v665 = vunpack.c.h.b16 %v403
        %v666 = vunpack.c.l.b16 %v404
        %v667 = vunpack.c.h.b16 %v404
        %v668 = vunpack.c.l.b16 %v405
        %v669 = vunpack.c.h.b16 %v405
        %v670 = vunpack.c.l.b16 %v406
        %v671 = vunpack.c.h.b16 %v406
        %v672 = vunpack.c.l.b16 %v407
        %v673 = vunpack.c.h.b16 %v407
        %v674 = vunpack.c.l.b16 %v408
        %v675 = vunpack.c.h.b16 %v408
        %v676 = vunpack.c.l.b16 %v409
        %v677 = vunpack.c.h.b16 %v409
        %v678 = vunpack.c.l.b16 %v410
        %v679 = vunpack.c.h.b16 %v410
        %v680 = vunpack.c.l.b16 %v411
        %v681 = vunpack.c.h.b16 %v411
        %v682 = vunpack.c.l.b16 %v412
        %v683 = vunpack.c.h.b16 %v412
        %v684 = vunpack.c.l.b16 %v413
        %v685 = vunpack.c.h.b16 %v413
        %v686 = vunpack.c.l.b16 %v414
        %v687 = vunpack.c.h.b16 %v414
        %v688 = vunpack.c.l.b16 %v415
        %v689 = vunpack.c.h.b16 %v415
        %v690 = vunpack.c.l.b16 %v416
        %v691 = vunpack.c.h.b16 %v416
        %v692 = vunpack.c.l.b16 %v417
        %v693 = vunpack.c.h.b16 %v417
        %v694 = vunpack.c.l.b16 %v418
        %v695 = vunpack.c.h.b16 %v418
        %v696 = vunpack.c.l.b16 %v419
        %v697 = vunpack.c.h.b16 %v419
        %v698 = vunpack.c.l.b16 %v420
        %v699 = vunpack.c.h.b16 %v420
        %v700 = vunpack.c.l.b16 %v421
        %v701 = vunpack.c.h.b16 %v421
        %v702 = vunpack.c.l.b16 %v422
        %v703 = vunpack.c.h.b16 %v422
        %v704 = vunpack.c.l.b16 %v423
        %v705 = vunpack.c.h.b16 %v423
        %v706 = vpack.c.b16 %v582, %v578
        %v707 = vpack.c.b16 %v583, %v579
        %v708 = vpack.c.b16 %v584, %v580
        %v709 = vpack.c.b16 %v585, %v581
        %v710 = vpack.c.b16 %v590, %v586
        %v711 = vpack.c.b16 %v591, %v587
        %v712 = vpack.c.b16 %v592, %v588
        %v713 = vpack.c.b16 %v593, %v589
        %v714 = vpack.c.b16 %v598, %v594
        %v715 = vpack.c.b16 %v599, %v595
        %v716 = vpack.c.b16 %v600, %v596
        %v717 = vpack.c.b16 %v601, %v597
        %v718 = vpack.c.b16 %v606, %v602
        %v719 = vpack.c.b16 %v607, %v603
        %v720 = vpack.c.b16 %v608, %v604
        %v721 = vpack.c.b16 %v609, %v605
        %v722 = vpack.c.b16 %v614, %v610
        %v723 = vpack.c.b16 %v615, %v611
        %v724 = vpack.c.b16 %v616, %v612
        %v725 = vpack.c.b16 %v617, %v613
        %v726 = vpack.c.b16 %v622, %v618
        %v727 = vpack.c.b16 %v623, %v619
        %v728 = vpack.c.b16 %v624, %v620
        %v729 = vpack.c.b16 %v625, %v621
        %v730 = vpack.c.b16 %v630, %v626
        %v731 = vpack.c.b16 %v631, %v627
        %v732 = vpack.c.b16 %v632, %v628
        %v733 = vpack.c.b16 %v633, %v629
        %v734 = vpack.c.b16 %v638, %v634
        %v735 = vpack.c.b16 %v639, %v635
        %v736 = vpack.c.b16 %v640, %v636
        %v737 = vpack.c.b16 %v641, %v637
        %v738 = vpack.c.b16 %v646, %v642
        %v739 = vpack.c.b16 %v647, %v643
        %v740 = vpack.c.b16 %v648, %v644
        %v741 = vpack.c.b16 %v649, %v645
        %v742 = vpack.c.b16 %v654, %v650
        %v743 = vpack.c.b16 %v655, %v651
        %v744 = vpack.c.b16 %v656, %v652
        %v745 = vpack.c.b16 %v657, %v653
        %v746 = vpack.c.b16 %v662, %v658
        %v747 = vpack.c.b16 %v663, %v659
        %v748 = vpack.c.b16 %v664, %v660
        %v749 = vpack.c.b16 %v665, %v661
        %v750 = vpack.c.b16 %v670, %v666
        %v751 = vpack.c.b16 %v671, %v667
        %v752 = vpack.c.b16 %v672, %v668
        %v753 = vpack.c.b16 %v673, %v669
        %v754 = vpack.c.b16 %v678, %v674
        %v755 = vpack.c.b16 %v679, %v675
        %v756 = vpack.c.b16 %v680, %v676
        %v757 = vpack.c.b16 %v681, %v677
        %v758 = vpack.c.b16 %v686, %v682
        %v759 = vpack.c.b16 %v687, %v683
        %v760 = vpack.c.b16 %v688, %v684
        %v761 = vpack.c.b16 %v689, %v685
        %v762 = vpack.c.b16 %v694, %v690
        %v763 = vpack.c.b16 %v695, %v691
        %v764 = vpack.c.b16 %v696, %v692
        %v765 = vpack.c.b16 %v697, %v693
        %v766 = vpack.c.b16 %v702, %v698
        %v767 = vpack.c.b16 %v703, %v699
        %v768 = vpack.c.b16 %v704, %v700
        %v769 = vpack.c.b16 %v705, %v701
        %834 = vmatpush.bf16.msra.mxu0 %v734
        %835 = vmatpush.bf16.msra.mxu0 %v730
        %836 = vmatpush.bf16.msra.mxu0 %v726
        %837 = vmatpush.bf16.msra.mxu0 %v722
        %838 = vmatpush.bf16.msra.mxu0 %v718
        %839 = vmatpush.bf16.msra.mxu0 %v714
        %840 = vmatpush.bf16.msra.mxu0 %v710
        %841 = vmatpush.bf16.msra.mxu0 %v706
        %842 = vmatmul.bf16.gmra.mxu0 %v482
        %v843 = vpop.f32.mrf.mxu0
        %v844 = vadd.f32 %v426, %v843
        %v845 = vpop.f32.mrf.mxu0
        %v846 = vadd.f32 %v426, %v845
        %847 = vmatmul.bf16.gmra.mxu0 %v484
        %v848 = vpop.f32.mrf.mxu0
        %v849 = vadd.f32 %v426, %v848
        %v850 = vpop.f32.mrf.mxu0
        %v851 = vadd.f32 %v426, %v850
        %852 = vmatmul.bf16.gmra.mxu0 %v486
        %v853 = vpop.f32.mrf.mxu0
        %v854 = vadd.f32 %v426, %v853
        %v855 = vpop.f32.mrf.mxu0
        %v856 = vadd.f32 %v426, %v855
        %857 = vmatmul.bf16.gmra.mxu0 %v488
        %v858 = vpop.f32.mrf.mxu0
        %v859 = vadd.f32 %v426, %v858
        %v860 = vpop.f32.mrf.mxu0
        %v861 = vadd.f32 %v426, %v860
        %862 = vmatmul.bf16.gmra.mxu0 %v490
        %v863 = vpop.f32.mrf.mxu0
        %v864 = vadd.f32 %v426, %v863
        %v865 = vpop.f32.mrf.mxu0
        %v866 = vadd.f32 %v426, %v865
        %867 = vmatmul.bf16.gmra.mxu0 %v492
        %v868 = vpop.f32.mrf.mxu0
        %v869 = vadd.f32 %v426, %v868
        %v870 = vpop.f32.mrf.mxu0
        %v871 = vadd.f32 %v426, %v870
        %872 = vmatmul.bf16.gmra.mxu0 %v494
        %v873 = vpop.f32.mrf.mxu0
        %v874 = vadd.f32 %v426, %v873
        %v875 = vpop.f32.mrf.mxu0
        %v876 = vadd.f32 %v426, %v875
        %877 = vmatmul.bf16.gmra.mxu0 %v496
        %v878 = vpop.f32.mrf.mxu0
        %v879 = vadd.f32 %v426, %v878
        %v880 = vpop.f32.mrf.mxu0
        %v881 = vadd.f32 %v426, %v880
        %882 = vdwg.mxu0
        %883 = vmatpush.bf16.msra.mxu0 %v766
        %884 = vmatpush.bf16.msra.mxu0 %v762
        %885 = vmatpush.bf16.msra.mxu0 %v758
        %886 = vmatpush.bf16.msra.mxu0 %v754
        %887 = vmatpush.bf16.msra.mxu0 %v750
        %888 = vmatpush.bf16.msra.mxu0 %v746
        %889 = vmatpush.bf16.msra.mxu0 %v742
        %890 = vmatpush.bf16.msra.mxu0 %v738
        %891 = vmatmul.bf16.gmra.mxu0 %v483
        %v892 = vpop.f32.mrf.mxu0
        %v893 = vadd.f32 %v844, %v892
        %v894 = vpop.f32.mrf.mxu0
        %v895 = vadd.f32 %v846, %v894
        %896 = vmatmul.bf16.gmra.mxu0 %v485
        %v897 = vpop.f32.mrf.mxu0
        %v898 = vadd.f32 %v849, %v897
        %v899 = vpop.f32.mrf.mxu0
        %v900 = vadd.f32 %v851, %v899
        %901 = vmatmul.bf16.gmra.mxu0 %v487
        %v902 = vpop.f32.mrf.mxu0
        %v903 = vadd.f32 %v854, %v902
        %v904 = vpop.f32.mrf.mxu0
        %v905 = vadd.f32 %v856, %v904
        %906 = vmatmul.bf16.gmra.mxu0 %v489
        %v907 = vpop.f32.mrf.mxu0
        %v908 = vadd.f32 %v859, %v907
        %v909 = vpop.f32.mrf.mxu0
        %v910 = vadd.f32 %v861, %v909
        %911 = vmatmul.bf16.gmra.mxu0 %v491
        %v912 = vpop.f32.mrf.mxu0
        %v913 = vadd.f32 %v864, %v912
        %v914 = vpop.f32.mrf.mxu0
        %v915 = vadd.f32 %v866, %v914
        %916 = vmatmul.bf16.gmra.mxu0 %v493
        %v917 = vpop.f32.mrf.mxu0
        %v918 = vadd.f32 %v869, %v917
        %v919 = vpop.f32.mrf.mxu0
        %v920 = vadd.f32 %v871, %v919
        %921 = vmatmul.bf16.gmra.mxu0 %v495
        %v922 = vpop.f32.mrf.mxu0
        %v923 = vadd.f32 %v874, %v922
        %v924 = vpop.f32.mrf.mxu0
        %v925 = vadd.f32 %v876, %v924
        %926 = vmatmul.bf16.gmra.mxu0 %v497
        %v927 = vpop.f32.mrf.mxu0
        %v928 = vadd.f32 %v879, %v927
        %v929 = vpop.f32.mrf.mxu0
        %v930 = vadd.f32 %v881, %v929
        %931 = vdwg.mxu0
        %932 = vmatpush.bf16.msra.mxu0 %v735
        %933 = vmatpush.bf16.msra.mxu0 %v731
        %934 = vmatpush.bf16.msra.mxu0 %v727
        %935 = vmatpush.bf16.msra.mxu0 %v723
        %936 = vmatpush.bf16.msra.mxu0 %v719
        %937 = vmatpush.bf16.msra.mxu0 %v715
        %938 = vmatpush.bf16.msra.mxu0 %v711
        %939 = vmatpush.bf16.msra.mxu0 %v707
        %940 = vmatmul.bf16.gmra.mxu0 %v482
        %v941 = vpop.f32.mrf.mxu0
        %v942 = vadd.f32 %v427, %v941
        %v943 = vpop.f32.mrf.mxu0
        %v944 = vadd.f32 %v427, %v943
        %945 = vmatmul.bf16.gmra.mxu0 %v484
        %v946 = vpop.f32.mrf.mxu0
        %v947 = vadd.f32 %v427, %v946
        %v948 = vpop.f32.mrf.mxu0
        %v949 = vadd.f32 %v427, %v948
        %950 = vmatmul.bf16.gmra.mxu0 %v486
        %v951 = vpop.f32.mrf.mxu0
        %v952 = vadd.f32 %v427, %v951
        %v953 = vpop.f32.mrf.mxu0
        %v954 = vadd.f32 %v427, %v953
        %955 = vmatmul.bf16.gmra.mxu0 %v488
        %v956 = vpop.f32.mrf.mxu0
        %v957 = vadd.f32 %v427, %v956
        %v958 = vpop.f32.mrf.mxu0
        %v959 = vadd.f32 %v427, %v958
        %960 = vmatmul.bf16.gmra.mxu0 %v490
        %v961 = vpop.f32.mrf.mxu0
        %v962 = vadd.f32 %v427, %v961
        %v963 = vpop.f32.mrf.mxu0
        %v964 = vadd.f32 %v427, %v963
        %965 = vmatmul.bf16.gmra.mxu0 %v492
        %v966 = vpop.f32.mrf.mxu0
        %v967 = vadd.f32 %v427, %v966
        %v968 = vpop.f32.mrf.mxu0
        %v969 = vadd.f32 %v427, %v968
        %970 = vmatmul.bf16.gmra.mxu0 %v494
        %v971 = vpop.f32.mrf.mxu0
        %v972 = vadd.f32 %v427, %v971
        %v973 = vpop.f32.mrf.mxu0
        %v974 = vadd.f32 %v427, %v973
        %975 = vmatmul.bf16.gmra.mxu0 %v496
        %v976 = vpop.f32.mrf.mxu0
        %v977 = vadd.f32 %v427, %v976
        %v978 = vpop.f32.mrf.mxu0
        %v979 = vadd.f32 %v427, %v978
        %980 = vdwg.mxu0
        %981 = vmatpush.bf16.msra.mxu0 %v767
        %982 = vmatpush.bf16.msra.mxu0 %v763
        %983 = vmatpush.bf16.msra.mxu0 %v759
        %984 = vmatpush.bf16.msra.mxu0 %v755
        %985 = vmatpush.bf16.msra.mxu0 %v751
        %986 = vmatpush.bf16.msra.mxu0 %v747
        %987 = vmatpush.bf16.msra.mxu0 %v743
        %988 = vmatpush.bf16.msra.mxu0 %v739
        %989 = vmatmul.bf16.gmra.mxu0 %v483
        %v990 = vpop.f32.mrf.mxu0
        %v991 = vadd.f32 %v942, %v990
        %v992 = vpop.f32.mrf.mxu0
        %v993 = vadd.f32 %v944, %v992
        %994 = vmatmul.bf16.gmra.mxu0 %v485
        %v995 = vpop.f32.mrf.mxu0
        %v996 = vadd.f32 %v947, %v995
        %v997 = vpop.f32.mrf.mxu0
        %v998 = vadd.f32 %v949, %v997
        %999 = vmatmul.bf16.gmra.mxu0 %v487
        %v1000 = vpop.f32.mrf.mxu0
        %v1001 = vadd.f32 %v952, %v1000
        %v1002 = vpop.f32.mrf.mxu0
        %v1003 = vadd.f32 %v954, %v1002
        %1004 = vmatmul.bf16.gmra.mxu0 %v489
        %v1005 = vpop.f32.mrf.mxu0
        %v1006 = vadd.f32 %v957, %v1005
        %v1007 = vpop.f32.mrf.mxu0
        %v1008 = vadd.f32 %v959, %v1007
        %1009 = vmatmul.bf16.gmra.mxu0 %v491
        %v1010 = vpop.f32.mrf.mxu0
        %v1011 = vadd.f32 %v962, %v1010
        %v1012 = vpop.f32.mrf.mxu0
        %v1013 = vadd.f32 %v964, %v1012
        %1014 = vmatmul.bf16.gmra.mxu0 %v493
        %v1015 = vpop.f32.mrf.mxu0
        %v1016 = vadd.f32 %v967, %v1015
        %v1017 = vpop.f32.mrf.mxu0
        %v1018 = vadd.f32 %v969, %v1017
        %1019 = vmatmul.bf16.gmra.mxu0 %v495
        %v1020 = vpop.f32.mrf.mxu0
        %v1021 = vadd.f32 %v972, %v1020
        %v1022 = vpop.f32.mrf.mxu0
        %v1023 = vadd.f32 %v974, %v1022
        %1024 = vmatmul.bf16.gmra.mxu0 %v497
        %v1025 = vpop.f32.mrf.mxu0
        %v1026 = vadd.f32 %v977, %v1025
        %v1027 = vpop.f32.mrf.mxu0
        %v1028 = vadd.f32 %v979, %v1027
        %1029 = vdwg.mxu0
        %1030 = vmatpush.bf16.msra.mxu0 %v736
        %1031 = vmatpush.bf16.msra.mxu0 %v732
        %1032 = vmatpush.bf16.msra.mxu0 %v728
        %1033 = vmatpush.bf16.msra.mxu0 %v724
        %1034 = vmatpush.bf16.msra.mxu0 %v720
        %1035 = vmatpush.bf16.msra.mxu0 %v716
        %1036 = vmatpush.bf16.msra.mxu0 %v712
        %1037 = vmatpush.bf16.msra.mxu0 %v708
        %1038 = vmatmul.bf16.gmra.mxu0 %v482
        %v1039 = vpop.f32.mrf.mxu0
        %v1040 = vadd.f32 %v428, %v1039
        %v1041 = vpop.f32.mrf.mxu0
        %v1042 = vadd.f32 %v428, %v1041
        %1043 = vmatmul.bf16.gmra.mxu0 %v484
        %v1044 = vpop.f32.mrf.mxu0
        %v1045 = vadd.f32 %v428, %v1044
        %v1046 = vpop.f32.mrf.mxu0
        %v1047 = vadd.f32 %v428, %v1046
        %1048 = vmatmul.bf16.gmra.mxu0 %v486
        %v1049 = vpop.f32.mrf.mxu0
        %v1050 = vadd.f32 %v428, %v1049
        %v1051 = vpop.f32.mrf.mxu0
        %v1052 = vadd.f32 %v428, %v1051
        %1053 = vmatmul.bf16.gmra.mxu0 %v488
        %v1054 = vpop.f32.mrf.mxu0
        %v1055 = vadd.f32 %v428, %v1054
        %v1056 = vpop.f32.mrf.mxu0
        %v1057 = vadd.f32 %v428, %v1056
        %1058 = vmatmul.bf16.gmra.mxu0 %v490
        %v1059 = vpop.f32.mrf.mxu0
        %v1060 = vadd.f32 %v428, %v1059
        %v1061 = vpop.f32.mrf.mxu0
        %v1062 = vadd.f32 %v428, %v1061
        %1063 = vmatmul.bf16.gmra.mxu0 %v492
        %v1064 = vpop.f32.mrf.mxu0
        %v1065 = vadd.f32 %v428, %v1064
        %v1066 = vpop.f32.mrf.mxu0
        %v1067 = vadd.f32 %v428, %v1066
        %1068 = vmatmul.bf16.gmra.mxu0 %v494
        %v1069 = vpop.f32.mrf.mxu0
        %v1070 = vadd.f32 %v428, %v1069
        %v1071 = vpop.f32.mrf.mxu0
        %v1072 = vadd.f32 %v428, %v1071
        %1073 = vmatmul.bf16.gmra.mxu0 %v496
        %v1074 = vpop.f32.mrf.mxu0
        %v1075 = vadd.f32 %v428, %v1074
        %v1076 = vpop.f32.mrf.mxu0
        %v1077 = vadd.f32 %v428, %v1076
        %1078 = vdwg.mxu0
        %1079 = vmatpush.bf16.msra.mxu0 %v768
        %1080 = vmatpush.bf16.msra.mxu0 %v764
        %1081 = vmatpush.bf16.msra.mxu0 %v760
        %1082 = vmatpush.bf16.msra.mxu0 %v756
        %1083 = vmatpush.bf16.msra.mxu0 %v752
        %1084 = vmatpush.bf16.msra.mxu0 %v748
        %1085 = vmatpush.bf16.msra.mxu0 %v744
        %1086 = vmatpush.bf16.msra.mxu0 %v740
        %1087 = vmatmul.bf16.gmra.mxu0 %v483
        %v1088 = vpop.f32.mrf.mxu0
        %v1089 = vadd.f32 %v1040, %v1088
        %v1090 = vpop.f32.mrf.mxu0
        %v1091 = vadd.f32 %v1042, %v1090
        %1092 = vmatmul.bf16.gmra.mxu0 %v485
        %v1093 = vpop.f32.mrf.mxu0
        %v1094 = vadd.f32 %v1045, %v1093
        %v1095 = vpop.f32.mrf.mxu0
        %v1096 = vadd.f32 %v1047, %v1095
        %1097 = vmatmul.bf16.gmra.mxu0 %v487
        %v1098 = vpop.f32.mrf.mxu0
        %v1099 = vadd.f32 %v1050, %v1098
        %v1100 = vpop.f32.mrf.mxu0
        %v1101 = vadd.f32 %v1052, %v1100
        %1102 = vmatmul.bf16.gmra.mxu0 %v489
        %v1103 = vpop.f32.mrf.mxu0
        %v1104 = vadd.f32 %v1055, %v1103
        %v1105 = vpop.f32.mrf.mxu0
        %v1106 = vadd.f32 %v1057, %v1105
        %1107 = vmatmul.bf16.gmra.mxu0 %v491
        %v1108 = vpop.f32.mrf.mxu0
        %v1109 = vadd.f32 %v1060, %v1108
        %v1110 = vpop.f32.mrf.mxu0
        %v1111 = vadd.f32 %v1062, %v1110
        %1112 = vmatmul.bf16.gmra.mxu0 %v493
        %v1113 = vpop.f32.mrf.mxu0
        %v1114 = vadd.f32 %v1065, %v1113
        %v1115 = vpop.f32.mrf.mxu0
        %v1116 = vadd.f32 %v1067, %v1115
        %1117 = vmatmul.bf16.gmra.mxu0 %v495
        %v1118 = vpop.f32.mrf.mxu0
        %v1119 = vadd.f32 %v1070, %v1118
        %v1120 = vpop.f32.mrf.mxu0
        %v1121 = vadd.f32 %v1072, %v1120
        %1122 = vmatmul.bf16.gmra.mxu0 %v497
        %v1123 = vpop.f32.mrf.mxu0
        %v1124 = vadd.f32 %v1075, %v1123
        %v1125 = vpop.f32.mrf.mxu0
        %v1126 = vadd.f32 %v1077, %v1125
        %1127 = vdwg.mxu0
        %1128 = vmatpush.bf16.msra.mxu0 %v737
        %1129 = vmatpush.bf16.msra.mxu0 %v733
        %1130 = vmatpush.bf16.msra.mxu0 %v729
        %1131 = vmatpush.bf16.msra.mxu0 %v725
        %1132 = vmatpush.bf16.msra.mxu0 %v721
        %1133 = vmatpush.bf16.msra.mxu0 %v717
        %1134 = vmatpush.bf16.msra.mxu0 %v713
        %1135 = vmatpush.bf16.msra.mxu0 %v709
        %1136 = vmatmul.bf16.gmra.mxu0 %v482
        %v1137 = vpop.f32.mrf.mxu0
        %v1138 = vadd.f32 %v429, %v1137
        %v1139 = vpop.f32.mrf.mxu0
        %v1140 = vadd.f32 %v429, %v1139
        %1141 = vmatmul.bf16.gmra.mxu0 %v484
        %v1142 = vpop.f32.mrf.mxu0
        %v1143 = vadd.f32 %v429, %v1142
        %v1144 = vpop.f32.mrf.mxu0
        %v1145 = vadd.f32 %v429, %v1144
        %1146 = vmatmul.bf16.gmra.mxu0 %v486
        %v1147 = vpop.f32.mrf.mxu0
        %v1148 = vadd.f32 %v429, %v1147
        %v1149 = vpop.f32.mrf.mxu0
        %v1150 = vadd.f32 %v429, %v1149
        %1151 = vmatmul.bf16.gmra.mxu0 %v488
        %v1152 = vpop.f32.mrf.mxu0
        %v1153 = vadd.f32 %v429, %v1152
        %v1154 = vpop.f32.mrf.mxu0
        %v1155 = vadd.f32 %v429, %v1154
        %1156 = vmatmul.bf16.gmra.mxu0 %v490
        %v1157 = vpop.f32.mrf.mxu0
        %v1158 = vadd.f32 %v429, %v1157
        %v1159 = vpop.f32.mrf.mxu0
        %v1160 = vadd.f32 %v429, %v1159
        %1161 = vmatmul.bf16.gmra.mxu0 %v492
        %v1162 = vpop.f32.mrf.mxu0
        %v1163 = vadd.f32 %v429, %v1162
        %v1164 = vpop.f32.mrf.mxu0
        %v1165 = vadd.f32 %v429, %v1164
        %1166 = vmatmul.bf16.gmra.mxu0 %v494
        %v1167 = vpop.f32.mrf.mxu0
        %v1168 = vadd.f32 %v429, %v1167
        %v1169 = vpop.f32.mrf.mxu0
        %v1170 = vadd.f32 %v429, %v1169
        %1171 = vmatmul.bf16.gmra.mxu0 %v496
        %v1172 = vpop.f32.mrf.mxu0
        %v1173 = vadd.f32 %v429, %v1172
        %v1174 = vpop.f32.mrf.mxu0
        %v1175 = vadd.f32 %v429, %v1174
        %1176 = vdwg.mxu0
        %1177 = vmatpush.bf16.msra.mxu0 %v769
        %1178 = vmatpush.bf16.msra.mxu0 %v765
        %1179 = vmatpush.bf16.msra.mxu0 %v761
        %1180 = vmatpush.bf16.msra.mxu0 %v757
        %1181 = vmatpush.bf16.msra.mxu0 %v753
        %1182 = vmatpush.bf16.msra.mxu0 %v749
        %1183 = vmatpush.bf16.msra.mxu0 %v745
        %1184 = vmatpush.bf16.msra.mxu0 %v741
        %1185 = vmatmul.bf16.gmra.mxu0 %v483
        %v1186 = vpop.f32.mrf.mxu0
        %v1187 = vadd.f32 %v1138, %v1186
        %v1188 = vpop.f32.mrf.mxu0
        %v1189 = vadd.f32 %v1140, %v1188
        %1190 = vmatmul.bf16.gmra.mxu0 %v485
        %v1191 = vpop.f32.mrf.mxu0
        %v1192 = vadd.f32 %v1143, %v1191
        %v1193 = vpop.f32.mrf.mxu0
        %v1194 = vadd.f32 %v1145, %v1193
        %1195 = vmatmul.bf16.gmra.mxu0 %v487
        %v1196 = vpop.f32.mrf.mxu0
        %v1197 = vadd.f32 %v1148, %v1196
        %v1198 = vpop.f32.mrf.mxu0
        %v1199 = vadd.f32 %v1150, %v1198
        %1200 = vmatmul.bf16.gmra.mxu0 %v489
        %v1201 = vpop.f32.mrf.mxu0
        %v1202 = vadd.f32 %v1153, %v1201
        %v1203 = vpop.f32.mrf.mxu0
        %v1204 = vadd.f32 %v1155, %v1203
        %1205 = vmatmul.bf16.gmra.mxu0 %v491
        %v1206 = vpop.f32.mrf.mxu0
        %v1207 = vadd.f32 %v1158, %v1206
        %v1208 = vpop.f32.mrf.mxu0
        %v1209 = vadd.f32 %v1160, %v1208
        %1210 = vmatmul.bf16.gmra.mxu0 %v493
        %v1211 = vpop.f32.mrf.mxu0
        %v1212 = vadd.f32 %v1163, %v1211
        %v1213 = vpop.f32.mrf.mxu0
        %v1214 = vadd.f32 %v1165, %v1213
        %1215 = vmatmul.bf16.gmra.mxu0 %v495
        %v1216 = vpop.f32.mrf.mxu0
        %v1217 = vadd.f32 %v1168, %v1216
        %v1218 = vpop.f32.mrf.mxu0
        %v1219 = vadd.f32 %v1170, %v1218
        %1220 = vmatmul.bf16.gmra.mxu0 %v497
        %v1221 = vpop.f32.mrf.mxu0
        %v1222 = vadd.f32 %v1173, %v1221
        %v1223 = vpop.f32.mrf.mxu0
        %v1224 = vadd.f32 %v1175, %v1223
        %1225 = vdwg.mxu0
        %1226 = vst [vmem:[#allocation2] sm:$0xff] %v893
        %1227 = vst [vmem:[#allocation2 + $0x8] sm:$0xff] %v991
        %1228 = vst [vmem:[#allocation2 + $0x10] sm:$0xff] %v1089
        %1229 = vst [vmem:[#allocation2 + $0x18] sm:$0xff] %v1187
        %1230 = vst [vmem:[#allocation2 + $0x20] sm:$0xff] %v895
        %1231 = vst [vmem:[#allocation2 + $0x28] sm:$0xff] %v993
        %1232 = vst [vmem:[#allocation2 + $0x30] sm:$0xff] %v1091
        %1233 = vst [vmem:[#allocation2 + $0x38] sm:$0xff] %v1189
        %1234 = vst [vmem:[#allocation2 + $0x40] sm:$0xff] %v898
        %1235 = vst [vmem:[#allocation2 + $0x48] sm:$0xff] %v996
        %1236 = vst [vmem:[#allocation2 + $0x50] sm:$0xff] %v1094
        %1237 = vst [vmem:[#allocation2 + $0x58] sm:$0xff] %v1192
        %1238 = vst [vmem:[#allocation2 + $0x60] sm:$0xff] %v900
        %1239 = vst [vmem:[#allocation2 + $0x68] sm:$0xff] %v998
        %1240 = vst [vmem:[#allocation2 + $0x70] sm:$0xff] %v1096
        %1241 = vst [vmem:[#allocation2 + $0x78] sm:$0xff] %v1194
        %1242 = vst [vmem:[#allocation2 + $0x80] sm:$0xff] %v903
        %1243 = vst [vmem:[#allocation2 + $0x88] sm:$0xff] %v1001
        %1244 = vst [vmem:[#allocation2 + $0x90] sm:$0xff] %v1099
        %1245 = vst [vmem:[#allocation2 + $0x98] sm:$0xff] %v1197
        %1246 = vst [vmem:[#allocation2 + $0xa0] sm:$0xff] %v905
        %1247 = vst [vmem:[#allocation2 + $0xa8] sm:$0xff] %v1003
        %1248 = vst [vmem:[#allocation2 + $0xb0] sm:$0xff] %v1101
        %1249 = vst [vmem:[#allocation2 + $0xb8] sm:$0xff] %v1199
        %1250 = vst [vmem:[#allocation2 + $0xc0] sm:$0xff] %v908
        %1251 = vst [vmem:[#allocation2 + $0xc8] sm:$0xff] %v1006
        %1252 = vst [vmem:[#allocation2 + $0xd0] sm:$0xff] %v1104
        %1253 = vst [vmem:[#allocation2 + $0xd8] sm:$0xff] %v1202
        %1254 = vst [vmem:[#allocation2 + $0xe0] sm:$0xff] %v910
        %1255 = vst [vmem:[#allocation2 + $0xe8] sm:$0xff] %v1008
        %1256 = vst [vmem:[#allocation2 + $0xf0] sm:$0xff] %v1106
        %1257 = vst [vmem:[#allocation2 + $0xf8] sm:$0xff] %v1204
        %1258 = vst [vmem:[#allocation2 + $0x100] sm:$0xff] %v913
        %1259 = vst [vmem:[#allocation2 + $0x108] sm:$0xff] %v1011
        %1260 = vst [vmem:[#allocation2 + $0x110] sm:$0xff] %v1109
        %1261 = vst [vmem:[#allocation2 + $0x118] sm:$0xff] %v1207
        %1262 = vst [vmem:[#allocation2 + $0x120] sm:$0xff] %v915
        %1263 = vst [vmem:[#allocation2 + $0x128] sm:$0xff] %v1013
        %1264 = vst [vmem:[#allocation2 + $0x130] sm:$0xff] %v1111
        %1265 = vst [vmem:[#allocation2 + $0x138] sm:$0xff] %v1209
        %1266 = vst [vmem:[#allocation2 + $0x140] sm:$0xff] %v918
        %1267 = vst [vmem:[#allocation2 + $0x148] sm:$0xff] %v1016
        %1268 = vst [vmem:[#allocation2 + $0x150] sm:$0xff] %v1114
        %1269 = vst [vmem:[#allocation2 + $0x158] sm:$0xff] %v1212
        %1270 = vst [vmem:[#allocation2 + $0x160] sm:$0xff] %v920
        %1271 = vst [vmem:[#allocation2 + $0x168] sm:$0xff] %v1018
        %1272 = vst [vmem:[#allocation2 + $0x170] sm:$0xff] %v1116
        %1273 = vst [vmem:[#allocation2 + $0x178] sm:$0xff] %v1214
        %1274 = vst [vmem:[#allocation2 + $0x180] sm:$0xff] %v923
        %1275 = vst [vmem:[#allocation2 + $0x188] sm:$0xff] %v1021
        %1276 = vst [vmem:[#allocation2 + $0x190] sm:$0xff] %v1119
        %1277 = vst [vmem:[#allocation2 + $0x198] sm:$0xff] %v1217
        %1278 = vst [vmem:[#allocation2 + $0x1a0] sm:$0xff] %v925
        %1279 = vst [vmem:[#allocation2 + $0x1a8] sm:$0xff] %v1023
        %1280 = vst [vmem:[#allocation2 + $0x1b0] sm:$0xff] %v1121
        %1281 = vst [vmem:[#allocation2 + $0x1b8] sm:$0xff] %v1219
        %1282 = vst [vmem:[#allocation2 + $0x1c0] sm:$0xff] %v928
        %1283 = vst [vmem:[#allocation2 + $0x1c8] sm:$0xff] %v1026
        %1284 = vst [vmem:[#allocation2 + $0x1d0] sm:$0xff] %v1124
        %1285 = vst [vmem:[#allocation2 + $0x1d8] sm:$0xff] %v1222
        %1286 = vst [vmem:[#allocation2 + $0x1e0] sm:$0xff] %v930
        %1287 = vst [vmem:[#allocation2 + $0x1e8] sm:$0xff] %v1028
        %1288 = vst [vmem:[#allocation2 + $0x1f0] sm:$0xff] %v1126
        %1289 = vst [vmem:[#allocation2 + $0x1f8] sm:$0xff] %v1224
        %v1290 = vld [vmem:[%s326] sm:$0xff]
        %v1291 = vld [vmem:[%s326 + $0x8] sm:$0xff]
        %v1292 = vld [vmem:[%s326 + $0x10] sm:$0xff]
        %v1293 = vld [vmem:[%s326 + $0x18] sm:$0xff]
        %v1294 = vld [vmem:[%s326 + $0x20] sm:$0xff]
        %v1295 = vld [vmem:[%s326 + $0x28] sm:$0xff]
        %v1296 = vld [vmem:[%s326 + $0x30] sm:$0xff]
        %v1297 = vld [vmem:[%s326 + $0x38] sm:$0xff]
        %v1298 = vld [vmem:[%s326 + $0x40] sm:$0xff]
        %v1299 = vld [vmem:[%s326 + $0x48] sm:$0xff]
        %v1300 = vld [vmem:[%s326 + $0x50] sm:$0xff]
        %v1301 = vld [vmem:[%s326 + $0x58] sm:$0xff]
        %v1302 = vld [vmem:[%s326 + $0x60] sm:$0xff]
        %v1303 = vld [vmem:[%s326 + $0x68] sm:$0xff]
        %v1304 = vld [vmem:[%s326 + $0x70] sm:$0xff]
        %v1305 = vld [vmem:[%s326 + $0x78] sm:$0xff]
        %v1306 = vld [vmem:[%s326 + $0x80] sm:$0xff]
        %v1307 = vld [vmem:[%s326 + $0x88] sm:$0xff]
        %v1308 = vld [vmem:[%s326 + $0x90] sm:$0xff]
        %v1309 = vld [vmem:[%s326 + $0x98] sm:$0xff]
        %v1310 = vld [vmem:[%s326 + $0xa0] sm:$0xff]
        %v1311 = vld [vmem:[%s326 + $0xa8] sm:$0xff]
        %v1312 = vld [vmem:[%s326 + $0xb0] sm:$0xff]
        %v1313 = vld [vmem:[%s326 + $0xb8] sm:$0xff]
        %v1314 = vld [vmem:[%s326 + $0xc0] sm:$0xff]
        %v1315 = vld [vmem:[%s326 + $0xc8] sm:$0xff]
        %v1316 = vld [vmem:[%s326 + $0xd0] sm:$0xff]
        %v1317 = vld [vmem:[%s326 + $0xd8] sm:$0xff]
        %v1318 = vld [vmem:[%s326 + $0xe0] sm:$0xff]
        %v1319 = vld [vmem:[%s326 + $0xe8] sm:$0xff]
        %v1320 = vld [vmem:[%s326 + $0xf0] sm:$0xff]
        %v1321 = vld [vmem:[%s326 + $0xf8] sm:$0xff]
        %s1322 = smul.u32 %s21, 2
        %s1323 = ssub.s32 0, %s1322
        %s1324 = smul.u32 %s20, %s1323
        %s1325 = sadd.s32 %s21, %s1324
        %s1326 = smul.u32 %s1325, 8
        %v1327 = vld [vmem:[%s4] sm:$0xff]
        %v1328 = vld [vmem:[%s4 + $0x8] sm:$0xff]
        %1329 = vset.pattern.permute.xlu0 0
        %1330 = vperm.xlu0 %1329, %v1327
        %v1331 = vpop.permute.xlu0 %1330
        %1332 = vset.pattern.permute.xlu0 0
        %1333 = vperm.xlu0 %1332, %v1328
        %v1334 = vpop.permute.xlu0 %1333
        loop: start=0, step=1, limit=8
        $region45: #{lstm_model_forward.7} parent=39 // loop_pre_header
          _
        $region46: #{lstm_model_forward.7} parent=39 // loop_header
          %s1336 = sphi 0, %s1340
          %p1337 = scmp.ge.s32.totalorder %s1336, 8
        $region47: #{lstm_model_forward.7} parent=39 // loop_header_branch
          %1339 = sbr.rel (%p1337) target = $region51
        $region48: #{lstm_model_forward.7} parent=39 // loop_body
          %s1341 = smul.u32 %s1336, 2
          %s1342 = ssub.s32 7, %s1341
          %s1343 = smul.u32 %s20, %s1342
          %s1344 = sadd.s32 %s1336, %s1343
          %s1345 = sadd.s32 %s1326, %s1344
          %s1346 = smul.u32 %s1344, 16
          %s1347 = sshra.s32 %s1346, 3
          %s1348 = sand.u32 %s1346, 7
          %s1349 = smul.u32 %s1347, 4
          %s1350 = smul.addr %s1349, 8
          %s1351 = scalar_lea.vmem [#allocation2], %s1350
          %v1352 = vld [vmem:[%s1351] sm:$0xff]
          %v1353 = vld [vmem:[%s1351 + $0x8] sm:$0xff]
          %v1354 = vld [vmem:[%s1351 + $0x10] sm:$0xff]
          %v1355 = vld [vmem:[%s1351 + $0x18] sm:$0xff]
          %v1356 = vld [vmem:[%s1351 + $0x20] sm:$0xff]
          %v1357 = vld [vmem:[%s1351 + $0x28] sm:$0xff]
          %v1358 = vld [vmem:[%s1351 + $0x30] sm:$0xff]
          %v1359 = vld [vmem:[%s1351 + $0x38] sm:$0xff]
          %v1360 = vld [vmem:[#allocation3] sm:$0xff]
          %v1361 = vld [vmem:[#allocation3 + $0x8] sm:$0xff]
          %v1362 = vpack.c.bf16 %v1361, %v1360
          %v1395 = vunpack.c.l.b16 %v1290
          %v1396 = vunpack.c.h.b16 %v1290
          %v1397 = vunpack.c.l.b16 %v1291
          %v1398 = vunpack.c.h.b16 %v1291
          %v1399 = vunpack.c.l.b16 %v1292
          %v1400 = vunpack.c.h.b16 %v1292
          %v1401 = vunpack.c.l.b16 %v1293
          %v1402 = vunpack.c.h.b16 %v1293
          %v1403 = vunpack.c.l.b16 %v1294
          %v1404 = vunpack.c.h.b16 %v1294
          %v1405 = vunpack.c.l.b16 %v1295
          %v1406 = vunpack.c.h.b16 %v1295
          %v1407 = vunpack.c.l.b16 %v1296
          %v1408 = vunpack.c.h.b16 %v1296
          %v1409 = vunpack.c.l.b16 %v1297
          %v1410 = vunpack.c.h.b16 %v1297
          %v1411 = vunpack.c.l.b16 %v1298
          %v1412 = vunpack.c.h.b16 %v1298
          %v1413 = vunpack.c.l.b16 %v1299
          %v1414 = vunpack.c.h.b16 %v1299
          %v1415 = vunpack.c.l.b16 %v1300
          %v1416 = vunpack.c.h.b16 %v1300
          %v1417 = vunpack.c.l.b16 %v1301
          %v1418 = vunpack.c.h.b16 %v1301
          %v1419 = vunpack.c.l.b16 %v1302
          %v1420 = vunpack.c.h.b16 %v1302
          %v1421 = vunpack.c.l.b16 %v1303
          %v1422 = vunpack.c.h.b16 %v1303
          %v1423 = vunpack.c.l.b16 %v1304
          %v1424 = vunpack.c.h.b16 %v1304
          %v1425 = vunpack.c.l.b16 %v1305
          %v1426 = vunpack.c.h.b16 %v1305
          %v1427 = vunpack.c.l.b16 %v1306
          %v1428 = vunpack.c.h.b16 %v1306
          %v1429 = vunpack.c.l.b16 %v1307
          %v1430 = vunpack.c.h.b16 %v1307
          %v1431 = vunpack.c.l.b16 %v1308
          %v1432 = vunpack.c.h.b16 %v1308
          %v1433 = vunpack.c.l.b16 %v1309
          %v1434 = vunpack.c.h.b16 %v1309
          %v1435 = vunpack.c.l.b16 %v1310
          %v1436 = vunpack.c.h.b16 %v1310
          %v1437 = vunpack.c.l.b16 %v1311
          %v1438 = vunpack.c.h.b16 %v1311
          %v1439 = vunpack.c.l.b16 %v1312
          %v1440 = vunpack.c.h.b16 %v1312
          %v1441 = vunpack.c.l.b16 %v1313
          %v1442 = vunpack.c.h.b16 %v1313
          %v1443 = vunpack.c.l.b16 %v1314
          %v1444 = vunpack.c.h.b16 %v1314
          %v1445 = vunpack.c.l.b16 %v1315
          %v1446 = vunpack.c.h.b16 %v1315
          %v1447 = vunpack.c.l.b16 %v1316
          %v1448 = vunpack.c.h.b16 %v1316
          %v1449 = vunpack.c.l.b16 %v1317
          %v1450 = vunpack.c.h.b16 %v1317
          %v1451 = vunpack.c.l.b16 %v1318
          %v1452 = vunpack.c.h.b16 %v1318
          %v1453 = vunpack.c.l.b16 %v1319
          %v1454 = vunpack.c.h.b16 %v1319
          %v1455 = vunpack.c.l.b16 %v1320
          %v1456 = vunpack.c.h.b16 %v1320
          %v1457 = vunpack.c.l.b16 %v1321
          %v1458 = vunpack.c.h.b16 %v1321
          %v1459 = vpack.c.b16 %v1399, %v1395
          %v1460 = vpack.c.b16 %v1400, %v1396
          %v1461 = vpack.c.b16 %v1401, %v1397
          %v1462 = vpack.c.b16 %v1402, %v1398
          %v1463 = vpack.c.b16 %v1407, %v1403
          %v1464 = vpack.c.b16 %v1408, %v1404
          %v1465 = vpack.c.b16 %v1409, %v1405
          %v1466 = vpack.c.b16 %v1410, %v1406
          %v1467 = vpack.c.b16 %v1415, %v1411
          %v1468 = vpack.c.b16 %v1416, %v1412
          %v1469 = vpack.c.b16 %v1417, %v1413
          %v1470 = vpack.c.b16 %v1418, %v1414
          %v1471 = vpack.c.b16 %v1423, %v1419
          %v1472 = vpack.c.b16 %v1424, %v1420
          %v1473 = vpack.c.b16 %v1425, %v1421
          %v1474 = vpack.c.b16 %v1426, %v1422
          %v1475 = vpack.c.b16 %v1431, %v1427
          %v1476 = vpack.c.b16 %v1432, %v1428
          %v1477 = vpack.c.b16 %v1433, %v1429
          %v1478 = vpack.c.b16 %v1434, %v1430
          %v1479 = vpack.c.b16 %v1439, %v1435
          %v1480 = vpack.c.b16 %v1440, %v1436
          %v1481 = vpack.c.b16 %v1441, %v1437
          %v1482 = vpack.c.b16 %v1442, %v1438
          %v1483 = vpack.c.b16 %v1447, %v1443
          %v1484 = vpack.c.b16 %v1448, %v1444
          %v1485 = vpack.c.b16 %v1449, %v1445
          %v1486 = vpack.c.b16 %v1450, %v1446
          %v1487 = vpack.c.b16 %v1455, %v1451
          %v1488 = vpack.c.b16 %v1456, %v1452
          %v1489 = vpack.c.b16 %v1457, %v1453
          %v1490 = vpack.c.b16 %v1458, %v1454
          %1523 = vmatpush.bf16.msra.mxu0 %v1487
          %1524 = vmatpush.bf16.msra.mxu0 %v1483
          %1525 = vmatpush.bf16.msra.mxu0 %v1479
          %1526 = vmatpush.bf16.msra.mxu0 %v1475
          %1527 = vmatpush.bf16.msra.mxu0 %v1471
          %1528 = vmatpush.bf16.msra.mxu0 %v1467
          %1529 = vmatpush.bf16.msra.mxu0 %v1463
          %1530 = vmatpush.bf16.msra.mxu0 %v1459
          %1531 = vmatmul.bf16.gmra.mxu0 %v1362
          %v1532 = vpop.f32.mrf.mxu0
          %v1533 = vadd.f32 0.0, %v1532
          %v1534 = vpop.f32.mrf.mxu0
          %v1535 = vadd.f32 0.0, %v1534
          %1536 = vdwg.mxu0
          %1537 = vmatpush.bf16.msra.mxu0 %v1488
          %1538 = vmatpush.bf16.msra.mxu0 %v1484
          %1539 = vmatpush.bf16.msra.mxu0 %v1480
          %1540 = vmatpush.bf16.msra.mxu0 %v1476
          %1541 = vmatpush.bf16.msra.mxu0 %v1472
          %1542 = vmatpush.bf16.msra.mxu0 %v1468
          %1543 = vmatpush.bf16.msra.mxu0 %v1464
          %1544 = vmatpush.bf16.msra.mxu0 %v1460
          %1545 = vmatmul.bf16.gmra.mxu0 %v1362
          %v1546 = vpop.f32.mrf.mxu0
          %v1547 = vadd.f32 0.0, %v1546
          %v1548 = vpop.f32.mrf.mxu0
          %v1549 = vadd.f32 0.0, %v1548
          %1550 = vdwg.mxu0
          %1551 = vmatpush.bf16.msra.mxu0 %v1489
          %1552 = vmatpush.bf16.msra.mxu0 %v1485
          %1553 = vmatpush.bf16.msra.mxu0 %v1481
          %1554 = vmatpush.bf16.msra.mxu0 %v1477
          %1555 = vmatpush.bf16.msra.mxu0 %v1473
          %1556 = vmatpush.bf16.msra.mxu0 %v1469
          %1557 = vmatpush.bf16.msra.mxu0 %v1465
          %1558 = vmatpush.bf16.msra.mxu0 %v1461
          %1559 = vmatmul.bf16.gmra.mxu0 %v1362
          %v1560 = vpop.f32.mrf.mxu0
          %v1561 = vadd.f32 0.0, %v1560
          %v1562 = vpop.f32.mrf.mxu0
          %v1563 = vadd.f32 0.0, %v1562
          %1564 = vdwg.mxu0
          %1565 = vmatpush.bf16.msra.mxu0 %v1490
          %1566 = vmatpush.bf16.msra.mxu0 %v1486
          %1567 = vmatpush.bf16.msra.mxu0 %v1482
          %1568 = vmatpush.bf16.msra.mxu0 %v1478
          %1569 = vmatpush.bf16.msra.mxu0 %v1474
          %1570 = vmatpush.bf16.msra.mxu0 %v1470
          %1571 = vmatpush.bf16.msra.mxu0 %v1466
          %1572 = vmatpush.bf16.msra.mxu0 %v1462
          %1573 = vmatmul.bf16.gmra.mxu0 %v1362
          %v1574 = vpop.f32.mrf.mxu0
          %v1575 = vadd.f32 0.0, %v1574
          %v1576 = vpop.f32.mrf.mxu0
          %v1577 = vadd.f32 0.0, %v1576
          %1578 = vdwg.mxu0
          %v1579 = vadd.f32 %v1352, %v1533
          %v1580 = vadd.f32 %v1353, %v1547
          %v1581 = vadd.f32 %v1354, %v1561
          %v1582 = vadd.f32 %v1355, %v1575
          %v1583 = vadd.f32 %v1356, %v1535
          %v1584 = vadd.f32 %v1357, %v1549
          %v1585 = vadd.f32 %v1358, %v1563
          %v1586 = vadd.f32 %v1359, %v1577
          %v1587 = vxor.u32 %v1579, 2147483648
          %v1588 = vxor.u32 %v1583, 2147483648
          %v1589 = vmul.f32 %v1587, 1.442695
          %v1590 = vpow.pop %v1589
          %v1591 = vmul.f32 %v1588, 1.442695
          %v1592 = vpow.pop %v1591
          %v1593 = vadd.f32 %v1590, 1.0
          %v1594 = vadd.f32 %v1592, 1.0
          %v1595 = vrcp.pop %v1593
          %v1596 = vmul.f32 %v1593, %v1595
          %v1597 = vsub.f32 1.0, %v1596
          %v1598 = vmul.f32 %v1595, %v1597
          %v1599 = vadd.f32 %v1595, %v1598
          %vm1600 = vweird.f32 %v1593
          %vm1601 = vweird.f32 %v1595
          %vm1602 = vmor %vm1600, %vm1601
          %v1603 = vsel %vm1602, %v1595, %v1599
          %v1604 = vand.u32 2147483647, %v1593
          %vm1605 = vcmp.eq.f32.partialorder %v1604, 8.507059e+37
          %v1606 = vand.u32 %v1593, 2147483648
          %v1607 = vor.u32 1.1754944e-38, %v1606
          %v1608 = vsel %vm1605, %v1607, %v1603
          %v1609 = vmul.f32 1.0, %v1608
          %v1610 = vrcp.pop %v1594
          %v1611 = vmul.f32 %v1594, %v1610
          %v1612 = vsub.f32 1.0, %v1611
          %v1613 = vmul.f32 %v1610, %v1612
          %v1614 = vadd.f32 %v1610, %v1613
          %vm1615 = vweird.f32 %v1594
          %vm1616 = vweird.f32 %v1610
          %vm1617 = vmor %vm1615, %vm1616
          %v1618 = vsel %vm1617, %v1610, %v1614
          %v1619 = vand.u32 2147483647, %v1594
          %vm1620 = vcmp.eq.f32.partialorder %v1619, 8.507059e+37
          %v1621 = vand.u32 %v1594, 2147483648
          %v1622 = vor.u32 1.1754944e-38, %v1621
          %v1623 = vsel %vm1620, %v1622, %v1618
          %v1624 = vmul.f32 1.0, %v1623
          %v1625 = vxor.u32 %v1580, 2147483648
          %v1626 = vxor.u32 %v1584, 2147483648
          %v1627 = vmul.f32 %v1625, 1.442695
          %v1628 = vpow.pop %v1627
          %v1629 = vmul.f32 %v1626, 1.442695
          %v1630 = vpow.pop %v1629
          %v1631 = vadd.f32 %v1628, 1.0
          %v1632 = vadd.f32 %v1630, 1.0
          %v1633 = vrcp.pop %v1631
          %v1634 = vmul.f32 %v1631, %v1633
          %v1635 = vsub.f32 1.0, %v1634
          %v1636 = vmul.f32 %v1633, %v1635
          %v1637 = vadd.f32 %v1633, %v1636
          %vm1638 = vweird.f32 %v1631
          %vm1639 = vweird.f32 %v1633
          %vm1640 = vmor %vm1638, %vm1639
          %v1641 = vsel %vm1640, %v1633, %v1637
          %v1642 = vand.u32 2147483647, %v1631
          %vm1643 = vcmp.eq.f32.partialorder %v1642, 8.507059e+37
          %v1644 = vand.u32 %v1631, 2147483648
          %v1645 = vor.u32 1.1754944e-38, %v1644
          %v1646 = vsel %vm1643, %v1645, %v1641
          %v1647 = vmul.f32 1.0, %v1646
          %v1648 = vrcp.pop %v1632
          %v1649 = vmul.f32 %v1632, %v1648
          %v1650 = vsub.f32 1.0, %v1649
          %v1651 = vmul.f32 %v1648, %v1650
          %v1652 = vadd.f32 %v1648, %v1651
          %vm1653 = vweird.f32 %v1632
          %vm1654 = vweird.f32 %v1648
          %vm1655 = vmor %vm1653, %vm1654
          %v1656 = vsel %vm1655, %v1648, %v1652
          %v1657 = vand.u32 2147483647, %v1632
          %vm1658 = vcmp.eq.f32.partialorder %v1657, 8.507059e+37
          %v1659 = vand.u32 %v1632, 2147483648
          %v1660 = vor.u32 1.1754944e-38, %v1659
          %v1661 = vsel %vm1658, %v1660, %v1656
          %v1662 = vmul.f32 1.0, %v1661
          %v1663 = vtanh.pop %v1581
          %v1664 = vtanh.pop %v1585
          %v1665 = vxor.u32 %v1582, 2147483648
          %v1666 = vxor.u32 %v1586, 2147483648
          %v1667 = vmul.f32 %v1665, 1.442695
          %v1668 = vpow.pop %v1667
          %v1669 = vmul.f32 %v1666, 1.442695
          %v1670 = vpow.pop %v1669
          %v1671 = vadd.f32 %v1668, 1.0
          %v1672 = vadd.f32 %v1670, 1.0
          %v1673 = vrcp.pop %v1671
          %v1674 = vmul.f32 %v1671, %v1673
          %v1675 = vsub.f32 1.0, %v1674
          %v1676 = vmul.f32 %v1673, %v1675
          %v1677 = vadd.f32 %v1673, %v1676
          %vm1678 = vweird.f32 %v1671
          %vm1679 = vweird.f32 %v1673
          %vm1680 = vmor %vm1678, %vm1679
          %v1681 = vsel %vm1680, %v1673, %v1677
          %v1682 = vand.u32 2147483647, %v1671
          %vm1683 = vcmp.eq.f32.partialorder %v1682, 8.507059e+37
          %v1684 = vand.u32 %v1671, 2147483648
          %v1685 = vor.u32 1.1754944e-38, %v1684
          %v1686 = vsel %vm1683, %v1685, %v1681
          %v1687 = vmul.f32 1.0, %v1686
          %v1688 = vrcp.pop %v1672
          %v1689 = vmul.f32 %v1672, %v1688
          %v1690 = vsub.f32 1.0, %v1689
          %v1691 = vmul.f32 %v1688, %v1690
          %v1692 = vadd.f32 %v1688, %v1691
          %vm1693 = vweird.f32 %v1672
          %vm1694 = vweird.f32 %v1688
          %vm1695 = vmor %vm1693, %vm1694
          %v1696 = vsel %vm1695, %v1688, %v1692
          %v1697 = vand.u32 2147483647, %v1672
          %vm1698 = vcmp.eq.f32.partialorder %v1697, 8.507059e+37
          %v1699 = vand.u32 %v1672, 2147483648
          %v1700 = vor.u32 1.1754944e-38, %v1699
          %v1701 = vsel %vm1698, %v1700, %v1696
          %v1702 = vmul.f32 1.0, %v1701
          %v1703 = vld [vmem:[#allocation4] sm:$0xff]
          %v1704 = vld [vmem:[#allocation4 + $0x8] sm:$0xff]
          %v1705 = vmul.f32 %v1647, %v1703
          %v1706 = vmul.f32 %v1662, %v1704
          %v1707 = vmul.f32 %v1609, %v1663
          %v1708 = vmul.f32 %v1624, %v1664
          %v1709 = vadd.f32 %v1705, %v1707
          %v1710 = vadd.f32 %v1706, %v1708
          %v1711 = vtanh.pop %v1709
          %v1712 = vtanh.pop %v1710
          %v1713 = vmul.f32 %v1687, %v1711
          %v1714 = vmul.f32 %v1702, %v1712
          %v1715 = vstv %s1345
          %vm1716 = vcmp.lt.s32.totalorder %v1715, %v1331
          %vm1717 = vcmp.lt.s32.totalorder %v1715, %v1334
          %v1718 = vsel %vm1716, %v1713, 0.0
          %v1719 = vsel %vm1717, %v1714, 0.0
          %v1720 = vpack.c.bf16 %v1718, %v1718
          %v1721 = vpack.c.bf16 %v1719, %v1719
          %s1722 = smul.u32 %s1344, 2
          %s1723 = smul.addr %s1722, 4
          %s1724 = scalar_lea.vmem %s301, %s1723 [#allocation5]
          %1725 = vst [vmem:[%s1724] sm:$0xf] %v1720
          %1726 = vst [vmem:[%s1724 + $0x4] sm:$0xf] %v1721
          %v1727 = vld [vmem:[#allocation3] sm:$0xff]
          %v1728 = vld [vmem:[#allocation3 + $0x8] sm:$0xff]
          %v1729 = vsel %vm1716, %v1713, %v1727
          %v1730 = vsel %vm1717, %v1714, %v1728
          %1731 = vst [vmem:[#allocation3] sm:$0xff] %v1729
          %1732 = vst [vmem:[#allocation3 + $0x8] sm:$0xff] %v1730
          %v1733 = vld [vmem:[#allocation4] sm:$0xff]
          %v1734 = vld [vmem:[#allocation4 + $0x8] sm:$0xff]
          %v1735 = vsel %vm1716, %v1709, %v1733
          %v1736 = vsel %vm1717, %v1710, %v1734
          %1737 = vst [vmem:[#allocation4] sm:$0xff] %v1735
          %1738 = vst [vmem:[#allocation4 + $0x8] sm:$0xff] %v1736
        $region49: #{lstm_model_forward.7} parent=39 // loop_footer
          %s1340 = sadd.s32 1, %s1336
        $region50: #{lstm_model_forward.7} parent=39 // loop_footer_branch
          %1335 = sbr.rel target = $region46
        $region51: #{lstm_model_forward.7} parent=39 // loop_exit
          _
        %s1739 = sand.u32 %s179, 1
        %s1740 = sand.u32 %s179, 1
        %s1741 = smul.addr %s1740, 64
        %s1742 = scalar_lea.vmem [#allocation5], %s1741
        // Predicated region
        $region52: #{lstm_model_forward.7} parent=39 // pred_check
          %p1743 = pneg %p189
        $region53: #{lstm_model_forward.7} parent=39 // pred_check_branch
          %1745 = sbr.rel (%p1743) target = $region55
        $region54: #{lstm_model_forward.7} parent=39 // pred_region
          %s1746 = smul.u32 %s21, 2
          %s1747 = ssub.s32 0, %s1746
          %s1748 = smul.u32 %s20, %s1747
          %s1749 = sadd.s32 %s21, %s1748
          %s1750 = smul.u32 8, %s1749
          %s1751 = smul.addr %s1750, 4
          %s1752 = sadd.s32 %s20, %s1751
          %s1753 = smul.addr %s1752, 4
          %s1754 = scalar_lea.vmem %s5, %s1753
          // Predicated region
          $region56: #{lstm_model_forward.7} parent=54 // pred_check
            _
          $region57: #{lstm_model_forward.7} parent=54 // pred_check_branch
            %1756 = sbr.rel (0) target = $region59
          $region58: #{lstm_model_forward.7} parent=54 // pred_region
            // Predicated region
            $region60: #{lstm_model_forward.7} parent=58 // pred_check
              _
            $region61: #{lstm_model_forward.7} parent=58 // pred_check_branch
              %1758 = sbr.rel target = $region63
            $region62: #{lstm_model_forward.7} parent=58 // pred_region
              // Predicated region
              $region75: #{lstm_model_forward.7} parent=62 // pred_check
                _
              $region76: #{lstm_model_forward.7} parent=62 // pred_check_branch
                %1804 = sbr.rel (0) target = $region78
              $region77: #{lstm_model_forward.7} parent=62 // pred_region
                loop: start=0, step=1, limit=1
                $region79: #{lstm_model_forward.7} parent=77 // loop_pre_header
                  _
                $region80: #{lstm_model_forward.7} parent=77 // loop_header
                  %s1806 = sphi 0, %s1810
                  %p1807 = scmp.ge.s32.totalorder %s1806, 1
                  %s1811 = sphi %s1742, %s1742
                  %s1812 = sphi %s1754, %s1754
                $region81: #{lstm_model_forward.7} parent=77 // loop_header_branch
                  %1809 = sbr.rel (%p1807) target = $region85
                $region82: #{lstm_model_forward.7} parent=77 // loop_body
                  _
                $region83: #{lstm_model_forward.7} parent=77 // loop_footer
                  %s1810 = sadd.s32 1, %s1806
                $region84: #{lstm_model_forward.7} parent=77 // loop_footer_branch
                  %1805 = sbr.rel target = $region80
                $region85: #{lstm_model_forward.7} parent=77 // loop_exit
                  _
                %s1814 = ssub.s32 16, 1
                loop: start=0, step=1, limit=1
                $region86: #{lstm_model_forward.7} parent=77 // loop_pre_header
                  _
                $region87: #{lstm_model_forward.7} parent=77 // loop_header
                  %s1816 = sphi 0, %s1820
                  %p1817 = scmp.ge.s32.totalorder %s1816, 1
                  %s1821 = sphi %s1742, %s1742
                  %s1822 = sphi %s1754, %s1754
                $region88: #{lstm_model_forward.7} parent=77 // loop_header_branch
                  %1819 = sbr.rel (%p1817) target = $region92
                $region89: #{lstm_model_forward.7} parent=77 // loop_body
                  %v1823 = vld [vmem:[%s1821] sm:%s1814]
                  %1824 = vst [vmem:[%s1822] sm:%s1814] %v1823
                  %v1825 = vld [vmem:[%s1821 + $0x4] sm:%s1814]
                  %1826 = vst [vmem:[%s1822 + $0x8] sm:%s1814] %v1825
                  %v1827 = vld [vmem:[%s1821 + $0x8] sm:%s1814]
                  %1828 = vst [vmem:[%s1822 + $0x10] sm:%s1814] %v1827
                  %v1829 = vld [vmem:[%s1821 + $0xc] sm:%s1814]
                  %1830 = vst [vmem:[%s1822 + $0x18] sm:%s1814] %v1829
                  %v1831 = vld [vmem:[%s1821 + $0x10] sm:%s1814]
                  %1832 = vst [vmem:[%s1822 + $0x20] sm:%s1814] %v1831
                  %v1833 = vld [vmem:[%s1821 + $0x14] sm:%s1814]
                  %1834 = vst [vmem:[%s1822 + $0x28] sm:%s1814] %v1833
                  %v1835 = vld [vmem:[%s1821 + $0x18] sm:%s1814]
                  %1836 = vst [vmem:[%s1822 + $0x30] sm:%s1814] %v1835
                  %v1837 = vld [vmem:[%s1821 + $0x1c] sm:%s1814]
                  %1838 = vst [vmem:[%s1822 + $0x38] sm:%s1814] %v1837
                  %v1839 = vld [vmem:[%s1821 + $0x20] sm:%s1814]
                  %1840 = vst [vmem:[%s1822 + $0x40] sm:%s1814] %v1839
                  %v1841 = vld [vmem:[%s1821 + $0x24] sm:%s1814]
                  %1842 = vst [vmem:[%s1822 + $0x48] sm:%s1814] %v1841
                  %v1843 = vld [vmem:[%s1821 + $0x28] sm:%s1814]
                  %1844 = vst [vmem:[%s1822 + $0x50] sm:%s1814] %v1843
                  %v1845 = vld [vmem:[%s1821 + $0x2c] sm:%s1814]
                  %1846 = vst [vmem:[%s1822 + $0x58] sm:%s1814] %v1845
                  %v1847 = vld [vmem:[%s1821 + $0x30] sm:%s1814]
                  %1848 = vst [vmem:[%s1822 + $0x60] sm:%s1814] %v1847
                  %v1849 = vld [vmem:[%s1821 + $0x34] sm:%s1814]
                  %1850 = vst [vmem:[%s1822 + $0x68] sm:%s1814] %v1849
                  %v1851 = vld [vmem:[%s1821 + $0x38] sm:%s1814]
                  %1852 = vst [vmem:[%s1822 + $0x70] sm:%s1814] %v1851
                  %v1853 = vld [vmem:[%s1821 + $0x3c] sm:%s1814]
                  %1854 = vst [vmem:[%s1822 + $0x78] sm:%s1814] %v1853
                $region90: #{lstm_model_forward.7} parent=77 // loop_footer
                  %s1820 = sadd.s32 1, %s1816
                $region91: #{lstm_model_forward.7} parent=77 // loop_footer_branch
                  %1815 = sbr.rel target = $region87
                $region92: #{lstm_model_forward.7} parent=77 // loop_exit
                  _
              $region78: #{lstm_model_forward.7} parent=62 // pred_fallthru
                _
            $region63: #{lstm_model_forward.7} parent=58 // pred_fallthru
              _
            // Predicated region
            $region64: #{lstm_model_forward.7} parent=58 // pred_check
              _
            $region65: #{lstm_model_forward.7} parent=58 // pred_check_branch
              %1760 = sbr.rel (0) target = $region67
            $region66: #{lstm_model_forward.7} parent=58 // pred_region
              %s1762 = ssub.s32 16, 1
              loop: start=0, step=1, limit=1
              $region68: #{lstm_model_forward.7} parent=66 // loop_pre_header
                _
              $region69: #{lstm_model_forward.7} parent=66 // loop_header
                %s1764 = sphi 0, %s1768
                %p1765 = scmp.ge.s32.totalorder %s1764, 1
                %s1769 = sphi %s1742, %s1742
                %s1770 = sphi %s1754, %s1754
              $region70: #{lstm_model_forward.7} parent=66 // loop_header_branch
                %1767 = sbr.rel (%p1765) target = $region74
              $region71: #{lstm_model_forward.7} parent=66 // loop_body
                %v1771 = vld [vmem:[%s1769] sm:%s1762]
                %1772 = vst [vmem:[%s1770] sm:%s1762] %v1771
                %v1773 = vld [vmem:[%s1769 + $0x4] sm:%s1762]
                %1774 = vst [vmem:[%s1770 + $0x8] sm:%s1762] %v1773
                %v1775 = vld [vmem:[%s1769 + $0x8] sm:%s1762]
                %1776 = vst [vmem:[%s1770 + $0x10] sm:%s1762] %v1775
                %v1777 = vld [vmem:[%s1769 + $0xc] sm:%s1762]
                %1778 = vst [vmem:[%s1770 + $0x18] sm:%s1762] %v1777
                %v1779 = vld [vmem:[%s1769 + $0x10] sm:%s1762]
                %1780 = vst [vmem:[%s1770 + $0x20] sm:%s1762] %v1779
                %v1781 = vld [vmem:[%s1769 + $0x14] sm:%s1762]
                %1782 = vst [vmem:[%s1770 + $0x28] sm:%s1762] %v1781
                %v1783 = vld [vmem:[%s1769 + $0x18] sm:%s1762]
                %1784 = vst [vmem:[%s1770 + $0x30] sm:%s1762] %v1783
                %v1785 = vld [vmem:[%s1769 + $0x1c] sm:%s1762]
                %1786 = vst [vmem:[%s1770 + $0x38] sm:%s1762] %v1785
                %v1787 = vld [vmem:[%s1769 + $0x20] sm:%s1762]
                %1788 = vst [vmem:[%s1770 + $0x40] sm:%s1762] %v1787
                %v1789 = vld [vmem:[%s1769 + $0x24] sm:%s1762]
                %1790 = vst [vmem:[%s1770 + $0x48] sm:%s1762] %v1789
                %v1791 = vld [vmem:[%s1769 + $0x28] sm:%s1762]
                %1792 = vst [vmem:[%s1770 + $0x50] sm:%s1762] %v1791
                %v1793 = vld [vmem:[%s1769 + $0x2c] sm:%s1762]
                %1794 = vst [vmem:[%s1770 + $0x58] sm:%s1762] %v1793
                %v1795 = vld [vmem:[%s1769 + $0x30] sm:%s1762]
                %1796 = vst [vmem:[%s1770 + $0x60] sm:%s1762] %v1795
                %v1797 = vld [vmem:[%s1769 + $0x34] sm:%s1762]
                %1798 = vst [vmem:[%s1770 + $0x68] sm:%s1762] %v1797
                %v1799 = vld [vmem:[%s1769 + $0x38] sm:%s1762]
                %1800 = vst [vmem:[%s1770 + $0x70] sm:%s1762] %v1799
                %v1801 = vld [vmem:[%s1769 + $0x3c] sm:%s1762]
                %1802 = vst [vmem:[%s1770 + $0x78] sm:%s1762] %v1801
              $region72: #{lstm_model_forward.7} parent=66 // loop_footer
                %s1768 = sadd.s32 1, %s1764
              $region73: #{lstm_model_forward.7} parent=66 // loop_footer_branch
                %1763 = sbr.rel target = $region69
              $region74: #{lstm_model_forward.7} parent=66 // loop_exit
                _
            $region67: #{lstm_model_forward.7} parent=58 // pred_fallthru
              _
          $region59: #{lstm_model_forward.7} parent=54 // pred_fallthru
            _
          %1855 = vnop
        $region55: #{lstm_model_forward.7} parent=39 // pred_fallthru
          _
      $region40: #{lstm_model_forward.7} parent=5 // pred_fallthru
        _
      %p1856 = scmp.le.s32.totalorder 2, %s11
      // Predicated region
      $region93: #{lstm_model_forward.7} parent=5 // pred_check
        %p1857 = pneg %p1856
      $region94: #{lstm_model_forward.7} parent=5 // pred_check_branch
        %1859 = sbr.rel (%p1857) target = $region96
      $region95: #{lstm_model_forward.7} parent=5 // pred_region
        %s1860 = ssub.s32 %s11, 2
        // Predicated region
        $region97: #{lstm_model_forward.7} parent=95 // pred_check
          %p1861 = pneg %p195
        $region98: #{lstm_model_forward.7} parent=95 // pred_check_branch
          %1863 = sbr.rel (%p1861) target = $region100
        $region99: #{lstm_model_forward.7} parent=95 // pred_region
          %s1864 = sand.u32 %s180, 1
          %s1865 = sand.u32 %s180, 1
          %s1866 = smul.addr %s1865, 64
          %s1867 = scalar_lea.vmem [#allocation5], %s1866
        $region100: #{lstm_model_forward.7} parent=95 // pred_fallthru
          _
      $region96: #{lstm_model_forward.7} parent=5 // pred_fallthru
        _
    $region6: #{lstm_model_forward.7} parent=1 // loop_footer
      %s15 = sadd.s32 1, %s11
    $region7: #{lstm_model_forward.7} parent=1 // loop_footer_branch
      %10 = sbr.rel target = $region3
    $region8: #{lstm_model_forward.7} parent=1 // loop_exit
      _

// kernel: lstm_model_forward.9
$region0: #{lstm_model_forward.9}
  #allocation0 [shape = 'u32[]', space=smem, size = 0x4, offset = 0x4, fixed_abs, tag = 'smem constant byte address 0x4 - core index']
  #allocation1 [shape = 'u32[72,128]{1,0:T(1,128)}', space=vmem, size = 0x9000, scoped, tag = 'internal scratch']
  %s0 = inlined_call_operand.vmem [shape: bf16[16,256], index: 0, kind: input, shape index: {}]
  %s1 = inlined_call_operand.vmem [shape: bf16[256,1024], index: 1, kind: input, shape index: {}]
  %s2 = inlined_call_operand.vmem [shape: f32[1,1024], index: 2, kind: input, shape index: {}]
  %s3 = inlined_call_operand.vmem [shape: bf16[1024,128], index: 3, kind: input, shape index: {}]
  %s4 = inlined_call_operand.vmem [shape: f32[16,128], index: 4, kind: output, shape index: {}]
  %s5 = sld [smem:[#allocation0]]
  $region26: #{lstm_model_forward.9} parent=0
    _
  %s7 = ssub.s32 1, %s5
  %s8 = scalar_select 0, %s7, %s5
  // Predicated region
  $region2: #{lstm_model_forward.9} parent=0 // pred_check
    _
  $region3: #{lstm_model_forward.9} parent=0 // pred_check_branch
    %10 = sbr.rel (0) target = $region5
  $region4: #{lstm_model_forward.9} parent=0 // pred_region
    _
  $region5: #{lstm_model_forward.9} parent=0 // pred_fallthru
    _
  // Predicated region
  $region6: #{lstm_model_forward.9} parent=0 // pred_check
    _
  $region7: #{lstm_model_forward.9} parent=0 // pred_check_branch
    %12 = sbr.rel (0) target = $region9
  $region8: #{lstm_model_forward.9} parent=0 // pred_region
    _
  $region9: #{lstm_model_forward.9} parent=0 // pred_fallthru
    _
  // Predicated region
  $region10: #{lstm_model_forward.9} parent=0 // pred_check
    _
  $region11: #{lstm_model_forward.9} parent=0 // pred_check_branch
    %14 = sbr.rel (0) target = $region13
  $region12: #{lstm_model_forward.9} parent=0 // pred_region
    _
  $region13: #{lstm_model_forward.9} parent=0 // pred_fallthru
    _
  // Predicated region
  $region14: #{lstm_model_forward.9} parent=0 // pred_check
    _
  $region15: #{lstm_model_forward.9} parent=0 // pred_check_branch
    %16 = sbr.rel (0) target = $region17
  $region16: #{lstm_model_forward.9} parent=0 // pred_region
    _
  $region17: #{lstm_model_forward.9} parent=0 // pred_fallthru
    _
  %v17 = vld [vmem:[%s0] sm:$0xff]
  %v18 = vld [vmem:[%s0 + $0x8] sm:$0xff]
  %v19 = vld [vmem:[%s1] sm:$0xff]
  %v20 = vld [vmem:[%s1 + $0x8] sm:$0xff]
  %v21 = vld [vmem:[%s1 + $0x10] sm:$0xff]
  %v22 = vld [vmem:[%s1 + $0x18] sm:$0xff]
  %v23 = vld [vmem:[%s1 + $0x20] sm:$0xff]
  %v24 = vld [vmem:[%s1 + $0x28] sm:$0xff]
  %v25 = vld [vmem:[%s1 + $0x30] sm:$0xff]
  %v26 = vld [vmem:[%s1 + $0x38] sm:$0xff]
  %v27 = vld [vmem:[%s1 + $0x40] sm:$0xff]
  %v28 = vld [vmem:[%s1 + $0x48] sm:$0xff]
  %v29 = vld [vmem:[%s1 + $0x50] sm:$0xff]
  %v30 = vld [vmem:[%s1 + $0x58] sm:$0xff]
  %v31 = vld [vmem:[%s1 + $0x60] sm:$0xff]
  %v32 = vld [vmem:[%s1 + $0x68] sm:$0xff]
  %v33 = vld [vmem:[%s1 + $0x70] sm:$0xff]
  %v34 = vld [vmem:[%s1 + $0x78] sm:$0xff]
  %v35 = vld [vmem:[%s1 + $0x80] sm:$0xff]
  %v36 = vld [vmem:[%s1 + $0x88] sm:$0xff]
  %v37 = vld [vmem:[%s1 + $0x90] sm:$0xff]
  %v38 = vld [vmem:[%s1 + $0x98] sm:$0xff]
  %v39 = vld [vmem:[%s1 + $0xa0] sm:$0xff]
  %v40 = vld [vmem:[%s1 + $0xa8] sm:$0xff]
  %v41 = vld [vmem:[%s1 + $0xb0] sm:$0xff]
  %v42 = vld [vmem:[%s1 + $0xb8] sm:$0xff]
  %v43 = vld [vmem:[%s1 + $0xc0] sm:$0xff]
  %v44 = vld [vmem:[%s1 + $0xc8] sm:$0xff]
  %v45 = vld [vmem:[%s1 + $0xd0] sm:$0xff]
  %v46 = vld [vmem:[%s1 + $0xd8] sm:$0xff]
  %v47 = vld [vmem:[%s1 + $0xe0] sm:$0xff]
  %v48 = vld [vmem:[%s1 + $0xe8] sm:$0xff]
  %v49 = vld [vmem:[%s1 + $0xf0] sm:$0xff]
  %v50 = vld [vmem:[%s1 + $0xf8] sm:$0xff]
  %v51 = vld [vmem:[%s1 + $0x100] sm:$0xff]
  %v52 = vld [vmem:[%s1 + $0x108] sm:$0xff]
  %v53 = vld [vmem:[%s1 + $0x110] sm:$0xff]
  %v54 = vld [vmem:[%s1 + $0x118] sm:$0xff]
  %v55 = vld [vmem:[%s1 + $0x120] sm:$0xff]
  %v56 = vld [vmem:[%s1 + $0x128] sm:$0xff]
  %v57 = vld [vmem:[%s1 + $0x130] sm:$0xff]
  %v58 = vld [vmem:[%s1 + $0x138] sm:$0xff]
  %v59 = vld [vmem:[%s1 + $0x140] sm:$0xff]
  %v60 = vld [vmem:[%s1 + $0x148] sm:$0xff]
  %v61 = vld [vmem:[%s1 + $0x150] sm:$0xff]
  %v62 = vld [vmem:[%s1 + $0x158] sm:$0xff]
  %v63 = vld [vmem:[%s1 + $0x160] sm:$0xff]
  %v64 = vld [vmem:[%s1 + $0x168] sm:$0xff]
  %v65 = vld [vmem:[%s1 + $0x170] sm:$0xff]
  %v66 = vld [vmem:[%s1 + $0x178] sm:$0xff]
  %v67 = vld [vmem:[%s1 + $0x180] sm:$0xff]
  %v68 = vld [vmem:[%s1 + $0x188] sm:$0xff]
  %v69 = vld [vmem:[%s1 + $0x190] sm:$0xff]
  %v70 = vld [vmem:[%s1 + $0x198] sm:$0xff]
  %v71 = vld [vmem:[%s1 + $0x1a0] sm:$0xff]
  %v72 = vld [vmem:[%s1 + $0x1a8] sm:$0xff]
  %v73 = vld [vmem:[%s1 + $0x1b0] sm:$0xff]
  %v74 = vld [vmem:[%s1 + $0x1b8] sm:$0xff]
  %v75 = vld [vmem:[%s1 + $0x1c0] sm:$0xff]
  %v76 = vld [vmem:[%s1 + $0x1c8] sm:$0xff]
  %v77 = vld [vmem:[%s1 + $0x1d0] sm:$0xff]
  %v78 = vld [vmem:[%s1 + $0x1d8] sm:$0xff]
  %v79 = vld [vmem:[%s1 + $0x1e0] sm:$0xff]
  %v80 = vld [vmem:[%s1 + $0x1e8] sm:$0xff]
  %v81 = vld [vmem:[%s1 + $0x1f0] sm:$0xff]
  %v82 = vld [vmem:[%s1 + $0x1f8] sm:$0xff]
  %v83 = vld [vmem:[%s1 + $0x200] sm:$0xff]
  %v84 = vld [vmem:[%s1 + $0x208] sm:$0xff]
  %v85 = vld [vmem:[%s1 + $0x210] sm:$0xff]
  %v86 = vld [vmem:[%s1 + $0x218] sm:$0xff]
  %v87 = vld [vmem:[%s1 + $0x220] sm:$0xff]
  %v88 = vld [vmem:[%s1 + $0x228] sm:$0xff]
  %v89 = vld [vmem:[%s1 + $0x230] sm:$0xff]
  %v90 = vld [vmem:[%s1 + $0x238] sm:$0xff]
  %v91 = vld [vmem:[%s1 + $0x240] sm:$0xff]
  %v92 = vld [vmem:[%s1 + $0x248] sm:$0xff]
  %v93 = vld [vmem:[%s1 + $0x250] sm:$0xff]
  %v94 = vld [vmem:[%s1 + $0x258] sm:$0xff]
  %v95 = vld [vmem:[%s1 + $0x260] sm:$0xff]
  %v96 = vld [vmem:[%s1 + $0x268] sm:$0xff]
  %v97 = vld [vmem:[%s1 + $0x270] sm:$0xff]
  %v98 = vld [vmem:[%s1 + $0x278] sm:$0xff]
  %v99 = vld [vmem:[%s1 + $0x280] sm:$0xff]
  %v100 = vld [vmem:[%s1 + $0x288] sm:$0xff]
  %v101 = vld [vmem:[%s1 + $0x290] sm:$0xff]
  %v102 = vld [vmem:[%s1 + $0x298] sm:$0xff]
  %v103 = vld [vmem:[%s1 + $0x2a0] sm:$0xff]
  %v104 = vld [vmem:[%s1 + $0x2a8] sm:$0xff]
  %v105 = vld [vmem:[%s1 + $0x2b0] sm:$0xff]
  %v106 = vld [vmem:[%s1 + $0x2b8] sm:$0xff]
  %v107 = vld [vmem:[%s1 + $0x2c0] sm:$0xff]
  %v108 = vld [vmem:[%s1 + $0x2c8] sm:$0xff]
  %v109 = vld [vmem:[%s1 + $0x2d0] sm:$0xff]
  %v110 = vld [vmem:[%s1 + $0x2d8] sm:$0xff]
  %v111 = vld [vmem:[%s1 + $0x2e0] sm:$0xff]
  %v112 = vld [vmem:[%s1 + $0x2e8] sm:$0xff]
  %v113 = vld [vmem:[%s1 + $0x2f0] sm:$0xff]
  %v114 = vld [vmem:[%s1 + $0x2f8] sm:$0xff]
  %v115 = vld [vmem:[%s1 + $0x300] sm:$0xff]
  %v116 = vld [vmem:[%s1 + $0x308] sm:$0xff]
  %v117 = vld [vmem:[%s1 + $0x310] sm:$0xff]
  %v118 = vld [vmem:[%s1 + $0x318] sm:$0xff]
  %v119 = vld [vmem:[%s1 + $0x320] sm:$0xff]
  %v120 = vld [vmem:[%s1 + $0x328] sm:$0xff]
  %v121 = vld [vmem:[%s1 + $0x330] sm:$0xff]
  %v122 = vld [vmem:[%s1 + $0x338] sm:$0xff]
  %v123 = vld [vmem:[%s1 + $0x340] sm:$0xff]
  %v124 = vld [vmem:[%s1 + $0x348] sm:$0xff]
  %v125 = vld [vmem:[%s1 + $0x350] sm:$0xff]
  %v126 = vld [vmem:[%s1 + $0x358] sm:$0xff]
  %v127 = vld [vmem:[%s1 + $0x360] sm:$0xff]
  %v128 = vld [vmem:[%s1 + $0x368] sm:$0xff]
  %v129 = vld [vmem:[%s1 + $0x370] sm:$0xff]
  %v130 = vld [vmem:[%s1 + $0x378] sm:$0xff]
  %v131 = vld [vmem:[%s1 + $0x380] sm:$0xff]
  %v132 = vld [vmem:[%s1 + $0x388] sm:$0xff]
  %v133 = vld [vmem:[%s1 + $0x390] sm:$0xff]
  %v134 = vld [vmem:[%s1 + $0x398] sm:$0xff]
  %v135 = vld [vmem:[%s1 + $0x3a0] sm:$0xff]
  %v136 = vld [vmem:[%s1 + $0x3a8] sm:$0xff]
  %v137 = vld [vmem:[%s1 + $0x3b0] sm:$0xff]
  %v138 = vld [vmem:[%s1 + $0x3b8] sm:$0xff]
  %v139 = vld [vmem:[%s1 + $0x3c0] sm:$0xff]
  %v140 = vld [vmem:[%s1 + $0x3c8] sm:$0xff]
  %v141 = vld [vmem:[%s1 + $0x3d0] sm:$0xff]
  %v142 = vld [vmem:[%s1 + $0x3d8] sm:$0xff]
  %v143 = vld [vmem:[%s1 + $0x3e0] sm:$0xff]
  %v144 = vld [vmem:[%s1 + $0x3e8] sm:$0xff]
  %v145 = vld [vmem:[%s1 + $0x3f0] sm:$0xff]
  %v146 = vld [vmem:[%s1 + $0x3f8] sm:$0xff]
  %v147 = vld [vmem:[%s2] sm:$0xff]
  %v149 = vperm.slane %v147, 0
  %v150 = vperm.slane %v147, 1
  %v151 = vperm.slane %v147, 2
  %v152 = vperm.slane %v147, 3
  %v153 = vperm.slane %v147, 4
  %v154 = vperm.slane %v147, 5
  %v155 = vperm.slane %v147, 6
  %v156 = vperm.slane %v147, 7
  %v167 = vunpack.c.l.b16 %v17
  %v168 = vunpack.c.h.b16 %v17
  %v169 = vunpack.c.l.b16 %v18
  %v170 = vunpack.c.h.b16 %v18
  %v171 = vpack.c.b16 %v169, %v167
  %v172 = vpack.c.b16 %v170, %v168
  %v303 = vunpack.c.l.b16 %v19
  %v304 = vunpack.c.h.b16 %v19
  %v305 = vunpack.c.l.b16 %v20
  %v306 = vunpack.c.h.b16 %v20
  %v307 = vunpack.c.l.b16 %v21
  %v308 = vunpack.c.h.b16 %v21
  %v309 = vunpack.c.l.b16 %v22
  %v310 = vunpack.c.h.b16 %v22
  %v311 = vunpack.c.l.b16 %v23
  %v312 = vunpack.c.h.b16 %v23
  %v313 = vunpack.c.l.b16 %v24
  %v314 = vunpack.c.h.b16 %v24
  %v315 = vunpack.c.l.b16 %v25
  %v316 = vunpack.c.h.b16 %v25
  %v317 = vunpack.c.l.b16 %v26
  %v318 = vunpack.c.h.b16 %v26
  %v319 = vunpack.c.l.b16 %v27
  %v320 = vunpack.c.h.b16 %v27
  %v321 = vunpack.c.l.b16 %v28
  %v322 = vunpack.c.h.b16 %v28
  %v323 = vunpack.c.l.b16 %v29
  %v324 = vunpack.c.h.b16 %v29
  %v325 = vunpack.c.l.b16 %v30
  %v326 = vunpack.c.h.b16 %v30
  %v327 = vunpack.c.l.b16 %v31
  %v328 = vunpack.c.h.b16 %v31
  %v329 = vunpack.c.l.b16 %v32
  %v330 = vunpack.c.h.b16 %v32
  %v331 = vunpack.c.l.b16 %v33
  %v332 = vunpack.c.h.b16 %v33
  %v333 = vunpack.c.l.b16 %v34
  %v334 = vunpack.c.h.b16 %v34
  %v335 = vunpack.c.l.b16 %v35
  %v336 = vunpack.c.h.b16 %v35
  %v337 = vunpack.c.l.b16 %v36
  %v338 = vunpack.c.h.b16 %v36
  %v339 = vunpack.c.l.b16 %v37
  %v340 = vunpack.c.h.b16 %v37
  %v341 = vunpack.c.l.b16 %v38
  %v342 = vunpack.c.h.b16 %v38
  %v343 = vunpack.c.l.b16 %v39
  %v344 = vunpack.c.h.b16 %v39
  %v345 = vunpack.c.l.b16 %v40
  %v346 = vunpack.c.h.b16 %v40
  %v347 = vunpack.c.l.b16 %v41
  %v348 = vunpack.c.h.b16 %v41
  %v349 = vunpack.c.l.b16 %v42
  %v350 = vunpack.c.h.b16 %v42
  %v351 = vunpack.c.l.b16 %v43
  %v352 = vunpack.c.h.b16 %v43
  %v353 = vunpack.c.l.b16 %v44
  %v354 = vunpack.c.h.b16 %v44
  %v355 = vunpack.c.l.b16 %v45
  %v356 = vunpack.c.h.b16 %v45
  %v357 = vunpack.c.l.b16 %v46
  %v358 = vunpack.c.h.b16 %v46
  %v359 = vunpack.c.l.b16 %v47
  %v360 = vunpack.c.h.b16 %v47
  %v361 = vunpack.c.l.b16 %v48
  %v362 = vunpack.c.h.b16 %v48
  %v363 = vunpack.c.l.b16 %v49
  %v364 = vunpack.c.h.b16 %v49
  %v365 = vunpack.c.l.b16 %v50
  %v366 = vunpack.c.h.b16 %v50
  %v367 = vunpack.c.l.b16 %v51
  %v368 = vunpack.c.h.b16 %v51
  %v369 = vunpack.c.l.b16 %v52
  %v370 = vunpack.c.h.b16 %v52
  %v371 = vunpack.c.l.b16 %v53
  %v372 = vunpack.c.h.b16 %v53
  %v373 = vunpack.c.l.b16 %v54
  %v374 = vunpack.c.h.b16 %v54
  %v375 = vunpack.c.l.b16 %v55
  %v376 = vunpack.c.h.b16 %v55
  %v377 = vunpack.c.l.b16 %v56
  %v378 = vunpack.c.h.b16 %v56
  %v379 = vunpack.c.l.b16 %v57
  %v380 = vunpack.c.h.b16 %v57
  %v381 = vunpack.c.l.b16 %v58
  %v382 = vunpack.c.h.b16 %v58
  %v383 = vunpack.c.l.b16 %v59
  %v384 = vunpack.c.h.b16 %v59
  %v385 = vunpack.c.l.b16 %v60
  %v386 = vunpack.c.h.b16 %v60
  %v387 = vunpack.c.l.b16 %v61
  %v388 = vunpack.c.h.b16 %v61
  %v389 = vunpack.c.l.b16 %v62
  %v390 = vunpack.c.h.b16 %v62
  %v391 = vunpack.c.l.b16 %v63
  %v392 = vunpack.c.h.b16 %v63
  %v393 = vunpack.c.l.b16 %v64
  %v394 = vunpack.c.h.b16 %v64
  %v395 = vunpack.c.l.b16 %v65
  %v396 = vunpack.c.h.b16 %v65
  %v397 = vunpack.c.l.b16 %v66
  %v398 = vunpack.c.h.b16 %v66
  %v399 = vunpack.c.l.b16 %v67
  %v400 = vunpack.c.h.b16 %v67
  %v401 = vunpack.c.l.b16 %v68
  %v402 = vunpack.c.h.b16 %v68
  %v403 = vunpack.c.l.b16 %v69
  %v404 = vunpack.c.h.b16 %v69
  %v405 = vunpack.c.l.b16 %v70
  %v406 = vunpack.c.h.b16 %v70
  %v407 = vunpack.c.l.b16 %v71
  %v408 = vunpack.c.h.b16 %v71
  %v409 = vunpack.c.l.b16 %v72
  %v410 = vunpack.c.h.b16 %v72
  %v411 = vunpack.c.l.b16 %v73
  %v412 = vunpack.c.h.b16 %v73
  %v413 = vunpack.c.l.b16 %v74
  %v414 = vunpack.c.h.b16 %v74
  %v415 = vunpack.c.l.b16 %v75
  %v416 = vunpack.c.h.b16 %v75
  %v417 = vunpack.c.l.b16 %v76
  %v418 = vunpack.c.h.b16 %v76
  %v419 = vunpack.c.l.b16 %v77
  %v420 = vunpack.c.h.b16 %v77
  %v421 = vunpack.c.l.b16 %v78
  %v422 = vunpack.c.h.b16 %v78
  %v423 = vunpack.c.l.b16 %v79
  %v424 = vunpack.c.h.b16 %v79
  %v425 = vunpack.c.l.b16 %v80
  %v426 = vunpack.c.h.b16 %v80
  %v427 = vunpack.c.l.b16 %v81
  %v428 = vunpack.c.h.b16 %v81
  %v429 = vunpack.c.l.b16 %v82
  %v430 = vunpack.c.h.b16 %v82
  %v431 = vunpack.c.l.b16 %v83
  %v432 = vunpack.c.h.b16 %v83
  %v433 = vunpack.c.l.b16 %v84
  %v434 = vunpack.c.h.b16 %v84
  %v435 = vunpack.c.l.b16 %v85
  %v436 = vunpack.c.h.b16 %v85
  %v437 = vunpack.c.l.b16 %v86
  %v438 = vunpack.c.h.b16 %v86
  %v439 = vunpack.c.l.b16 %v87
  %v440 = vunpack.c.h.b16 %v87
  %v441 = vunpack.c.l.b16 %v88
  %v442 = vunpack.c.h.b16 %v88
  %v443 = vunpack.c.l.b16 %v89
  %v444 = vunpack.c.h.b16 %v89
  %v445 = vunpack.c.l.b16 %v90
  %v446 = vunpack.c.h.b16 %v90
  %v447 = vunpack.c.l.b16 %v91
  %v448 = vunpack.c.h.b16 %v91
  %v449 = vunpack.c.l.b16 %v92
  %v450 = vunpack.c.h.b16 %v92
  %v451 = vunpack.c.l.b16 %v93
  %v452 = vunpack.c.h.b16 %v93
  %v453 = vunpack.c.l.b16 %v94
  %v454 = vunpack.c.h.b16 %v94
  %v455 = vunpack.c.l.b16 %v95
  %v456 = vunpack.c.h.b16 %v95
  %v457 = vunpack.c.l.b16 %v96
  %v458 = vunpack.c.h.b16 %v96
  %v459 = vunpack.c.l.b16 %v97
  %v460 = vunpack.c.h.b16 %v97
  %v461 = vunpack.c.l.b16 %v98
  %v462 = vunpack.c.h.b16 %v98
  %v463 = vunpack.c.l.b16 %v99
  %v464 = vunpack.c.h.b16 %v99
  %v465 = vunpack.c.l.b16 %v100
  %v466 = vunpack.c.h.b16 %v100
  %v467 = vunpack.c.l.b16 %v101
  %v468 = vunpack.c.h.b16 %v101
  %v469 = vunpack.c.l.b16 %v102
  %v470 = vunpack.c.h.b16 %v102
  %v471 = vunpack.c.l.b16 %v103
  %v472 = vunpack.c.h.b16 %v103
  %v473 = vunpack.c.l.b16 %v104
  %v474 = vunpack.c.h.b16 %v104
  %v475 = vunpack.c.l.b16 %v105
  %v476 = vunpack.c.h.b16 %v105
  %v477 = vunpack.c.l.b16 %v106
  %v478 = vunpack.c.h.b16 %v106
  %v479 = vunpack.c.l.b16 %v107
  %v480 = vunpack.c.h.b16 %v107
  %v481 = vunpack.c.l.b16 %v108
  %v482 = vunpack.c.h.b16 %v108
  %v483 = vunpack.c.l.b16 %v109
  %v484 = vunpack.c.h.b16 %v109
  %v485 = vunpack.c.l.b16 %v110
  %v486 = vunpack.c.h.b16 %v110
  %v487 = vunpack.c.l.b16 %v111
  %v488 = vunpack.c.h.b16 %v111
  %v489 = vunpack.c.l.b16 %v112
  %v490 = vunpack.c.h.b16 %v112
  %v491 = vunpack.c.l.b16 %v113
  %v492 = vunpack.c.h.b16 %v113
  %v493 = vunpack.c.l.b16 %v114
  %v494 = vunpack.c.h.b16 %v114
  %v495 = vunpack.c.l.b16 %v115
  %v496 = vunpack.c.h.b16 %v115
  %v497 = vunpack.c.l.b16 %v116
  %v498 = vunpack.c.h.b16 %v116
  %v499 = vunpack.c.l.b16 %v117
  %v500 = vunpack.c.h.b16 %v117
  %v501 = vunpack.c.l.b16 %v118
  %v502 = vunpack.c.h.b16 %v118
  %v503 = vunpack.c.l.b16 %v119
  %v504 = vunpack.c.h.b16 %v119
  %v505 = vunpack.c.l.b16 %v120
  %v506 = vunpack.c.h.b16 %v120
  %v507 = vunpack.c.l.b16 %v121
  %v508 = vunpack.c.h.b16 %v121
  %v509 = vunpack.c.l.b16 %v122
  %v510 = vunpack.c.h.b16 %v122
  %v511 = vunpack.c.l.b16 %v123
  %v512 = vunpack.c.h.b16 %v123
  %v513 = vunpack.c.l.b16 %v124
  %v514 = vunpack.c.h.b16 %v124
  %v515 = vunpack.c.l.b16 %v125
  %v516 = vunpack.c.h.b16 %v125
  %v517 = vunpack.c.l.b16 %v126
  %v518 = vunpack.c.h.b16 %v126
  %v519 = vunpack.c.l.b16 %v127
  %v520 = vunpack.c.h.b16 %v127
  %v521 = vunpack.c.l.b16 %v128
  %v522 = vunpack.c.h.b16 %v128
  %v523 = vunpack.c.l.b16 %v129
  %v524 = vunpack.c.h.b16 %v129
  %v525 = vunpack.c.l.b16 %v130
  %v526 = vunpack.c.h.b16 %v130
  %v527 = vunpack.c.l.b16 %v131
  %v528 = vunpack.c.h.b16 %v131
  %v529 = vunpack.c.l.b16 %v132
  %v530 = vunpack.c.h.b16 %v132
  %v531 = vunpack.c.l.b16 %v133
  %v532 = vunpack.c.h.b16 %v133
  %v533 = vunpack.c.l.b16 %v134
  %v534 = vunpack.c.h.b16 %v134
  %v535 = vunpack.c.l.b16 %v135
  %v536 = vunpack.c.h.b16 %v135
  %v537 = vunpack.c.l.b16 %v136
  %v538 = vunpack.c.h.b16 %v136
  %v539 = vunpack.c.l.b16 %v137
  %v540 = vunpack.c.h.b16 %v137
  %v541 = vunpack.c.l.b16 %v138
  %v542 = vunpack.c.h.b16 %v138
  %v543 = vunpack.c.l.b16 %v139
  %v544 = vunpack.c.h.b16 %v139
  %v545 = vunpack.c.l.b16 %v140
  %v546 = vunpack.c.h.b16 %v140
  %v547 = vunpack.c.l.b16 %v141
  %v548 = vunpack.c.h.b16 %v141
  %v549 = vunpack.c.l.b16 %v142
  %v550 = vunpack.c.h.b16 %v142
  %v551 = vunpack.c.l.b16 %v143
  %v552 = vunpack.c.h.b16 %v143
  %v553 = vunpack.c.l.b16 %v144
  %v554 = vunpack.c.h.b16 %v144
  %v555 = vunpack.c.l.b16 %v145
  %v556 = vunpack.c.h.b16 %v145
  %v557 = vunpack.c.l.b16 %v146
  %v558 = vunpack.c.h.b16 %v146
  %v559 = vpack.c.b16 %v311, %v303
  %v560 = vpack.c.b16 %v312, %v304
  %v561 = vpack.c.b16 %v313, %v305
  %v562 = vpack.c.b16 %v314, %v306
  %v563 = vpack.c.b16 %v315, %v307
  %v564 = vpack.c.b16 %v316, %v308
  %v565 = vpack.c.b16 %v317, %v309
  %v566 = vpack.c.b16 %v318, %v310
  %v567 = vpack.c.b16 %v327, %v319
  %v568 = vpack.c.b16 %v328, %v320
  %v569 = vpack.c.b16 %v329, %v321
  %v570 = vpack.c.b16 %v330, %v322
  %v571 = vpack.c.b16 %v331, %v323
  %v572 = vpack.c.b16 %v332, %v324
  %v573 = vpack.c.b16 %v333, %v325
  %v574 = vpack.c.b16 %v334, %v326
  %v575 = vpack.c.b16 %v343, %v335
  %v576 = vpack.c.b16 %v344, %v336
  %v577 = vpack.c.b16 %v345, %v337
  %v578 = vpack.c.b16 %v346, %v338
  %v579 = vpack.c.b16 %v347, %v339
  %v580 = vpack.c.b16 %v348, %v340
  %v581 = vpack.c.b16 %v349, %v341
  %v582 = vpack.c.b16 %v350, %v342
  %v583 = vpack.c.b16 %v359, %v351
  %v584 = vpack.c.b16 %v360, %v352
  %v585 = vpack.c.b16 %v361, %v353
  %v586 = vpack.c.b16 %v362, %v354
  %v587 = vpack.c.b16 %v363, %v355
  %v588 = vpack.c.b16 %v364, %v356
  %v589 = vpack.c.b16 %v365, %v357
  %v590 = vpack.c.b16 %v366, %v358
  %v591 = vpack.c.b16 %v375, %v367
  %v592 = vpack.c.b16 %v376, %v368
  %v593 = vpack.c.b16 %v377, %v369
  %v594 = vpack.c.b16 %v378, %v370
  %v595 = vpack.c.b16 %v379, %v371
  %v596 = vpack.c.b16 %v380, %v372
  %v597 = vpack.c.b16 %v381, %v373
  %v598 = vpack.c.b16 %v382, %v374
  %v599 = vpack.c.b16 %v391, %v383
  %v600 = vpack.c.b16 %v392, %v384
  %v601 = vpack.c.b16 %v393, %v385
  %v602 = vpack.c.b16 %v394, %v386
  %v603 = vpack.c.b16 %v395, %v387
  %v604 = vpack.c.b16 %v396, %v388
  %v605 = vpack.c.b16 %v397, %v389
  %v606 = vpack.c.b16 %v398, %v390
  %v607 = vpack.c.b16 %v407, %v399
  %v608 = vpack.c.b16 %v408, %v400
  %v609 = vpack.c.b16 %v409, %v401
  %v610 = vpack.c.b16 %v410, %v402
  %v611 = vpack.c.b16 %v411, %v403
  %v612 = vpack.c.b16 %v412, %v404
  %v613 = vpack.c.b16 %v413, %v405
  %v614 = vpack.c.b16 %v414, %v406
  %v615 = vpack.c.b16 %v423, %v415
  %v616 = vpack.c.b16 %v424, %v416
  %v617 = vpack.c.b16 %v425, %v417
  %v618 = vpack.c.b16 %v426, %v418
  %v619 = vpack.c.b16 %v427, %v419
  %v620 = vpack.c.b16 %v428, %v420
  %v621 = vpack.c.b16 %v429, %v421
  %v622 = vpack.c.b16 %v430, %v422
  %v623 = vpack.c.b16 %v439, %v431
  %v624 = vpack.c.b16 %v440, %v432
  %v625 = vpack.c.b16 %v441, %v433
  %v626 = vpack.c.b16 %v442, %v434
  %v627 = vpack.c.b16 %v443, %v435
  %v628 = vpack.c.b16 %v444, %v436
  %v629 = vpack.c.b16 %v445, %v437
  %v630 = vpack.c.b16 %v446, %v438
  %v631 = vpack.c.b16 %v455, %v447
  %v632 = vpack.c.b16 %v456, %v448
  %v633 = vpack.c.b16 %v457, %v449
  %v634 = vpack.c.b16 %v458, %v450
  %v635 = vpack.c.b16 %v459, %v451
  %v636 = vpack.c.b16 %v460, %v452
  %v637 = vpack.c.b16 %v461, %v453
  %v638 = vpack.c.b16 %v462, %v454
  %v639 = vpack.c.b16 %v471, %v463
  %v640 = vpack.c.b16 %v472, %v464
  %v641 = vpack.c.b16 %v473, %v465
  %v642 = vpack.c.b16 %v474, %v466
  %v643 = vpack.c.b16 %v475, %v467
  %v644 = vpack.c.b16 %v476, %v468
  %v645 = vpack.c.b16 %v477, %v469
  %v646 = vpack.c.b16 %v478, %v470
  %v647 = vpack.c.b16 %v487, %v479
  %v648 = vpack.c.b16 %v488, %v480
  %v649 = vpack.c.b16 %v489, %v481
  %v650 = vpack.c.b16 %v490, %v482
  %v651 = vpack.c.b16 %v491, %v483
  %v652 = vpack.c.b16 %v492, %v484
  %v653 = vpack.c.b16 %v493, %v485
  %v654 = vpack.c.b16 %v494, %v486
  %v655 = vpack.c.b16 %v503, %v495
  %v656 = vpack.c.b16 %v504, %v496
  %v657 = vpack.c.b16 %v505, %v497
  %v658 = vpack.c.b16 %v506, %v498
  %v659 = vpack.c.b16 %v507, %v499
  %v660 = vpack.c.b16 %v508, %v500
  %v661 = vpack.c.b16 %v509, %v501
  %v662 = vpack.c.b16 %v510, %v502
  %v663 = vpack.c.b16 %v519, %v511
  %v664 = vpack.c.b16 %v520, %v512
  %v665 = vpack.c.b16 %v521, %v513
  %v666 = vpack.c.b16 %v522, %v514
  %v667 = vpack.c.b16 %v523, %v515
  %v668 = vpack.c.b16 %v524, %v516
  %v669 = vpack.c.b16 %v525, %v517
  %v670 = vpack.c.b16 %v526, %v518
  %v671 = vpack.c.b16 %v535, %v527
  %v672 = vpack.c.b16 %v536, %v528
  %v673 = vpack.c.b16 %v537, %v529
  %v674 = vpack.c.b16 %v538, %v530
  %v675 = vpack.c.b16 %v539, %v531
  %v676 = vpack.c.b16 %v540, %v532
  %v677 = vpack.c.b16 %v541, %v533
  %v678 = vpack.c.b16 %v542, %v534
  %v679 = vpack.c.b16 %v551, %v543
  %v680 = vpack.c.b16 %v552, %v544
  %v681 = vpack.c.b16 %v553, %v545
  %v682 = vpack.c.b16 %v554, %v546
  %v683 = vpack.c.b16 %v555, %v547
  %v684 = vpack.c.b16 %v556, %v548
  %v685 = vpack.c.b16 %v557, %v549
  %v686 = vpack.c.b16 %v558, %v550
  %815 = vmatpush.bf16.msra.mxu0 %v615
  %816 = vmatpush.bf16.msra.mxu0 %v607
  %817 = vmatpush.bf16.msra.mxu0 %v599
  %818 = vmatpush.bf16.msra.mxu0 %v591
  %819 = vmatpush.bf16.msra.mxu0 %v583
  %820 = vmatpush.bf16.msra.mxu0 %v575
  %821 = vmatpush.bf16.msra.mxu0 %v567
  %822 = vmatpush.bf16.msra.mxu0 %v559
  %823 = vmatmul.bf16.gmra.mxu0 %v171
  %v824 = vpop.f32.mrf.mxu0
  %v825 = vadd.f32 %v149, %v824
  %v826 = vpop.f32.mrf.mxu0
  %v827 = vadd.f32 %v149, %v826
  %828 = vdwg.mxu0
  %829 = vmatpush.bf16.msra.mxu0 %v679
  %830 = vmatpush.bf16.msra.mxu0 %v671
  %831 = vmatpush.bf16.msra.mxu0 %v663
  %832 = vmatpush.bf16.msra.mxu0 %v655
  %833 = vmatpush.bf16.msra.mxu0 %v647
  %834 = vmatpush.bf16.msra.mxu0 %v639
  %835 = vmatpush.bf16.msra.mxu0 %v631
  %836 = vmatpush.bf16.msra.mxu0 %v623
  %837 = vmatmul.bf16.gmra.mxu0 %v172
  %v838 = vpop.f32.mrf.mxu0
  %v839 = vadd.f32 %v825, %v838
  %v840 = vpop.f32.mrf.mxu0
  %v841 = vadd.f32 %v827, %v840
  %842 = vdwg.mxu0
  %843 = vmatpush.bf16.msra.mxu0 %v616
  %844 = vmatpush.bf16.msra.mxu0 %v608
  %845 = vmatpush.bf16.msra.mxu0 %v600
  %846 = vmatpush.bf16.msra.mxu0 %v592
  %847 = vmatpush.bf16.msra.mxu0 %v584
  %848 = vmatpush.bf16.msra.mxu0 %v576
  %849 = vmatpush.bf16.msra.mxu0 %v568
  %850 = vmatpush.bf16.msra.mxu0 %v560
  %851 = vmatmul.bf16.gmra.mxu0 %v171
  %v852 = vpop.f32.mrf.mxu0
  %v853 = vadd.f32 %v150, %v852
  %v854 = vpop.f32.mrf.mxu0
  %v855 = vadd.f32 %v150, %v854
  %856 = vdwg.mxu0
  %857 = vmatpush.bf16.msra.mxu0 %v680
  %858 = vmatpush.bf16.msra.mxu0 %v672
  %859 = vmatpush.bf16.msra.mxu0 %v664
  %860 = vmatpush.bf16.msra.mxu0 %v656
  %861 = vmatpush.bf16.msra.mxu0 %v648
  %862 = vmatpush.bf16.msra.mxu0 %v640
  %863 = vmatpush.bf16.msra.mxu0 %v632
  %864 = vmatpush.bf16.msra.mxu0 %v624
  %865 = vmatmul.bf16.gmra.mxu0 %v172
  %v866 = vpop.f32.mrf.mxu0
  %v867 = vadd.f32 %v853, %v866
  %v868 = vpop.f32.mrf.mxu0
  %v869 = vadd.f32 %v855, %v868
  %870 = vdwg.mxu0
  %871 = vmatpush.bf16.msra.mxu0 %v617
  %872 = vmatpush.bf16.msra.mxu0 %v609
  %873 = vmatpush.bf16.msra.mxu0 %v601
  %874 = vmatpush.bf16.msra.mxu0 %v593
  %875 = vmatpush.bf16.msra.mxu0 %v585
  %876 = vmatpush.bf16.msra.mxu0 %v577
  %877 = vmatpush.bf16.msra.mxu0 %v569
  %878 = vmatpush.bf16.msra.mxu0 %v561
  %879 = vmatmul.bf16.gmra.mxu0 %v171
  %v880 = vpop.f32.mrf.mxu0
  %v881 = vadd.f32 %v151, %v880
  %v882 = vpop.f32.mrf.mxu0
  %v883 = vadd.f32 %v151, %v882
  %884 = vdwg.mxu0
  %885 = vmatpush.bf16.msra.mxu0 %v681
  %886 = vmatpush.bf16.msra.mxu0 %v673
  %887 = vmatpush.bf16.msra.mxu0 %v665
  %888 = vmatpush.bf16.msra.mxu0 %v657
  %889 = vmatpush.bf16.msra.mxu0 %v649
  %890 = vmatpush.bf16.msra.mxu0 %v641
  %891 = vmatpush.bf16.msra.mxu0 %v633
  %892 = vmatpush.bf16.msra.mxu0 %v625
  %893 = vmatmul.bf16.gmra.mxu0 %v172
  %v894 = vpop.f32.mrf.mxu0
  %v895 = vadd.f32 %v881, %v894
  %v896 = vpop.f32.mrf.mxu0
  %v897 = vadd.f32 %v883, %v896
  %898 = vdwg.mxu0
  %899 = vmatpush.bf16.msra.mxu0 %v618
  %900 = vmatpush.bf16.msra.mxu0 %v610
  %901 = vmatpush.bf16.msra.mxu0 %v602
  %902 = vmatpush.bf16.msra.mxu0 %v594
  %903 = vmatpush.bf16.msra.mxu0 %v586
  %904 = vmatpush.bf16.msra.mxu0 %v578
  %905 = vmatpush.bf16.msra.mxu0 %v570
  %906 = vmatpush.bf16.msra.mxu0 %v562
  %907 = vmatmul.bf16.gmra.mxu0 %v171
  %v908 = vpop.f32.mrf.mxu0
  %v909 = vadd.f32 %v152, %v908
  %v910 = vpop.f32.mrf.mxu0
  %v911 = vadd.f32 %v152, %v910
  %912 = vdwg.mxu0
  %913 = vmatpush.bf16.msra.mxu0 %v682
  %914 = vmatpush.bf16.msra.mxu0 %v674
  %915 = vmatpush.bf16.msra.mxu0 %v666
  %916 = vmatpush.bf16.msra.mxu0 %v658
  %917 = vmatpush.bf16.msra.mxu0 %v650
  %918 = vmatpush.bf16.msra.mxu0 %v642
  %919 = vmatpush.bf16.msra.mxu0 %v634
  %920 = vmatpush.bf16.msra.mxu0 %v626
  %921 = vmatmul.bf16.gmra.mxu0 %v172
  %v922 = vpop.f32.mrf.mxu0
  %v923 = vadd.f32 %v909, %v922
  %v924 = vpop.f32.mrf.mxu0
  %v925 = vadd.f32 %v911, %v924
  %926 = vdwg.mxu0
  %927 = vmatpush.bf16.msra.mxu0 %v619
  %928 = vmatpush.bf16.msra.mxu0 %v611
  %929 = vmatpush.bf16.msra.mxu0 %v603
  %930 = vmatpush.bf16.msra.mxu0 %v595
  %931 = vmatpush.bf16.msra.mxu0 %v587
  %932 = vmatpush.bf16.msra.mxu0 %v579
  %933 = vmatpush.bf16.msra.mxu0 %v571
  %934 = vmatpush.bf16.msra.mxu0 %v563
  %935 = vmatmul.bf16.gmra.mxu0 %v171
  %v936 = vpop.f32.mrf.mxu0
  %v937 = vadd.f32 %v153, %v936
  %v938 = vpop.f32.mrf.mxu0
  %v939 = vadd.f32 %v153, %v938
  %940 = vdwg.mxu0
  %941 = vmatpush.bf16.msra.mxu0 %v683
  %942 = vmatpush.bf16.msra.mxu0 %v675
  %943 = vmatpush.bf16.msra.mxu0 %v667
  %944 = vmatpush.bf16.msra.mxu0 %v659
  %945 = vmatpush.bf16.msra.mxu0 %v651
  %946 = vmatpush.bf16.msra.mxu0 %v643
  %947 = vmatpush.bf16.msra.mxu0 %v635
  %948 = vmatpush.bf16.msra.mxu0 %v627
  %949 = vmatmul.bf16.gmra.mxu0 %v172
  %v950 = vpop.f32.mrf.mxu0
  %v951 = vadd.f32 %v937, %v950
  %v952 = vpop.f32.mrf.mxu0
  %v953 = vadd.f32 %v939, %v952
  %954 = vdwg.mxu0
  %955 = vmatpush.bf16.msra.mxu0 %v620
  %956 = vmatpush.bf16.msra.mxu0 %v612
  %957 = vmatpush.bf16.msra.mxu0 %v604
  %958 = vmatpush.bf16.msra.mxu0 %v596
  %959 = vmatpush.bf16.msra.mxu0 %v588
  %960 = vmatpush.bf16.msra.mxu0 %v580
  %961 = vmatpush.bf16.msra.mxu0 %v572
  %962 = vmatpush.bf16.msra.mxu0 %v564
  %963 = vmatmul.bf16.gmra.mxu0 %v171
  %v964 = vpop.f32.mrf.mxu0
  %v965 = vadd.f32 %v154, %v964
  %v966 = vpop.f32.mrf.mxu0
  %v967 = vadd.f32 %v154, %v966
  %968 = vdwg.mxu0
  %969 = vmatpush.bf16.msra.mxu0 %v684
  %970 = vmatpush.bf16.msra.mxu0 %v676
  %971 = vmatpush.bf16.msra.mxu0 %v668
  %972 = vmatpush.bf16.msra.mxu0 %v660
  %973 = vmatpush.bf16.msra.mxu0 %v652
  %974 = vmatpush.bf16.msra.mxu0 %v644
  %975 = vmatpush.bf16.msra.mxu0 %v636
  %976 = vmatpush.bf16.msra.mxu0 %v628
  %977 = vmatmul.bf16.gmra.mxu0 %v172
  %v978 = vpop.f32.mrf.mxu0
  %v979 = vadd.f32 %v965, %v978
  %v980 = vpop.f32.mrf.mxu0
  %v981 = vadd.f32 %v967, %v980
  %982 = vdwg.mxu0
  %983 = vmatpush.bf16.msra.mxu0 %v621
  %984 = vmatpush.bf16.msra.mxu0 %v613
  %985 = vmatpush.bf16.msra.mxu0 %v605
  %986 = vmatpush.bf16.msra.mxu0 %v597
  %987 = vmatpush.bf16.msra.mxu0 %v589
  %988 = vmatpush.bf16.msra.mxu0 %v581
  %989 = vmatpush.bf16.msra.mxu0 %v573
  %990 = vmatpush.bf16.msra.mxu0 %v565
  %991 = vmatmul.bf16.gmra.mxu0 %v171
  %v992 = vpop.f32.mrf.mxu0
  %v993 = vadd.f32 %v155, %v992
  %v994 = vpop.f32.mrf.mxu0
  %v995 = vadd.f32 %v155, %v994
  %996 = vdwg.mxu0
  %997 = vmatpush.bf16.msra.mxu0 %v685
  %998 = vmatpush.bf16.msra.mxu0 %v677
  %999 = vmatpush.bf16.msra.mxu0 %v669
  %1000 = vmatpush.bf16.msra.mxu0 %v661
  %1001 = vmatpush.bf16.msra.mxu0 %v653
  %1002 = vmatpush.bf16.msra.mxu0 %v645
  %1003 = vmatpush.bf16.msra.mxu0 %v637
  %1004 = vmatpush.bf16.msra.mxu0 %v629
  %1005 = vmatmul.bf16.gmra.mxu0 %v172
  %v1006 = vpop.f32.mrf.mxu0
  %v1007 = vadd.f32 %v993, %v1006
  %v1008 = vpop.f32.mrf.mxu0
  %v1009 = vadd.f32 %v995, %v1008
  %1010 = vdwg.mxu0
  %1011 = vmatpush.bf16.msra.mxu0 %v622
  %1012 = vmatpush.bf16.msra.mxu0 %v614
  %1013 = vmatpush.bf16.msra.mxu0 %v606
  %1014 = vmatpush.bf16.msra.mxu0 %v598
  %1015 = vmatpush.bf16.msra.mxu0 %v590
  %1016 = vmatpush.bf16.msra.mxu0 %v582
  %1017 = vmatpush.bf16.msra.mxu0 %v574
  %1018 = vmatpush.bf16.msra.mxu0 %v566
  %1019 = vmatmul.bf16.gmra.mxu0 %v171
  %v1020 = vpop.f32.mrf.mxu0
  %v1021 = vadd.f32 %v156, %v1020
  %v1022 = vpop.f32.mrf.mxu0
  %v1023 = vadd.f32 %v156, %v1022
  %1024 = vdwg.mxu0
  %1025 = vmatpush.bf16.msra.mxu0 %v686
  %1026 = vmatpush.bf16.msra.mxu0 %v678
  %1027 = vmatpush.bf16.msra.mxu0 %v670
  %1028 = vmatpush.bf16.msra.mxu0 %v662
  %1029 = vmatpush.bf16.msra.mxu0 %v654
  %1030 = vmatpush.bf16.msra.mxu0 %v646
  %1031 = vmatpush.bf16.msra.mxu0 %v638
  %1032 = vmatpush.bf16.msra.mxu0 %v630
  %1033 = vmatmul.bf16.gmra.mxu0 %v172
  %v1034 = vpop.f32.mrf.mxu0
  %v1035 = vadd.f32 %v1021, %v1034
  %v1036 = vpop.f32.mrf.mxu0
  %v1037 = vadd.f32 %v1023, %v1036
  %1038 = vdwg.mxu0
  %v1039 = vpack.c.bf16 %v841, %v839
  %v1040 = vpack.c.bf16 %v869, %v867
  %v1041 = vpack.c.bf16 %v897, %v895
  %v1042 = vpack.c.bf16 %v925, %v923
  %v1043 = vpack.c.bf16 %v953, %v951
  %v1044 = vpack.c.bf16 %v981, %v979
  %v1045 = vpack.c.bf16 %v1009, %v1007
  %v1046 = vpack.c.bf16 %v1037, %v1035
  %v1047 = vld [vmem:[%s3] sm:$0xf]
  %v1048 = vld [vmem:[%s3 + $0x4] sm:$0xf]
  %v1049 = vld [vmem:[%s3 + $0x8] sm:$0xf]
  %v1050 = vld [vmem:[%s3 + $0xc] sm:$0xf]
  %v1051 = vld [vmem:[%s3 + $0x10] sm:$0xf]
  %v1052 = vld [vmem:[%s3 + $0x14] sm:$0xf]
  %v1053 = vld [vmem:[%s3 + $0x18] sm:$0xf]
  %v1054 = vld [vmem:[%s3 + $0x1c] sm:$0xf]
  %v1055 = vld [vmem:[%s3 + $0x20] sm:$0xf]
  %v1056 = vld [vmem:[%s3 + $0x24] sm:$0xf]
  %v1057 = vld [vmem:[%s3 + $0x28] sm:$0xf]
  %v1058 = vld [vmem:[%s3 + $0x2c] sm:$0xf]
  %v1059 = vld [vmem:[%s3 + $0x30] sm:$0xf]
  %v1060 = vld [vmem:[%s3 + $0x34] sm:$0xf]
  %v1061 = vld [vmem:[%s3 + $0x38] sm:$0xf]
  %v1062 = vld [vmem:[%s3 + $0x3c] sm:$0xf]
  %v1063 = vld [vmem:[%s3 + $0x40] sm:$0xf]
  %v1064 = vld [vmem:[%s3 + $0x44] sm:$0xf]
  %v1065 = vld [vmem:[%s3 + $0x48] sm:$0xf]
  %v1066 = vld [vmem:[%s3 + $0x4c] sm:$0xf]
  %v1067 = vld [vmem:[%s3 + $0x50] sm:$0xf]
  %v1068 = vld [vmem:[%s3 + $0x54] sm:$0xf]
  %v1069 = vld [vmem:[%s3 + $0x58] sm:$0xf]
  %v1070 = vld [vmem:[%s3 + $0x5c] sm:$0xf]
  %v1071 = vld [vmem:[%s3 + $0x60] sm:$0xf]
  %v1072 = vld [vmem:[%s3 + $0x64] sm:$0xf]
  %v1073 = vld [vmem:[%s3 + $0x68] sm:$0xf]
  %v1074 = vld [vmem:[%s3 + $0x6c] sm:$0xf]
  %v1075 = vld [vmem:[%s3 + $0x70] sm:$0xf]
  %v1076 = vld [vmem:[%s3 + $0x74] sm:$0xf]
  %v1077 = vld [vmem:[%s3 + $0x78] sm:$0xf]
  %v1078 = vld [vmem:[%s3 + $0x7c] sm:$0xf]
  %v1079 = vld [vmem:[%s3 + $0x80] sm:$0xf]
  %v1080 = vld [vmem:[%s3 + $0x84] sm:$0xf]
  %v1081 = vld [vmem:[%s3 + $0x88] sm:$0xf]
  %v1082 = vld [vmem:[%s3 + $0x8c] sm:$0xf]
  %v1083 = vld [vmem:[%s3 + $0x90] sm:$0xf]
  %v1084 = vld [vmem:[%s3 + $0x94] sm:$0xf]
  %v1085 = vld [vmem:[%s3 + $0x98] sm:$0xf]
  %v1086 = vld [vmem:[%s3 + $0x9c] sm:$0xf]
  %v1087 = vld [vmem:[%s3 + $0xa0] sm:$0xf]
  %v1088 = vld [vmem:[%s3 + $0xa4] sm:$0xf]
  %v1089 = vld [vmem:[%s3 + $0xa8] sm:$0xf]
  %v1090 = vld [vmem:[%s3 + $0xac] sm:$0xf]
  %v1091 = vld [vmem:[%s3 + $0xb0] sm:$0xf]
  %v1092 = vld [vmem:[%s3 + $0xb4] sm:$0xf]
  %v1093 = vld [vmem:[%s3 + $0xb8] sm:$0xf]
  %v1094 = vld [vmem:[%s3 + $0xbc] sm:$0xf]
  %v1095 = vld [vmem:[%s3 + $0xc0] sm:$0xf]
  %v1096 = vld [vmem:[%s3 + $0xc4] sm:$0xf]
  %v1097 = vld [vmem:[%s3 + $0xc8] sm:$0xf]
  %v1098 = vld [vmem:[%s3 + $0xcc] sm:$0xf]
  %v1099 = vld [vmem:[%s3 + $0xd0] sm:$0xf]
  %v1100 = vld [vmem:[%s3 + $0xd4] sm:$0xf]
  %v1101 = vld [vmem:[%s3 + $0xd8] sm:$0xf]
  %v1102 = vld [vmem:[%s3 + $0xdc] sm:$0xf]
  %v1103 = vld [vmem:[%s3 + $0xe0] sm:$0xf]
  %v1104 = vld [vmem:[%s3 + $0xe4] sm:$0xf]
  %v1105 = vld [vmem:[%s3 + $0xe8] sm:$0xf]
  %v1106 = vld [vmem:[%s3 + $0xec] sm:$0xf]
  %v1107 = vld [vmem:[%s3 + $0xf0] sm:$0xf]
  %v1108 = vld [vmem:[%s3 + $0xf4] sm:$0xf]
  %v1109 = vld [vmem:[%s3 + $0xf8] sm:$0xf]
  %v1110 = vld [vmem:[%s3 + $0xfc] sm:$0xf]
  %v1111 = vld [vmem:[%s3 + $0x100] sm:$0xf]
  %v1112 = vld [vmem:[%s3 + $0x104] sm:$0xf]
  %v1113 = vld [vmem:[%s3 + $0x108] sm:$0xf]
  %v1114 = vld [vmem:[%s3 + $0x10c] sm:$0xf]
  %v1115 = vld [vmem:[%s3 + $0x110] sm:$0xf]
  %v1116 = vld [vmem:[%s3 + $0x114] sm:$0xf]
  %v1117 = vld [vmem:[%s3 + $0x118] sm:$0xf]
  %v1118 = vld [vmem:[%s3 + $0x11c] sm:$0xf]
  %v1119 = vld [vmem:[%s3 + $0x120] sm:$0xf]
  %v1120 = vld [vmem:[%s3 + $0x124] sm:$0xf]
  %v1121 = vld [vmem:[%s3 + $0x128] sm:$0xf]
  %v1122 = vld [vmem:[%s3 + $0x12c] sm:$0xf]
  %v1123 = vld [vmem:[%s3 + $0x130] sm:$0xf]
  %v1124 = vld [vmem:[%s3 + $0x134] sm:$0xf]
  %v1125 = vld [vmem:[%s3 + $0x138] sm:$0xf]
  %v1126 = vld [vmem:[%s3 + $0x13c] sm:$0xf]
  %v1127 = vld [vmem:[%s3 + $0x140] sm:$0xf]
  %v1128 = vld [vmem:[%s3 + $0x144] sm:$0xf]
  %v1129 = vld [vmem:[%s3 + $0x148] sm:$0xf]
  %v1130 = vld [vmem:[%s3 + $0x14c] sm:$0xf]
  %v1131 = vld [vmem:[%s3 + $0x150] sm:$0xf]
  %v1132 = vld [vmem:[%s3 + $0x154] sm:$0xf]
  %v1133 = vld [vmem:[%s3 + $0x158] sm:$0xf]
  %v1134 = vld [vmem:[%s3 + $0x15c] sm:$0xf]
  %v1135 = vld [vmem:[%s3 + $0x160] sm:$0xf]
  %v1136 = vld [vmem:[%s3 + $0x164] sm:$0xf]
  %v1137 = vld [vmem:[%s3 + $0x168] sm:$0xf]
  %v1138 = vld [vmem:[%s3 + $0x16c] sm:$0xf]
  %v1139 = vld [vmem:[%s3 + $0x170] sm:$0xf]
  %v1140 = vld [vmem:[%s3 + $0x174] sm:$0xf]
  %v1141 = vld [vmem:[%s3 + $0x178] sm:$0xf]
  %v1142 = vld [vmem:[%s3 + $0x17c] sm:$0xf]
  %v1143 = vld [vmem:[%s3 + $0x180] sm:$0xf]
  %v1144 = vld [vmem:[%s3 + $0x184] sm:$0xf]
  %v1145 = vld [vmem:[%s3 + $0x188] sm:$0xf]
  %v1146 = vld [vmem:[%s3 + $0x18c] sm:$0xf]
  %v1147 = vld [vmem:[%s3 + $0x190] sm:$0xf]
  %v1148 = vld [vmem:[%s3 + $0x194] sm:$0xf]
  %v1149 = vld [vmem:[%s3 + $0x198] sm:$0xf]
  %v1150 = vld [vmem:[%s3 + $0x19c] sm:$0xf]
  %v1151 = vld [vmem:[%s3 + $0x1a0] sm:$0xf]
  %v1152 = vld [vmem:[%s3 + $0x1a4] sm:$0xf]
  %v1153 = vld [vmem:[%s3 + $0x1a8] sm:$0xf]
  %v1154 = vld [vmem:[%s3 + $0x1ac] sm:$0xf]
  %v1155 = vld [vmem:[%s3 + $0x1b0] sm:$0xf]
  %v1156 = vld [vmem:[%s3 + $0x1b4] sm:$0xf]
  %v1157 = vld [vmem:[%s3 + $0x1b8] sm:$0xf]
  %v1158 = vld [vmem:[%s3 + $0x1bc] sm:$0xf]
  %v1159 = vld [vmem:[%s3 + $0x1c0] sm:$0xf]
  %v1160 = vld [vmem:[%s3 + $0x1c4] sm:$0xf]
  %v1161 = vld [vmem:[%s3 + $0x1c8] sm:$0xf]
  %v1162 = vld [vmem:[%s3 + $0x1cc] sm:$0xf]
  %v1163 = vld [vmem:[%s3 + $0x1d0] sm:$0xf]
  %v1164 = vld [vmem:[%s3 + $0x1d4] sm:$0xf]
  %v1165 = vld [vmem:[%s3 + $0x1d8] sm:$0xf]
  %v1166 = vld [vmem:[%s3 + $0x1dc] sm:$0xf]
  %v1167 = vld [vmem:[%s3 + $0x1e0] sm:$0xf]
  %v1168 = vld [vmem:[%s3 + $0x1e4] sm:$0xf]
  %v1169 = vld [vmem:[%s3 + $0x1e8] sm:$0xf]
  %v1170 = vld [vmem:[%s3 + $0x1ec] sm:$0xf]
  %v1171 = vld [vmem:[%s3 + $0x1f0] sm:$0xf]
  %v1172 = vld [vmem:[%s3 + $0x1f4] sm:$0xf]
  %v1173 = vld [vmem:[%s3 + $0x1f8] sm:$0xf]
  %v1174 = vld [vmem:[%s3 + $0x1fc] sm:$0xf]
  %v1303 = vunpack.c.l.b16 %v1047
  %v1304 = vunpack.c.l.b16 %v1048
  %v1305 = vunpack.c.l.b16 %v1049
  %v1306 = vunpack.c.l.b16 %v1050
  %v1307 = vunpack.c.l.b16 %v1051
  %v1308 = vunpack.c.l.b16 %v1052
  %v1309 = vunpack.c.l.b16 %v1053
  %v1310 = vunpack.c.l.b16 %v1054
  %v1311 = vunpack.c.l.b16 %v1055
  %v1312 = vunpack.c.l.b16 %v1056
  %v1313 = vunpack.c.l.b16 %v1057
  %v1314 = vunpack.c.l.b16 %v1058
  %v1315 = vunpack.c.l.b16 %v1059
  %v1316 = vunpack.c.l.b16 %v1060
  %v1317 = vunpack.c.l.b16 %v1061
  %v1318 = vunpack.c.l.b16 %v1062
  %v1319 = vunpack.c.l.b16 %v1063
  %v1320 = vunpack.c.l.b16 %v1064
  %v1321 = vunpack.c.l.b16 %v1065
  %v1322 = vunpack.c.l.b16 %v1066
  %v1323 = vunpack.c.l.b16 %v1067
  %v1324 = vunpack.c.l.b16 %v1068
  %v1325 = vunpack.c.l.b16 %v1069
  %v1326 = vunpack.c.l.b16 %v1070
  %v1327 = vunpack.c.l.b16 %v1071
  %v1328 = vunpack.c.l.b16 %v1072
  %v1329 = vunpack.c.l.b16 %v1073
  %v1330 = vunpack.c.l.b16 %v1074
  %v1331 = vunpack.c.l.b16 %v1075
  %v1332 = vunpack.c.l.b16 %v1076
  %v1333 = vunpack.c.l.b16 %v1077
  %v1334 = vunpack.c.l.b16 %v1078
  %v1335 = vunpack.c.l.b16 %v1079
  %v1336 = vunpack.c.l.b16 %v1080
  %v1337 = vunpack.c.l.b16 %v1081
  %v1338 = vunpack.c.l.b16 %v1082
  %v1339 = vunpack.c.l.b16 %v1083
  %v1340 = vunpack.c.l.b16 %v1084
  %v1341 = vunpack.c.l.b16 %v1085
  %v1342 = vunpack.c.l.b16 %v1086
  %v1343 = vunpack.c.l.b16 %v1087
  %v1344 = vunpack.c.l.b16 %v1088
  %v1345 = vunpack.c.l.b16 %v1089
  %v1346 = vunpack.c.l.b16 %v1090
  %v1347 = vunpack.c.l.b16 %v1091
  %v1348 = vunpack.c.l.b16 %v1092
  %v1349 = vunpack.c.l.b16 %v1093
  %v1350 = vunpack.c.l.b16 %v1094
  %v1351 = vunpack.c.l.b16 %v1095
  %v1352 = vunpack.c.l.b16 %v1096
  %v1353 = vunpack.c.l.b16 %v1097
  %v1354 = vunpack.c.l.b16 %v1098
  %v1355 = vunpack.c.l.b16 %v1099
  %v1356 = vunpack.c.l.b16 %v1100
  %v1357 = vunpack.c.l.b16 %v1101
  %v1358 = vunpack.c.l.b16 %v1102
  %v1359 = vunpack.c.l.b16 %v1103
  %v1360 = vunpack.c.l.b16 %v1104
  %v1361 = vunpack.c.l.b16 %v1105
  %v1362 = vunpack.c.l.b16 %v1106
  %v1363 = vunpack.c.l.b16 %v1107
  %v1364 = vunpack.c.l.b16 %v1108
  %v1365 = vunpack.c.l.b16 %v1109
  %v1366 = vunpack.c.l.b16 %v1110
  %v1367 = vunpack.c.l.b16 %v1111
  %v1368 = vunpack.c.l.b16 %v1112
  %v1369 = vunpack.c.l.b16 %v1113
  %v1370 = vunpack.c.l.b16 %v1114
  %v1371 = vunpack.c.l.b16 %v1115
  %v1372 = vunpack.c.l.b16 %v1116
  %v1373 = vunpack.c.l.b16 %v1117
  %v1374 = vunpack.c.l.b16 %v1118
  %v1375 = vunpack.c.l.b16 %v1119
  %v1376 = vunpack.c.l.b16 %v1120
  %v1377 = vunpack.c.l.b16 %v1121
  %v1378 = vunpack.c.l.b16 %v1122
  %v1379 = vunpack.c.l.b16 %v1123
  %v1380 = vunpack.c.l.b16 %v1124
  %v1381 = vunpack.c.l.b16 %v1125
  %v1382 = vunpack.c.l.b16 %v1126
  %v1383 = vunpack.c.l.b16 %v1127
  %v1384 = vunpack.c.l.b16 %v1128
  %v1385 = vunpack.c.l.b16 %v1129
  %v1386 = vunpack.c.l.b16 %v1130
  %v1387 = vunpack.c.l.b16 %v1131
  %v1388 = vunpack.c.l.b16 %v1132
  %v1389 = vunpack.c.l.b16 %v1133
  %v1390 = vunpack.c.l.b16 %v1134
  %v1391 = vunpack.c.l.b16 %v1135
  %v1392 = vunpack.c.l.b16 %v1136
  %v1393 = vunpack.c.l.b16 %v1137
  %v1394 = vunpack.c.l.b16 %v1138
  %v1395 = vunpack.c.l.b16 %v1139
  %v1396 = vunpack.c.l.b16 %v1140
  %v1397 = vunpack.c.l.b16 %v1141
  %v1398 = vunpack.c.l.b16 %v1142
  %v1399 = vunpack.c.l.b16 %v1143
  %v1400 = vunpack.c.l.b16 %v1144
  %v1401 = vunpack.c.l.b16 %v1145
  %v1402 = vunpack.c.l.b16 %v1146
  %v1403 = vunpack.c.l.b16 %v1147
  %v1404 = vunpack.c.l.b16 %v1148
  %v1405 = vunpack.c.l.b16 %v1149
  %v1406 = vunpack.c.l.b16 %v1150
  %v1407 = vunpack.c.l.b16 %v1151
  %v1408 = vunpack.c.l.b16 %v1152
  %v1409 = vunpack.c.l.b16 %v1153
  %v1410 = vunpack.c.l.b16 %v1154
  %v1411 = vunpack.c.l.b16 %v1155
  %v1412 = vunpack.c.l.b16 %v1156
  %v1413 = vunpack.c.l.b16 %v1157
  %v1414 = vunpack.c.l.b16 %v1158
  %v1415 = vunpack.c.l.b16 %v1159
  %v1416 = vunpack.c.l.b16 %v1160
  %v1417 = vunpack.c.l.b16 %v1161
  %v1418 = vunpack.c.l.b16 %v1162
  %v1419 = vunpack.c.l.b16 %v1163
  %v1420 = vunpack.c.l.b16 %v1164
  %v1421 = vunpack.c.l.b16 %v1165
  %v1422 = vunpack.c.l.b16 %v1166
  %v1423 = vunpack.c.l.b16 %v1167
  %v1424 = vunpack.c.l.b16 %v1168
  %v1425 = vunpack.c.l.b16 %v1169
  %v1426 = vunpack.c.l.b16 %v1170
  %v1427 = vunpack.c.l.b16 %v1171
  %v1428 = vunpack.c.l.b16 %v1172
  %v1429 = vunpack.c.l.b16 %v1173
  %v1430 = vunpack.c.l.b16 %v1174
  %v1431 = vpack.c.b16 %v1304, %v1303
  %v1432 = vpack.c.b16 %v1306, %v1305
  %v1433 = vpack.c.b16 %v1308, %v1307
  %v1434 = vpack.c.b16 %v1310, %v1309
  %v1435 = vpack.c.b16 %v1312, %v1311
  %v1436 = vpack.c.b16 %v1314, %v1313
  %v1437 = vpack.c.b16 %v1316, %v1315
  %v1438 = vpack.c.b16 %v1318, %v1317
  %v1439 = vpack.c.b16 %v1320, %v1319
  %v1440 = vpack.c.b16 %v1322, %v1321
  %v1441 = vpack.c.b16 %v1324, %v1323
  %v1442 = vpack.c.b16 %v1326, %v1325
  %v1443 = vpack.c.b16 %v1328, %v1327
  %v1444 = vpack.c.b16 %v1330, %v1329
  %v1445 = vpack.c.b16 %v1332, %v1331
  %v1446 = vpack.c.b16 %v1334, %v1333
  %v1447 = vpack.c.b16 %v1336, %v1335
  %v1448 = vpack.c.b16 %v1338, %v1337
  %v1449 = vpack.c.b16 %v1340, %v1339
  %v1450 = vpack.c.b16 %v1342, %v1341
  %v1451 = vpack.c.b16 %v1344, %v1343
  %v1452 = vpack.c.b16 %v1346, %v1345
  %v1453 = vpack.c.b16 %v1348, %v1347
  %v1454 = vpack.c.b16 %v1350, %v1349
  %v1455 = vpack.c.b16 %v1352, %v1351
  %v1456 = vpack.c.b16 %v1354, %v1353
  %v1457 = vpack.c.b16 %v1356, %v1355
  %v1458 = vpack.c.b16 %v1358, %v1357
  %v1459 = vpack.c.b16 %v1360, %v1359
  %v1460 = vpack.c.b16 %v1362, %v1361
  %v1461 = vpack.c.b16 %v1364, %v1363
  %v1462 = vpack.c.b16 %v1366, %v1365
  %v1463 = vpack.c.b16 %v1368, %v1367
  %v1464 = vpack.c.b16 %v1370, %v1369
  %v1465 = vpack.c.b16 %v1372, %v1371
  %v1466 = vpack.c.b16 %v1374, %v1373
  %v1467 = vpack.c.b16 %v1376, %v1375
  %v1468 = vpack.c.b16 %v1378, %v1377
  %v1469 = vpack.c.b16 %v1380, %v1379
  %v1470 = vpack.c.b16 %v1382, %v1381
  %v1471 = vpack.c.b16 %v1384, %v1383
  %v1472 = vpack.c.b16 %v1386, %v1385
  %v1473 = vpack.c.b16 %v1388, %v1387
  %v1474 = vpack.c.b16 %v1390, %v1389
  %v1475 = vpack.c.b16 %v1392, %v1391
  %v1476 = vpack.c.b16 %v1394, %v1393
  %v1477 = vpack.c.b16 %v1396, %v1395
  %v1478 = vpack.c.b16 %v1398, %v1397
  %v1479 = vpack.c.b16 %v1400, %v1399
  %v1480 = vpack.c.b16 %v1402, %v1401
  %v1481 = vpack.c.b16 %v1404, %v1403
  %v1482 = vpack.c.b16 %v1406, %v1405
  %v1483 = vpack.c.b16 %v1408, %v1407
  %v1484 = vpack.c.b16 %v1410, %v1409
  %v1485 = vpack.c.b16 %v1412, %v1411
  %v1486 = vpack.c.b16 %v1414, %v1413
  %v1487 = vpack.c.b16 %v1416, %v1415
  %v1488 = vpack.c.b16 %v1418, %v1417
  %v1489 = vpack.c.b16 %v1420, %v1419
  %v1490 = vpack.c.b16 %v1422, %v1421
  %v1491 = vpack.c.b16 %v1424, %v1423
  %v1492 = vpack.c.b16 %v1426, %v1425
  %v1493 = vpack.c.b16 %v1428, %v1427
  %v1494 = vpack.c.b16 %v1430, %v1429
  %1559 = vmatpush.bf16.msra.mxu0 %v1438
  %1560 = vmatpush.bf16.msra.mxu0 %v1437
  %1561 = vmatpush.bf16.msra.mxu0 %v1436
  %1562 = vmatpush.bf16.msra.mxu0 %v1435
  %1563 = vmatpush.bf16.msra.mxu0 %v1434
  %1564 = vmatpush.bf16.msra.mxu0 %v1433
  %1565 = vmatpush.bf16.msra.mxu0 %v1432
  %1566 = vmatpush.bf16.msra.mxu0 %v1431
  %1567 = vmatmul.bf16.gmra.mxu0 %v1039
  %v1568 = vpop.f32.mrf.mxu0
  %v1569 = vadd.f32 0.0, %v1568
  %v1570 = vpop.f32.mrf.mxu0
  %v1571 = vadd.f32 0.0, %v1570
  %1572 = vdwg.mxu0
  %1573 = vmatpush.bf16.msra.mxu0 %v1446
  %1574 = vmatpush.bf16.msra.mxu0 %v1445
  %1575 = vmatpush.bf16.msra.mxu0 %v1444
  %1576 = vmatpush.bf16.msra.mxu0 %v1443
  %1577 = vmatpush.bf16.msra.mxu0 %v1442
  %1578 = vmatpush.bf16.msra.mxu0 %v1441
  %1579 = vmatpush.bf16.msra.mxu0 %v1440
  %1580 = vmatpush.bf16.msra.mxu0 %v1439
  %1581 = vmatmul.bf16.gmra.mxu0 %v1040
  %v1582 = vpop.f32.mrf.mxu0
  %v1583 = vadd.f32 %v1569, %v1582
  %v1584 = vpop.f32.mrf.mxu0
  %v1585 = vadd.f32 %v1571, %v1584
  %1586 = vdwg.mxu0
  %1587 = vmatpush.bf16.msra.mxu0 %v1454
  %1588 = vmatpush.bf16.msra.mxu0 %v1453
  %1589 = vmatpush.bf16.msra.mxu0 %v1452
  %1590 = vmatpush.bf16.msra.mxu0 %v1451
  %1591 = vmatpush.bf16.msra.mxu0 %v1450
  %1592 = vmatpush.bf16.msra.mxu0 %v1449
  %1593 = vmatpush.bf16.msra.mxu0 %v1448
  %1594 = vmatpush.bf16.msra.mxu0 %v1447
  %1595 = vmatmul.bf16.gmra.mxu0 %v1041
  %v1596 = vpop.f32.mrf.mxu0
  %v1597 = vadd.f32 %v1583, %v1596
  %v1598 = vpop.f32.mrf.mxu0
  %v1599 = vadd.f32 %v1585, %v1598
  %1600 = vdwg.mxu0
  %1601 = vmatpush.bf16.msra.mxu0 %v1462
  %1602 = vmatpush.bf16.msra.mxu0 %v1461
  %1603 = vmatpush.bf16.msra.mxu0 %v1460
  %1604 = vmatpush.bf16.msra.mxu0 %v1459
  %1605 = vmatpush.bf16.msra.mxu0 %v1458
  %1606 = vmatpush.bf16.msra.mxu0 %v1457
  %1607 = vmatpush.bf16.msra.mxu0 %v1456
  %1608 = vmatpush.bf16.msra.mxu0 %v1455
  %1609 = vmatmul.bf16.gmra.mxu0 %v1042
  %v1610 = vpop.f32.mrf.mxu0
  %v1611 = vadd.f32 %v1597, %v1610
  %v1612 = vpop.f32.mrf.mxu0
  %v1613 = vadd.f32 %v1599, %v1612
  %1614 = vdwg.mxu0
  %1615 = vmatpush.bf16.msra.mxu0 %v1470
  %1616 = vmatpush.bf16.msra.mxu0 %v1469
  %1617 = vmatpush.bf16.msra.mxu0 %v1468
  %1618 = vmatpush.bf16.msra.mxu0 %v1467
  %1619 = vmatpush.bf16.msra.mxu0 %v1466
  %1620 = vmatpush.bf16.msra.mxu0 %v1465
  %1621 = vmatpush.bf16.msra.mxu0 %v1464
  %1622 = vmatpush.bf16.msra.mxu0 %v1463
  %1623 = vmatmul.bf16.gmra.mxu0 %v1043
  %v1624 = vpop.f32.mrf.mxu0
  %v1625 = vadd.f32 %v1611, %v1624
  %v1626 = vpop.f32.mrf.mxu0
  %v1627 = vadd.f32 %v1613, %v1626
  %1628 = vdwg.mxu0
  %1629 = vmatpush.bf16.msra.mxu0 %v1478
  %1630 = vmatpush.bf16.msra.mxu0 %v1477
  %1631 = vmatpush.bf16.msra.mxu0 %v1476
  %1632 = vmatpush.bf16.msra.mxu0 %v1475
  %1633 = vmatpush.bf16.msra.mxu0 %v1474
  %1634 = vmatpush.bf16.msra.mxu0 %v1473
  %1635 = vmatpush.bf16.msra.mxu0 %v1472
  %1636 = vmatpush.bf16.msra.mxu0 %v1471
  %1637 = vmatmul.bf16.gmra.mxu0 %v1044
  %v1638 = vpop.f32.mrf.mxu0
  %v1639 = vadd.f32 %v1625, %v1638
  %v1640 = vpop.f32.mrf.mxu0
  %v1641 = vadd.f32 %v1627, %v1640
  %1642 = vdwg.mxu0
  %1643 = vmatpush.bf16.msra.mxu0 %v1486
  %1644 = vmatpush.bf16.msra.mxu0 %v1485
  %1645 = vmatpush.bf16.msra.mxu0 %v1484
  %1646 = vmatpush.bf16.msra.mxu0 %v1483
  %1647 = vmatpush.bf16.msra.mxu0 %v1482
  %1648 = vmatpush.bf16.msra.mxu0 %v1481
  %1649 = vmatpush.bf16.msra.mxu0 %v1480
  %1650 = vmatpush.bf16.msra.mxu0 %v1479
  %1651 = vmatmul.bf16.gmra.mxu0 %v1045
  %v1652 = vpop.f32.mrf.mxu0
  %v1653 = vadd.f32 %v1639, %v1652
  %v1654 = vpop.f32.mrf.mxu0
  %v1655 = vadd.f32 %v1641, %v1654
  %1656 = vdwg.mxu0
  %1657 = vmatpush.bf16.msra.mxu0 %v1494
  %1658 = vmatpush.bf16.msra.mxu0 %v1493
  %1659 = vmatpush.bf16.msra.mxu0 %v1492
  %1660 = vmatpush.bf16.msra.mxu0 %v1491
  %1661 = vmatpush.bf16.msra.mxu0 %v1490
  %1662 = vmatpush.bf16.msra.mxu0 %v1489
  %1663 = vmatpush.bf16.msra.mxu0 %v1488
  %1664 = vmatpush.bf16.msra.mxu0 %v1487
  %1665 = vmatmul.bf16.gmra.mxu0 %v1046
  %v1666 = vpop.f32.mrf.mxu0
  %v1667 = vadd.f32 %v1653, %v1666
  %v1668 = vpop.f32.mrf.mxu0
  %v1669 = vadd.f32 %v1655, %v1668
  %1670 = vdwg.mxu0
  %1671 = vst [vmem:[%s4] sm:$0xff] %v1667
  %1672 = vst [vmem:[%s4 + $0x8] sm:$0xff] %v1669
  // Predicated region
  $region18: #{lstm_model_forward.9} parent=0 // pred_check
    _
  $region19: #{lstm_model_forward.9} parent=0 // pred_check_branch
    %1674 = sbr.rel (0) target = $region21
  $region20: #{lstm_model_forward.9} parent=0 // pred_region
    _
  $region21: #{lstm_model_forward.9} parent=0 // pred_fallthru
    _
  // Predicated region
  $region22: #{lstm_model_forward.9} parent=0 // pred_check
    _
  $region23: #{lstm_model_forward.9} parent=0 // pred_check_branch
    %1676 = sbr.rel (0) target = $region25
  $region24: #{lstm_model_forward.9} parent=0 // pred_region
    _
  $region25: #{lstm_model_forward.9} parent=0 // pred_fallthru
    _

</llo_original>
